<compile_context>
chip_gen: v5e
topology: v5e:2x2
jax: 0.10.0
libtpu: 0.0.40
codegen_flags: <defaults>
</compile_context>

<pallas_src>
import functools
import math

import jax
import jax.numpy as jnp
from jax import lax
from jax.experimental import pallas as pl
from jax.experimental.pallas import tpu as pltpu

LN_EPS = 1e-5  # nn.LayerNorm default


def _self_attn_kernel(x_ref, pos_ref, wq_ref, wk_ref, wv_ref, wo_ref,
                      bq_ref, bk_ref, bv_ref, bo_ref, g_ref, b_ref,
                      out_ref, *, nhead):
    x = x_ref[0]                                      # (L, D) f32
    L, D = x.shape

    # q = k = tgt + query_pos ; v = tgt.  Cast matmul operands to bf16 once.
    qk = (x + pos_ref[0]).astype(jnp.bfloat16)
    v_in = x.astype(jnp.bfloat16)

    acc = jnp.zeros((L, D), jnp.float32)
    for h in range(nhead):                            # static unroll over heads
        # projections: (L, D) @ (D, dh) on the MXU, f32 accumulation.
        q = jnp.dot(qk, wq_ref[h], preferred_element_type=jnp.float32) + bq_ref[h]
        k = jnp.dot(qk, wk_ref[h], preferred_element_type=jnp.float32) + bk_ref[h]
        v = jnp.dot(v_in, wv_ref[h], preferred_element_type=jnp.float32) + bv_ref[h]

        # scores (L, L); attention scale already folded into wq/bq on the host.
        s = lax.dot_general(q.astype(jnp.bfloat16), k.astype(jnp.bfloat16),
                            (((1,), (1,)), ((), ())),
                            preferred_element_type=jnp.float32)

        # softmax over keys (f32); reciprocal on the EUP.
        m = jnp.max(s, axis=-1, keepdims=True)
        p = jnp.exp(s - m)
        p = p * pl.reciprocal(jnp.sum(p, axis=-1, keepdims=True), approx=True)

        o = jnp.dot(p.astype(jnp.bfloat16), v.astype(jnp.bfloat16),
                    preferred_element_type=jnp.float32)          # (L, dh)

        # per-head slice of the output projection; sum over heads == full out-proj.
        acc = acc + jnp.dot(o.astype(jnp.bfloat16), wo_ref[h],
                            preferred_element_type=jnp.float32)  # (L, D)

    # residual (dropout p=0.0 -> identity) + LayerNorm, all f32.
    y = x + (acc + bo_ref[...])
    mu = jnp.mean(y, axis=-1, keepdims=True)
    yc = y - mu
    var = jnp.mean(yc * yc, axis=-1, keepdims=True)
    out_ref[0] = (yc * lax.rsqrt(var + LN_EPS)) * g_ref[...] + b_ref[...]


def self_attention_layer_forward(tgt, params, nhead, query_pos=None):
    """tgt: (L, N, d_model) f32  ->  (L, N, d_model) f32 (PyTorch seq-first layout)."""
    L, N, D = tgt.shape
    assert D % nhead == 0
    dh = D // nhead
    scale = 1.0 / math.sqrt(dh)

    # ---- host-side glue: seq-first -> batch-first, param prep -----------------
    x = jnp.transpose(tgt, (1, 0, 2)).astype(jnp.float32)            # (N, L, D)
    pos = (jnp.zeros_like(x) if query_pos is None
           else jnp.transpose(query_pos, (1, 0, 2)).astype(jnp.float32))

    wq, wk, wv = jnp.split(params["in_proj_weight"].astype(jnp.float32), 3, axis=0)
    bq, bk, bv = jnp.split(params["in_proj_bias"].astype(jnp.float32), 3, axis=0)

    def per_head_cols(w_t):                       # (D_in, D_out) -> (H, D_in, dh)
        return jnp.transpose(w_t.reshape(D, nhead, dh), (1, 0, 2))

    wq_h = per_head_cols(wq.T * scale).astype(jnp.bfloat16)          # scale folded
    wk_h = per_head_cols(wk.T).astype(jnp.bfloat16)
    wv_h = per_head_cols(wv.T).astype(jnp.bfloat16)
    wo_h = params["out_proj_weight"].astype(jnp.float32).T.reshape(
        nhead, dh, D).astype(jnp.bfloat16)                           # (H, dh, D)
    bq_h = (bq * scale).reshape(nhead, 1, dh)
    bk_h = bk.reshape(nhead, 1, dh)
    bv_h = bv.reshape(nhead, 1, dh)
    bo = params["out_proj_bias"].astype(jnp.float32).reshape(1, D)
    gamma = params["ln_gamma"].astype(jnp.float32).reshape(1, D)
    beta = params["ln_beta"].astype(jnp.float32).reshape(1, D)

    def rep(shape):   # replicated (non-batched) operand: full block every step
        nd = len(shape)
        return pl.BlockSpec(shape, lambda n, _nd=nd: (0,) * _nd)

    flops = N * (4 * 2 * L * D * D + 4 * L * L * D)
    cost = pl.CostEstimate(
        flops=flops,
        transcendentals=N * nhead * L * L,
        bytes_accessed=3 * N * L * D * 4 + 4 * D * D * 2 + 6 * D * 4)

    out = pl.pallas_call(
        functools.partial(_self_attn_kernel, nhead=nhead),
        out_shape=jax.ShapeDtypeStruct((N, L, D), jnp.float32),
        grid_spec=pltpu.PrefetchScalarGridSpec(
            num_scalar_prefetch=0,
            grid=(N,),
            in_specs=[
                pl.BlockSpec((1, L, D), lambda n: (n, 0, 0)),   # x
                pl.BlockSpec((1, L, D), lambda n: (n, 0, 0)),   # query_pos
                rep((nhead, D, dh)), rep((nhead, D, dh)), rep((nhead, D, dh)),
                rep((nhead, dh, D)),
                rep((nhead, 1, dh)), rep((nhead, 1, dh)), rep((nhead, 1, dh)),
                rep((1, D)), rep((1, D)), rep((1, D)),
            ],
            out_specs=pl.BlockSpec((1, L, D), lambda n: (n, 0, 0)),
        ),
        compiler_params=pltpu.CompilerParams(
            dimension_semantics=("parallel",)),
        cost_estimate=cost,
    )(x, pos, wq_h, wk_h, wv_h, wo_h, bq_h, bk_h, bv_h, bo, gamma, beta)

    return jnp.transpose(out, (1, 0, 2))                             # (L, N, D)


def ref_forward(tgt, params, nhead, query_pos=None):
    """Pure-JAX f32 reference mirroring nn.MultiheadAttention + residual + LayerNorm."""
    x = tgt.astype(jnp.float32)                                      # (L, N, D)
    qk = x if query_pos is None else x + query_pos.astype(jnp.float32)
    L, N, D = x.shape
    dh = D // nhead
    wq, wk, wv = jnp.split(params["in_proj_weight"], 3, axis=0)
    bq, bk, bv = jnp.split(params["in_proj_bias"], 3, axis=0)
    Q = qk @ wq.T + bq
    K = qk @ wk.T + bk
    V = x @ wv.T + bv

    def heads(t):                                  # (L,N,D) -> (N,H,L,dh)
        return jnp.transpose(t.reshape(L, N, nhead, dh), (1, 2, 0, 3))

    Qh, Kh, Vh = heads(Q), heads(K), heads(V)
    s = jnp.einsum('nhqd,nhkd->nhqk', Qh, Kh) / math.sqrt(dh)
    a = jax.nn.softmax(s, axis=-1)
    O = jnp.einsum('nhqk,nhkd->nhqd', a, Vh)
    O = jnp.transpose(O, (2, 0, 1, 3)).reshape(L, N, D)
    attn = O @ params["out_proj_weight"].T + params["out_proj_bias"]
    y = x + attn                                    # dropout(p=0.0) == identity
    mu = y.mean(-1, keepdims=True)
    var = ((y - mu) ** 2).mean(-1, keepdims=True)
    return (y - mu) / jnp.sqrt(var + LN_EPS) * params["ln_gamma"] + params["ln_beta"]


if __name__ == "__main__":
    L, N, D, H = 16, 2, 128, 8     # seq, batch, d_model (lane-dense), nhead

    key = jax.random.PRNGKey(0)
    ks = jax.random.split(key, 8)
    wscale = 0.09                   # ~ xavier_uniform std for fan_in = fan_out = 128
    params = dict(
        in_proj_weight=jax.random.normal(ks[0], (3 * D, D), jnp.float32) * wscale,
        in_proj_bias=jax.random.normal(ks[1], (3 * D,), jnp.float32) * 0.05,
        out_proj_weight=jax.random.normal(ks[2], (D, D), jnp.float32) * wscale,
        out_proj_bias=jax.random.normal(ks[3], (D,), jnp.float32) * 0.05,
        ln_gamma=1.0 + 0.1 * jax.random.normal(ks[4], (D,), jnp.float32),
        ln_beta=0.05 * jax.random.normal(ks[5], (D,), jnp.float32),
    )
    tgt = jax.random.normal(ks[6], (L, N, D), jnp.float32)
    query_pos = 0.5 * jax.random.normal(ks[7], (L, N, D), jnp.float32)

    out = self_attention_layer_forward(tgt, params, H, query_pos=query_pos)
    jax.block_until_ready(out)

    ref = ref_forward(tgt, params, H, query_pos=query_pos)
    assert out.shape == (L, N, D), out.shape
    max_err = float(jnp.max(jnp.abs(out - ref)))
    # bf16 MXU operands with f32 accumulation -> ~1e-2-level abs error vs f32 ref.
    assert max_err < 1e-1, f"max abs err {max_err}"
    print("KERNEL_OK")
</pallas_src>

<mosaic_0001>
module attributes {stable_mosaic.version = 11 : i64} {
  func.func @_self_attn_kernel(%arg0: i32, %arg1: memref<1x16x128xf32, #tpu.memory_space<vmem>>, %arg2: memref<1x16x128xf32, #tpu.memory_space<vmem>>, %arg3: memref<8x128x16xbf16, #tpu.memory_space<vmem>>, %arg4: memref<8x128x16xbf16, #tpu.memory_space<vmem>>, %arg5: memref<8x128x16xbf16, #tpu.memory_space<vmem>>, %arg6: memref<8x16x128xbf16, #tpu.memory_space<vmem>>, %arg7: memref<8x1x16xf32, #tpu.memory_space<vmem>>, %arg8: memref<8x1x16xf32, #tpu.memory_space<vmem>>, %arg9: memref<8x1x16xf32, #tpu.memory_space<vmem>>, %arg10: memref<1x128xf32, #tpu.memory_space<vmem>>, %arg11: memref<1x128xf32, #tpu.memory_space<vmem>>, %arg12: memref<1x128xf32, #tpu.memory_space<vmem>>, %arg13: memref<1x16x128xf32, #tpu.memory_space<vmem>>) attributes {dimension_semantics = [#tpu.dimension_semantics<parallel>], iteration_bounds = array<i64: 2>, scalar_prefetch = 0 : i64, scratch_operands = 0 : i64, tpu.core_type = #tpu.core_type<tc>, window_params = [{transform_indices = @transform_0, window_bounds = array<i64: 1, 16, 128>}, {transform_indices = @transform_1, window_bounds = array<i64: 1, 16, 128>}, {pipeline_mode = #tpu.pipeline_mode<synchronous>, transform_indices = @transform_2, window_bounds = array<i64: 8, 128, 16>}, {pipeline_mode = #tpu.pipeline_mode<synchronous>, transform_indices = @transform_3, window_bounds = array<i64: 8, 128, 16>}, {pipeline_mode = #tpu.pipeline_mode<synchronous>, transform_indices = @transform_4, window_bounds = array<i64: 8, 128, 16>}, {pipeline_mode = #tpu.pipeline_mode<synchronous>, transform_indices = @transform_5, window_bounds = array<i64: 8, 16, 128>}, {pipeline_mode = #tpu.pipeline_mode<synchronous>, transform_indices = @transform_6, window_bounds = array<i64: 8, 1, 16>}, {pipeline_mode = #tpu.pipeline_mode<synchronous>, transform_indices = @transform_7, window_bounds = array<i64: 8, 1, 16>}, {pipeline_mode = #tpu.pipeline_mode<synchronous>, transform_indices = @transform_8, window_bounds = array<i64: 8, 1, 16>}, {pipeline_mode = #tpu.pipeline_mode<synchronous>, transform_indices = @transform_9, window_bounds = array<i64: 1, 128>}, {pipeline_mode = #tpu.pipeline_mode<synchronous>, transform_indices = @transform_10, window_bounds = array<i64: 1, 128>}, {pipeline_mode = #tpu.pipeline_mode<synchronous>, transform_indices = @transform_11, window_bounds = array<i64: 1, 128>}, {transform_indices = @transform_12, window_bounds = array<i64: 1, 16, 128>}]} {
    %c0 = arith.constant 0 : index
    %c0_0 = arith.constant 0 : index
    %c0_1 = arith.constant 0 : index
    %0 = vector.load %arg1[%c0, %c0_0, %c0_1] : memref<1x16x128xf32, #tpu.memory_space<vmem>>, vector<1x16x128xf32>
    %1 = vector.shape_cast %0 : vector<1x16x128xf32> to vector<16x128xf32>
    %c0_2 = arith.constant 0 : index
    %c0_3 = arith.constant 0 : index
    %c0_4 = arith.constant 0 : index
    %2 = vector.load %arg2[%c0_2, %c0_3, %c0_4] : memref<1x16x128xf32, #tpu.memory_space<vmem>>, vector<1x16x128xf32>
    %3 = vector.shape_cast %2 : vector<1x16x128xf32> to vector<16x128xf32>
    %4 = arith.addf %1, %3 : vector<16x128xf32>
    %5 = arith.truncf %4 : vector<16x128xf32> to vector<16x128xbf16>
    %6 = arith.truncf %1 : vector<16x128xf32> to vector<16x128xbf16>
    %cst = arith.constant 0.000000e+00 : f32
    %7 = vector.broadcast %cst : f32 to vector<16x128xf32>
    %c0_5 = arith.constant 0 : index
    %c0_6 = arith.constant 0 : index
    %c0_7 = arith.constant 0 : index
    %8 = vector.load %arg3[%c0_5, %c0_6, %c0_7] : memref<8x128x16xbf16, #tpu.memory_space<vmem>>, vector<1x128x16xbf16>
    %9 = vector.shape_cast %8 : vector<1x128x16xbf16> to vector<128x16xbf16>
    %cst_8 = arith.constant dense<0.000000e+00> : vector<16x16xf32>
    %10 = tpu.matmul %5, %9, %cst_8 {dimension_numbers = #tpu.dot_dimension_numbers<[1], [0], [0], [1], [0, 0, 1, 1], [], []>} : vector<16x128xbf16>, vector<128x16xbf16>, vector<16x16xf32> -> vector<16x16xf32>
    %c0_9 = arith.constant 0 : index
    %c0_10 = arith.constant 0 : index
    %c0_11 = arith.constant 0 : index
    %11 = vector.load %arg7[%c0_9, %c0_10, %c0_11] : memref<8x1x16xf32, #tpu.memory_space<vmem>>, vector<1x1x16xf32>
    %12 = vector.shape_cast %11 : vector<1x1x16xf32> to vector<1x16xf32>
    %13 = vector.broadcast %12 : vector<1x16xf32> to vector<16x16xf32>
    %14 = arith.addf %10, %13 : vector<16x16xf32>
    %c0_12 = arith.constant 0 : index
    %c0_13 = arith.constant 0 : index
    %c0_14 = arith.constant 0 : index
    %15 = vector.load %arg4[%c0_12, %c0_13, %c0_14] : memref<8x128x16xbf16, #tpu.memory_space<vmem>>, vector<1x128x16xbf16>
    %16 = vector.shape_cast %15 : vector<1x128x16xbf16> to vector<128x16xbf16>
    %cst_15 = arith.constant dense<0.000000e+00> : vector<16x16xf32>
    %17 = tpu.matmul %5, %16, %cst_15 {dimension_numbers = #tpu.dot_dimension_numbers<[1], [0], [0], [1], [0, 0, 1, 1], [], []>} : vector<16x128xbf16>, vector<128x16xbf16>, vector<16x16xf32> -> vector<16x16xf32>
    %c0_16 = arith.constant 0 : index
    %c0_17 = arith.constant 0 : index
    %c0_18 = arith.constant 0 : index
    %18 = vector.load %arg8[%c0_16, %c0_17, %c0_18] : memref<8x1x16xf32, #tpu.memory_space<vmem>>, vector<1x1x16xf32>
    %19 = vector.shape_cast %18 : vector<1x1x16xf32> to vector<1x16xf32>
    %20 = vector.broadcast %19 : vector<1x16xf32> to vector<16x16xf32>
    %21 = arith.addf %17, %20 : vector<16x16xf32>
    %c0_19 = arith.constant 0 : index
    %c0_20 = arith.constant 0 : index
    %c0_21 = arith.constant 0 : index
    %22 = vector.load %arg5[%c0_19, %c0_20, %c0_21] : memref<8x128x16xbf16, #tpu.memory_space<vmem>>, vector<1x128x16xbf16>
    %23 = vector.shape_cast %22 : vector<1x128x16xbf16> to vector<128x16xbf16>
    %cst_22 = arith.constant dense<0.000000e+00> : vector<16x16xf32>
    %24 = tpu.matmul %6, %23, %cst_22 {dimension_numbers = #tpu.dot_dimension_numbers<[1], [0], [0], [1], [0, 0, 1, 1], [], []>} : vector<16x128xbf16>, vector<128x16xbf16>, vector<16x16xf32> -> vector<16x16xf32>
    %c0_23 = arith.constant 0 : index
    %c0_24 = arith.constant 0 : index
    %c0_25 = arith.constant 0 : index
    %25 = vector.load %arg9[%c0_23, %c0_24, %c0_25] : memref<8x1x16xf32, #tpu.memory_space<vmem>>, vector<1x1x16xf32>
    %26 = vector.shape_cast %25 : vector<1x1x16xf32> to vector<1x16xf32>
    %27 = vector.broadcast %26 : vector<1x16xf32> to vector<16x16xf32>
    %28 = arith.addf %24, %27 : vector<16x16xf32>
    %29 = arith.truncf %14 : vector<16x16xf32> to vector<16x16xbf16>
    %30 = arith.truncf %21 : vector<16x16xf32> to vector<16x16xbf16>
    %cst_26 = arith.constant dense<0.000000e+00> : vector<16x16xf32>
    %31 = tpu.matmul %29, %30, %cst_26 {dimension_numbers = #tpu.dot_dimension_numbers<[1], [1], [0], [0], [0, 0, 1, 0], [], []>} : vector<16x16xbf16>, vector<16x16xbf16>, vector<16x16xf32> -> vector<16x16xf32>
    %cst_27 = arith.constant dense<0xFF800000> : vector<16xf32>
    %32 = vector.multi_reduction <maximumf>, %31, %cst_27 [1] : vector<16x16xf32> to vector<16xf32>
    %33 = vector.shape_cast %32 : vector<16xf32> to vector<16x1xf32>
    %34 = vector.broadcast %33 : vector<16x1xf32> to vector<16x16xf32>
    %35 = arith.subf %31, %34 : vector<16x16xf32>
    %36 = math.exp %35 : vector<16x16xf32>
    %cst_28 = arith.constant dense<0.000000e+00> : vector<16xf32>
    %37 = vector.multi_reduction <add>, %36, %cst_28 [1] : vector<16x16xf32> to vector<16xf32>
    %38 = vector.shape_cast %37 : vector<16xf32> to vector<16x1xf32>
    %39 = tpu.reciprocal %38 {approx = true} : vector<16x1xf32> -> vector<16x1xf32>
    %40 = vector.broadcast %39 : vector<16x1xf32> to vector<16x16xf32>
    %41 = arith.mulf %36, %40 : vector<16x16xf32>
    %42 = arith.truncf %41 : vector<16x16xf32> to vector<16x16xbf16>
    %43 = arith.truncf %28 : vector<16x16xf32> to vector<16x16xbf16>
    %cst_29 = arith.constant dense<0.000000e+00> : vector<16x16xf32>
    %44 = tpu.matmul %42, %43, %cst_29 {dimension_numbers = #tpu.dot_dimension_numbers<[1], [0], [0], [1], [0, 0, 1, 1], [], []>} : vector<16x16xbf16>, vector<16x16xbf16>, vector<16x16xf32> -> vector<16x16xf32>
    %45 = arith.truncf %44 : vector<16x16xf32> to vector<16x16xbf16>
    %c0_30 = arith.constant 0 : index
    %c0_31 = arith.constant 0 : index
    %c0_32 = arith.constant 0 : index
    %46 = vector.load %arg6[%c0_30, %c0_31, %c0_32] : memref<8x16x128xbf16, #tpu.memory_space<vmem>>, vector<1x16x128xbf16>
    %47 = vector.shape_cast %46 : vector<1x16x128xbf16> to vector<16x128xbf16>
    %cst_33 = arith.constant dense<0.000000e+00> : vector<16x128xf32>
    %48 = tpu.matmul %45, %47, %cst_33 {dimension_numbers = #tpu.dot_dimension_numbers<[1], [0], [0], [1], [0, 0, 1, 1], [], []>} : vector<16x16xbf16>, vector<16x128xbf16>, vector<16x128xf32> -> vector<16x128xf32>
    %49 = arith.addf %7, %48 : vector<16x128xf32>
    %c1 = arith.constant 1 : index
    %c0_34 = arith.constant 0 : index
    %c0_35 = arith.constant 0 : index
    %50 = vector.load %arg3[%c1, %c0_34, %c0_35] : memref<8x128x16xbf16, #tpu.memory_space<vmem>>, vector<1x128x16xbf16>
    %51 = vector.shape_cast %50 : vector<1x128x16xbf16> to vector<128x16xbf16>
    %cst_36 = arith.constant dense<0.000000e+00> : vector<16x16xf32>
    %52 = tpu.matmul %5, %51, %cst_36 {dimension_numbers = #tpu.dot_dimension_numbers<[1], [0], [0], [1], [0, 0, 1, 1], [], []>} : vector<16x128xbf16>, vector<128x16xbf16>, vector<16x16xf32> -> vector<16x16xf32>
    %c1_37 = arith.constant 1 : index
    %c0_38 = arith.constant 0 : index
    %c0_39 = arith.constant 0 : index
    %53 = vector.load %arg7[%c1_37, %c0_38, %c0_39] : memref<8x1x16xf32, #tpu.memory_space<vmem>>, vector<1x1x16xf32>
    %54 = vector.shape_cast %53 : vector<1x1x16xf32> to vector<1x16xf32>
    %55 = vector.broadcast %54 : vector<1x16xf32> to vector<16x16xf32>
    %56 = arith.addf %52, %55 : vector<16x16xf32>
    %c1_40 = arith.constant 1 : index
    %c0_41 = arith.constant 0 : index
    %c0_42 = arith.constant 0 : index
    %57 = vector.load %arg4[%c1_40, %c0_41, %c0_42] : memref<8x128x16xbf16, #tpu.memory_space<vmem>>, vector<1x128x16xbf16>
    %58 = vector.shape_cast %57 : vector<1x128x16xbf16> to vector<128x16xbf16>
    %cst_43 = arith.constant dense<0.000000e+00> : vector<16x16xf32>
    %59 = tpu.matmul %5, %58, %cst_43 {dimension_numbers = #tpu.dot_dimension_numbers<[1], [0], [0], [1], [0, 0, 1, 1], [], []>} : vector<16x128xbf16>, vector<128x16xbf16>, vector<16x16xf32> -> vector<16x16xf32>
    %c1_44 = arith.constant 1 : index
    %c0_45 = arith.constant 0 : index
    %c0_46 = arith.constant 0 : index
    %60 = vector.load %arg8[%c1_44, %c0_45, %c0_46] : memref<8x1x16xf32, #tpu.memory_space<vmem>>, vector<1x1x16xf32>
    %61 = vector.shape_cast %60 : vector<1x1x16xf32> to vector<1x16xf32>
    %62 = vector.broadcast %61 : vector<1x16xf32> to vector<16x16xf32>
    %63 = arith.addf %59, %62 : vector<16x16xf32>
    %c1_47 = arith.constant 1 : index
    %c0_48 = arith.constant 0 : index
    %c0_49 = arith.constant 0 : index
    %64 = vector.load %arg5[%c1_47, %c0_48, %c0_49] : memref<8x128x16xbf16, #tpu.memory_space<vmem>>, vector<1x128x16xbf16>
    %65 = vector.shape_cast %64 : vector<1x128x16xbf16> to vector<128x16xbf16>
    %cst_50 = arith.constant dense<0.000000e+00> : vector<16x16xf32>
    %66 = tpu.matmul %6, %65, %cst_50 {dimension_numbers = #tpu.dot_dimension_numbers<[1], [0], [0], [1], [0, 0, 1, 1], [], []>} : vector<16x128xbf16>, vector<128x16xbf16>, vector<16x16xf32> -> vector<16x16xf32>
    %c1_51 = arith.constant 1 : index
    %c0_52 = arith.constant 0 : index
    %c0_53 = arith.constant 0 : index
    %67 = vector.load %arg9[%c1_51, %c0_52, %c0_53] : memref<8x1x16xf32, #tpu.memory_space<vmem>>, vector<1x1x16xf32>
    %68 = vector.shape_cast %67 : vector<1x1x16xf32> to vector<1x16xf32>
    %69 = vector.broadcast %68 : vector<1x16xf32> to vector<16x16xf32>
    %70 = arith.addf %66, %69 : vector<16x16xf32>
    %71 = arith.truncf %56 : vector<16x16xf32> to vector<16x16xbf16>
    %72 = arith.truncf %63 : vector<16x16xf32> to vector<16x16xbf16>
    %cst_54 = arith.constant dense<0.000000e+00> : vector<16x16xf32>
    %73 = tpu.matmul %71, %72, %cst_54 {dimension_numbers = #tpu.dot_dimension_numbers<[1], [1], [0], [0], [0, 0, 1, 0], [], []>} : vector<16x16xbf16>, vector<16x16xbf16>, vector<16x16xf32> -> vector<16x16xf32>
    %cst_55 = arith.constant dense<0xFF800000> : vector<16xf32>
    %74 = vector.multi_reduction <maximumf>, %73, %cst_55 [1] : vector<16x16xf32> to vector<16xf32>
    %75 = vector.shape_cast %74 : vector<16xf32> to vector<16x1xf32>
    %76 = vector.broadcast %75 : vector<16x1xf32> to vector<16x16xf32>
    %77 = arith.subf %73, %76 : vector<16x16xf32>
    %78 = math.exp %77 : vector<16x16xf32>
    %cst_56 = arith.constant dense<0.000000e+00> : vector<16xf32>
    %79 = vector.multi_reduction <add>, %78, %cst_56 [1] : vector<16x16xf32> to vector<16xf32>
    %80 = vector.shape_cast %79 : vector<16xf32> to vector<16x1xf32>
    %81 = tpu.reciprocal %80 {approx = true} : vector<16x1xf32> -> vector<16x1xf32>
    %82 = vector.broadcast %81 : vector<16x1xf32> to vector<16x16xf32>
    %83 = arith.mulf %78, %82 : vector<16x16xf32>
    %84 = arith.truncf %83 : vector<16x16xf32> to vector<16x16xbf16>
    %85 = arith.truncf %70 : vector<16x16xf32> to vector<16x16xbf16>
    %cst_57 = arith.constant dense<0.000000e+00> : vector<16x16xf32>
    %86 = tpu.matmul %84, %85, %cst_57 {dimension_numbers = #tpu.dot_dimension_numbers<[1], [0], [0], [1], [0, 0, 1, 1], [], []>} : vector<16x16xbf16>, vector<16x16xbf16>, vector<16x16xf32> -> vector<16x16xf32>
    %87 = arith.truncf %86 : vector<16x16xf32> to vector<16x16xbf16>
    %c1_58 = arith.constant 1 : index
    %c0_59 = arith.constant 0 : index
    %c0_60 = arith.constant 0 : index
    %88 = vector.load %arg6[%c1_58, %c0_59, %c0_60] : memref<8x16x128xbf16, #tpu.memory_space<vmem>>, vector<1x16x128xbf16>
    %89 = vector.shape_cast %88 : vector<1x16x128xbf16> to vector<16x128xbf16>
    %cst_61 = arith.constant dense<0.000000e+00> : vector<16x128xf32>
    %90 = tpu.matmul %87, %89, %cst_61 {dimension_numbers = #tpu.dot_dimension_numbers<[1], [0], [0], [1], [0, 0, 1, 1], [], []>} : vector<16x16xbf16>, vector<16x128xbf16>, vector<16x128xf32> -> vector<16x128xf32>
    %91 = arith.addf %49, %90 : vector<16x128xf32>
    %c2 = arith.constant 2 : index
    %c0_62 = arith.constant 0 : index
    %c0_63 = arith.constant 0 : index
    %92 = vector.load %arg3[%c2, %c0_62, %c0_63] : memref<8x128x16xbf16, #tpu.memory_space<vmem>>, vector<1x128x16xbf16>
    %93 = vector.shape_cast %92 : vector<1x128x16xbf16> to vector<128x16xbf16>
    %cst_64 = arith.constant dense<0.000000e+00> : vector<16x16xf32>
    %94 = tpu.matmul %5, %93, %cst_64 {dimension_numbers = #tpu.dot_dimension_numbers<[1], [0], [0], [1], [0, 0, 1, 1], [], []>} : vector<16x128xbf16>, vector<128x16xbf16>, vector<16x16xf32> -> vector<16x16xf32>
    %c2_65 = arith.constant 2 : index
    %c0_66 = arith.constant 0 : index
    %c0_67 = arith.constant 0 : index
    %95 = vector.load %arg7[%c2_65, %c0_66, %c0_67] : memref<8x1x16xf32, #tpu.memory_space<vmem>>, vector<1x1x16xf32>
    %96 = vector.shape_cast %95 : vector<1x1x16xf32> to vector<1x16xf32>
    %97 = vector.broadcast %96 : vector<1x16xf32> to vector<16x16xf32>
    %98 = arith.addf %94, %97 : vector<16x16xf32>
    %c2_68 = arith.constant 2 : index
    %c0_69 = arith.constant 0 : index
    %c0_70 = arith.constant 0 : index
    %99 = vector.load %arg4[%c2_68, %c0_69, %c0_70] : memref<8x128x16xbf16, #tpu.memory_space<vmem>>, vector<1x128x16xbf16>
    %100 = vector.shape_cast %99 : vector<1x128x16xbf16> to vector<128x16xbf16>
    %cst_71 = arith.constant dense<0.000000e+00> : vector<16x16xf32>
    %101 = tpu.matmul %5, %100, %cst_71 {dimension_numbers = #tpu.dot_dimension_numbers<[1], [0], [0], [1], [0, 0, 1, 1], [], []>} : vector<16x128xbf16>, vector<128x16xbf16>, vector<16x16xf32> -> vector<16x16xf32>
    %c2_72 = arith.constant 2 : index
    %c0_73 = arith.constant 0 : index
    %c0_74 = arith.constant 0 : index
    %102 = vector.load %arg8[%c2_72, %c0_73, %c0_74] : memref<8x1x16xf32, #tpu.memory_space<vmem>>, vector<1x1x16xf32>
    %103 = vector.shape_cast %102 : vector<1x1x16xf32> to vector<1x16xf32>
    %104 = vector.broadcast %103 : vector<1x16xf32> to vector<16x16xf32>
    %105 = arith.addf %101, %104 : vector<16x16xf32>
    %c2_75 = arith.constant 2 : index
    %c0_76 = arith.constant 0 : index
    %c0_77 = arith.constant 0 : index
    %106 = vector.load %arg5[%c2_75, %c0_76, %c0_77] : memref<8x128x16xbf16, #tpu.memory_space<vmem>>, vector<1x128x16xbf16>
    %107 = vector.shape_cast %106 : vector<1x128x16xbf16> to vector<128x16xbf16>
    %cst_78 = arith.constant dense<0.000000e+00> : vector<16x16xf32>
    %108 = tpu.matmul %6, %107, %cst_78 {dimension_numbers = #tpu.dot_dimension_numbers<[1], [0], [0], [1], [0, 0, 1, 1], [], []>} : vector<16x128xbf16>, vector<128x16xbf16>, vector<16x16xf32> -> vector<16x16xf32>
    %c2_79 = arith.constant 2 : index
    %c0_80 = arith.constant 0 : index
    %c0_81 = arith.constant 0 : index
    %109 = vector.load %arg9[%c2_79, %c0_80, %c0_81] : memref<8x1x16xf32, #tpu.memory_space<vmem>>, vector<1x1x16xf32>
    %110 = vector.shape_cast %109 : vector<1x1x16xf32> to vector<1x16xf32>
    %111 = vector.broadcast %110 : vector<1x16xf32> to vector<16x16xf32>
    %112 = arith.addf %108, %111 : vector<16x16xf32>
    %113 = arith.truncf %98 : vector<16x16xf32> to vector<16x16xbf16>
    %114 = arith.truncf %105 : vector<16x16xf32> to vector<16x16xbf16>
    %cst_82 = arith.constant dense<0.000000e+00> : vector<16x16xf32>
    %115 = tpu.matmul %113, %114, %cst_82 {dimension_numbers = #tpu.dot_dimension_numbers<[1], [1], [0], [0], [0, 0, 1, 0], [], []>} : vector<16x16xbf16>, vector<16x16xbf16>, vector<16x16xf32> -> vector<16x16xf32>
    %cst_83 = arith.constant dense<0xFF800000> : vector<16xf32>
    %116 = vector.multi_reduction <maximumf>, %115, %cst_83 [1] : vector<16x16xf32> to vector<16xf32>
    %117 = vector.shape_cast %116 : vector<16xf32> to vector<16x1xf32>
    %118 = vector.broadcast %117 : vector<16x1xf32> to vector<16x16xf32>
    %119 = arith.subf %115, %118 : vector<16x16xf32>
    %120 = math.exp %119 : vector<16x16xf32>
    %cst_84 = arith.constant dense<0.000000e+00> : vector<16xf32>
    %121 = vector.multi_reduction <add>, %120, %cst_84 [1] : vector<16x16xf32> to vector<16xf32>
    %122 = vector.shape_cast %121 : vector<16xf32> to vector<16x1xf32>
    %123 = tpu.reciprocal %122 {approx = true} : vector<16x1xf32> -> vector<16x1xf32>
    %124 = vector.broadcast %123 : vector<16x1xf32> to vector<16x16xf32>
    %125 = arith.mulf %120, %124 : vector<16x16xf32>
    %126 = arith.truncf %125 : vector<16x16xf32> to vector<16x16xbf16>
    %127 = arith.truncf %112 : vector<16x16xf32> to vector<16x16xbf16>
    %cst_85 = arith.constant dense<0.000000e+00> : vector<16x16xf32>
    %128 = tpu.matmul %126, %127, %cst_85 {dimension_numbers = #tpu.dot_dimension_numbers<[1], [0], [0], [1], [0, 0, 1, 1], [], []>} : vector<16x16xbf16>, vector<16x16xbf16>, vector<16x16xf32> -> vector<16x16xf32>
    %129 = arith.truncf %128 : vector<16x16xf32> to vector<16x16xbf16>
    %c2_86 = arith.constant 2 : index
    %c0_87 = arith.constant 0 : index
    %c0_88 = arith.constant 0 : index
    %130 = vector.load %arg6[%c2_86, %c0_87, %c0_88] : memref<8x16x128xbf16, #tpu.memory_space<vmem>>, vector<1x16x128xbf16>
    %131 = vector.shape_cast %130 : vector<1x16x128xbf16> to vector<16x128xbf16>
    %cst_89 = arith.constant dense<0.000000e+00> : vector<16x128xf32>
    %132 = tpu.matmul %129, %131, %cst_89 {dimension_numbers = #tpu.dot_dimension_numbers<[1], [0], [0], [1], [0, 0, 1, 1], [], []>} : vector<16x16xbf16>, vector<16x128xbf16>, vector<16x128xf32> -> vector<16x128xf32>
    %133 = arith.addf %91, %132 : vector<16x128xf32>
    %c3 = arith.constant 3 : index
    %c0_90 = arith.constant 0 : index
    %c0_91 = arith.constant 0 : index
    %134 = vector.load %arg3[%c3, %c0_90, %c0_91] : memref<8x128x16xbf16, #tpu.memory_space<vmem>>, vector<1x128x16xbf16>
    %135 = vector.shape_cast %134 : vector<1x128x16xbf16> to vector<128x16xbf16>
    %cst_92 = arith.constant dense<0.000000e+00> : vector<16x16xf32>
    %136 = tpu.matmul %5, %135, %cst_92 {dimension_numbers = #tpu.dot_dimension_numbers<[1], [0], [0], [1], [0, 0, 1, 1], [], []>} : vector<16x128xbf16>, vector<128x16xbf16>, vector<16x16xf32> -> vector<16x16xf32>
    %c3_93 = arith.constant 3 : index
    %c0_94 = arith.constant 0 : index
    %c0_95 = arith.constant 0 : index
    %137 = vector.load %arg7[%c3_93, %c0_94, %c0_95] : memref<8x1x16xf32, #tpu.memory_space<vmem>>, vector<1x1x16xf32>
    %138 = vector.shape_cast %137 : vector<1x1x16xf32> to vector<1x16xf32>
    %139 = vector.broadcast %138 : vector<1x16xf32> to vector<16x16xf32>
    %140 = arith.addf %136, %139 : vector<16x16xf32>
    %c3_96 = arith.constant 3 : index
    %c0_97 = arith.constant 0 : index
    %c0_98 = arith.constant 0 : index
    %141 = vector.load %arg4[%c3_96, %c0_97, %c0_98] : memref<8x128x16xbf16, #tpu.memory_space<vmem>>, vector<1x128x16xbf16>
    %142 = vector.shape_cast %141 : vector<1x128x16xbf16> to vector<128x16xbf16>
    %cst_99 = arith.constant dense<0.000000e+00> : vector<16x16xf32>
    %143 = tpu.matmul %5, %142, %cst_99 {dimension_numbers = #tpu.dot_dimension_numbers<[1], [0], [0], [1], [0, 0, 1, 1], [], []>} : vector<16x128xbf16>, vector<128x16xbf16>, vector<16x16xf32> -> vector<16x16xf32>
    %c3_100 = arith.constant 3 : index
    %c0_101 = arith.constant 0 : index
    %c0_102 = arith.constant 0 : index
    %144 = vector.load %arg8[%c3_100, %c0_101, %c0_102] : memref<8x1x16xf32, #tpu.memory_space<vmem>>, vector<1x1x16xf32>
    %145 = vector.shape_cast %144 : vector<1x1x16xf32> to vector<1x16xf32>
    %146 = vector.broadcast %145 : vector<1x16xf32> to vector<16x16xf32>
    %147 = arith.addf %143, %146 : vector<16x16xf32>
    %c3_103 = arith.constant 3 : index
    %c0_104 = arith.constant 0 : index
    %c0_105 = arith.constant 0 : index
    %148 = vector.load %arg5[%c3_103, %c0_104, %c0_105] : memref<8x128x16xbf16, #tpu.memory_space<vmem>>, vector<1x128x16xbf16>
    %149 = vector.shape_cast %148 : vector<1x128x16xbf16> to vector<128x16xbf16>
    %cst_106 = arith.constant dense<0.000000e+00> : vector<16x16xf32>
    %150 = tpu.matmul %6, %149, %cst_106 {dimension_numbers = #tpu.dot_dimension_numbers<[1], [0], [0], [1], [0, 0, 1, 1], [], []>} : vector<16x128xbf16>, vector<128x16xbf16>, vector<16x16xf32> -> vector<16x16xf32>
    %c3_107 = arith.constant 3 : index
    %c0_108 = arith.constant 0 : index
    %c0_109 = arith.constant 0 : index
    %151 = vector.load %arg9[%c3_107, %c0_108, %c0_109] : memref<8x1x16xf32, #tpu.memory_space<vmem>>, vector<1x1x16xf32>
    %152 = vector.shape_cast %151 : vector<1x1x16xf32> to vector<1x16xf32>
    %153 = vector.broadcast %152 : vector<1x16xf32> to vector<16x16xf32>
    %154 = arith.addf %150, %153 : vector<16x16xf32>
    %155 = arith.truncf %140 : vector<16x16xf32> to vector<16x16xbf16>
    %156 = arith.truncf %147 : vector<16x16xf32> to vector<16x16xbf16>
    %cst_110 = arith.constant dense<0.000000e+00> : vector<16x16xf32>
    %157 = tpu.matmul %155, %156, %cst_110 {dimension_numbers = #tpu.dot_dimension_numbers<[1], [1], [0], [0], [0, 0, 1, 0], [], []>} : vector<16x16xbf16>, vector<16x16xbf16>, vector<16x16xf32> -> vector<16x16xf32>
    %cst_111 = arith.constant dense<0xFF800000> : vector<16xf32>
    %158 = vector.multi_reduction <maximumf>, %157, %cst_111 [1] : vector<16x16xf32> to vector<16xf32>
    %159 = vector.shape_cast %158 : vector<16xf32> to vector<16x1xf32>
    %160 = vector.broadcast %159 : vector<16x1xf32> to vector<16x16xf32>
    %161 = arith.subf %157, %160 : vector<16x16xf32>
    %162 = math.exp %161 : vector<16x16xf32>
    %cst_112 = arith.constant dense<0.000000e+00> : vector<16xf32>
    %163 = vector.multi_reduction <add>, %162, %cst_112 [1] : vector<16x16xf32> to vector<16xf32>
    %164 = vector.shape_cast %163 : vector<16xf32> to vector<16x1xf32>
    %165 = tpu.reciprocal %164 {approx = true} : vector<16x1xf32> -> vector<16x1xf32>
    %166 = vector.broadcast %165 : vector<16x1xf32> to vector<16x16xf32>
    %167 = arith.mulf %162, %166 : vector<16x16xf32>
    %168 = arith.truncf %167 : vector<16x16xf32> to vector<16x16xbf16>
    %169 = arith.truncf %154 : vector<16x16xf32> to vector<16x16xbf16>
    %cst_113 = arith.constant dense<0.000000e+00> : vector<16x16xf32>
    %170 = tpu.matmul %168, %169, %cst_113 {dimension_numbers = #tpu.dot_dimension_numbers<[1], [0], [0], [1], [0, 0, 1, 1], [], []>} : vector<16x16xbf16>, vector<16x16xbf16>, vector<16x16xf32> -> vector<16x16xf32>
    %171 = arith.truncf %170 : vector<16x16xf32> to vector<16x16xbf16>
    %c3_114 = arith.constant 3 : index
    %c0_115 = arith.constant 0 : index
    %c0_116 = arith.constant 0 : index
    %172 = vector.load %arg6[%c3_114, %c0_115, %c0_116] : memref<8x16x128xbf16, #tpu.memory_space<vmem>>, vector<1x16x128xbf16>
    %173 = vector.shape_cast %172 : vector<1x16x128xbf16> to vector<16x128xbf16>
    %cst_117 = arith.constant dense<0.000000e+00> : vector<16x128xf32>
    %174 = tpu.matmul %171, %173, %cst_117 {dimension_numbers = #tpu.dot_dimension_numbers<[1], [0], [0], [1], [0, 0, 1, 1], [], []>} : vector<16x16xbf16>, vector<16x128xbf16>, vector<16x128xf32> -> vector<16x128xf32>
    %175 = arith.addf %133, %174 : vector<16x128xf32>
    %c4 = arith.constant 4 : index
    %c0_118 = arith.constant 0 : index
    %c0_119 = arith.constant 0 : index
    %176 = vector.load %arg3[%c4, %c0_118, %c0_119] : memref<8x128x16xbf16, #tpu.memory_space<vmem>>, vector<1x128x16xbf16>
    %177 = vector.shape_cast %176 : vector<1x128x16xbf16> to vector<128x16xbf16>
    %cst_120 = arith.constant dense<0.000000e+00> : vector<16x16xf32>
    %178 = tpu.matmul %5, %177, %cst_120 {dimension_numbers = #tpu.dot_dimension_numbers<[1], [0], [0], [1], [0, 0, 1, 1], [], []>} : vector<16x128xbf16>, vector<128x16xbf16>, vector<16x16xf32> -> vector<16x16xf32>
    %c4_121 = arith.constant 4 : index
    %c0_122 = arith.constant 0 : index
    %c0_123 = arith.constant 0 : index
    %179 = vector.load %arg7[%c4_121, %c0_122, %c0_123] : memref<8x1x16xf32, #tpu.memory_space<vmem>>, vector<1x1x16xf32>
    %180 = vector.shape_cast %179 : vector<1x1x16xf32> to vector<1x16xf32>
    %181 = vector.broadcast %180 : vector<1x16xf32> to vector<16x16xf32>
    %182 = arith.addf %178, %181 : vector<16x16xf32>
    %c4_124 = arith.constant 4 : index
    %c0_125 = arith.constant 0 : index
    %c0_126 = arith.constant 0 : index
    %183 = vector.load %arg4[%c4_124, %c0_125, %c0_126] : memref<8x128x16xbf16, #tpu.memory_space<vmem>>, vector<1x128x16xbf16>
    %184 = vector.shape_cast %183 : vector<1x128x16xbf16> to vector<128x16xbf16>
    %cst_127 = arith.constant dense<0.000000e+00> : vector<16x16xf32>
    %185 = tpu.matmul %5, %184, %cst_127 {dimension_numbers = #tpu.dot_dimension_numbers<[1], [0], [0], [1], [0, 0, 1, 1], [], []>} : vector<16x128xbf16>, vector<128x16xbf16>, vector<16x16xf32> -> vector<16x16xf32>
    %c4_128 = arith.constant 4 : index
    %c0_129 = arith.constant 0 : index
    %c0_130 = arith.constant 0 : index
    %186 = vector.load %arg8[%c4_128, %c0_129, %c0_130] : memref<8x1x16xf32, #tpu.memory_space<vmem>>, vector<1x1x16xf32>
    %187 = vector.shape_cast %186 : vector<1x1x16xf32> to vector<1x16xf32>
    %188 = vector.broadcast %187 : vector<1x16xf32> to vector<16x16xf32>
    %189 = arith.addf %185, %188 : vector<16x16xf32>
    %c4_131 = arith.constant 4 : index
    %c0_132 = arith.constant 0 : index
    %c0_133 = arith.constant 0 : index
    %190 = vector.load %arg5[%c4_131, %c0_132, %c0_133] : memref<8x128x16xbf16, #tpu.memory_space<vmem>>, vector<1x128x16xbf16>
    %191 = vector.shape_cast %190 : vector<1x128x16xbf16> to vector<128x16xbf16>
    %cst_134 = arith.constant dense<0.000000e+00> : vector<16x16xf32>
    %192 = tpu.matmul %6, %191, %cst_134 {dimension_numbers = #tpu.dot_dimension_numbers<[1], [0], [0], [1], [0, 0, 1, 1], [], []>} : vector<16x128xbf16>, vector<128x16xbf16>, vector<16x16xf32> -> vector<16x16xf32>
    %c4_135 = arith.constant 4 : index
    %c0_136 = arith.constant 0 : index
    %c0_137 = arith.constant 0 : index
    %193 = vector.load %arg9[%c4_135, %c0_136, %c0_137] : memref<8x1x16xf32, #tpu.memory_space<vmem>>, vector<1x1x16xf32>
    %194 = vector.shape_cast %193 : vector<1x1x16xf32> to vector<1x16xf32>
    %195 = vector.broadcast %194 : vector<1x16xf32> to vector<16x16xf32>
    %196 = arith.addf %192, %195 : vector<16x16xf32>
    %197 = arith.truncf %182 : vector<16x16xf32> to vector<16x16xbf16>
    %198 = arith.truncf %189 : vector<16x16xf32> to vector<16x16xbf16>
    %cst_138 = arith.constant dense<0.000000e+00> : vector<16x16xf32>
    %199 = tpu.matmul %197, %198, %cst_138 {dimension_numbers = #tpu.dot_dimension_numbers<[1], [1], [0], [0], [0, 0, 1, 0], [], []>} : vector<16x16xbf16>, vector<16x16xbf16>, vector<16x16xf32> -> vector<16x16xf32>
    %cst_139 = arith.constant dense<0xFF800000> : vector<16xf32>
    %200 = vector.multi_reduction <maximumf>, %199, %cst_139 [1] : vector<16x16xf32> to vector<16xf32>
    %201 = vector.shape_cast %200 : vector<16xf32> to vector<16x1xf32>
    %202 = vector.broadcast %201 : vector<16x1xf32> to vector<16x16xf32>
    %203 = arith.subf %199, %202 : vector<16x16xf32>
    %204 = math.exp %203 : vector<16x16xf32>
    %cst_140 = arith.constant dense<0.000000e+00> : vector<16xf32>
    %205 = vector.multi_reduction <add>, %204, %cst_140 [1] : vector<16x16xf32> to vector<16xf32>
    %206 = vector.shape_cast %205 : vector<16xf32> to vector<16x1xf32>
    %207 = tpu.reciprocal %206 {approx = true} : vector<16x1xf32> -> vector<16x1xf32>
    %208 = vector.broadcast %207 : vector<16x1xf32> to vector<16x16xf32>
    %209 = arith.mulf %204, %208 : vector<16x16xf32>
    %210 = arith.truncf %209 : vector<16x16xf32> to vector<16x16xbf16>
    %211 = arith.truncf %196 : vector<16x16xf32> to vector<16x16xbf16>
    %cst_141 = arith.constant dense<0.000000e+00> : vector<16x16xf32>
    %212 = tpu.matmul %210, %211, %cst_141 {dimension_numbers = #tpu.dot_dimension_numbers<[1], [0], [0], [1], [0, 0, 1, 1], [], []>} : vector<16x16xbf16>, vector<16x16xbf16>, vector<16x16xf32> -> vector<16x16xf32>
    %213 = arith.truncf %212 : vector<16x16xf32> to vector<16x16xbf16>
    %c4_142 = arith.constant 4 : index
    %c0_143 = arith.constant 0 : index
    %c0_144 = arith.constant 0 : index
    %214 = vector.load %arg6[%c4_142, %c0_143, %c0_144] : memref<8x16x128xbf16, #tpu.memory_space<vmem>>, vector<1x16x128xbf16>
    %215 = vector.shape_cast %214 : vector<1x16x128xbf16> to vector<16x128xbf16>
    %cst_145 = arith.constant dense<0.000000e+00> : vector<16x128xf32>
    %216 = tpu.matmul %213, %215, %cst_145 {dimension_numbers = #tpu.dot_dimension_numbers<[1], [0], [0], [1], [0, 0, 1, 1], [], []>} : vector<16x16xbf16>, vector<16x128xbf16>, vector<16x128xf32> -> vector<16x128xf32>
    %217 = arith.addf %175, %216 : vector<16x128xf32>
    %c5 = arith.constant 5 : index
    %c0_146 = arith.constant 0 : index
    %c0_147 = arith.constant 0 : index
    %218 = vector.load %arg3[%c5, %c0_146, %c0_147] : memref<8x128x16xbf16, #tpu.memory_space<vmem>>, vector<1x128x16xbf16>
    %219 = vector.shape_cast %218 : vector<1x128x16xbf16> to vector<128x16xbf16>
    %cst_148 = arith.constant dense<0.000000e+00> : vector<16x16xf32>
    %220 = tpu.matmul %5, %219, %cst_148 {dimension_numbers = #tpu.dot_dimension_numbers<[1], [0], [0], [1], [0, 0, 1, 1], [], []>} : vector<16x128xbf16>, vector<128x16xbf16>, vector<16x16xf32> -> vector<16x16xf32>
    %c5_149 = arith.constant 5 : index
    %c0_150 = arith.constant 0 : index
    %c0_151 = arith.constant 0 : index
    %221 = vector.load %arg7[%c5_149, %c0_150, %c0_151] : memref<8x1x16xf32, #tpu.memory_space<vmem>>, vector<1x1x16xf32>
    %222 = vector.shape_cast %221 : vector<1x1x16xf32> to vector<1x16xf32>
    %223 = vector.broadcast %222 : vector<1x16xf32> to vector<16x16xf32>
    %224 = arith.addf %220, %223 : vector<16x16xf32>
    %c5_152 = arith.constant 5 : index
    %c0_153 = arith.constant 0 : index
    %c0_154 = arith.constant 0 : index
    %225 = vector.load %arg4[%c5_152, %c0_153, %c0_154] : memref<8x128x16xbf16, #tpu.memory_space<vmem>>, vector<1x128x16xbf16>
    %226 = vector.shape_cast %225 : vector<1x128x16xbf16> to vector<128x16xbf16>
    %cst_155 = arith.constant dense<0.000000e+00> : vector<16x16xf32>
    %227 = tpu.matmul %5, %226, %cst_155 {dimension_numbers = #tpu.dot_dimension_numbers<[1], [0], [0], [1], [0, 0, 1, 1], [], []>} : vector<16x128xbf16>, vector<128x16xbf16>, vector<16x16xf32> -> vector<16x16xf32>
    %c5_156 = arith.constant 5 : index
    %c0_157 = arith.constant 0 : index
    %c0_158 = arith.constant 0 : index
    %228 = vector.load %arg8[%c5_156, %c0_157, %c0_158] : memref<8x1x16xf32, #tpu.memory_space<vmem>>, vector<1x1x16xf32>
    %229 = vector.shape_cast %228 : vector<1x1x16xf32> to vector<1x16xf32>
    %230 = vector.broadcast %229 : vector<1x16xf32> to vector<16x16xf32>
    %231 = arith.addf %227, %230 : vector<16x16xf32>
    %c5_159 = arith.constant 5 : index
    %c0_160 = arith.constant 0 : index
    %c0_161 = arith.constant 0 : index
    %232 = vector.load %arg5[%c5_159, %c0_160, %c0_161] : memref<8x128x16xbf16, #tpu.memory_space<vmem>>, vector<1x128x16xbf16>
    %233 = vector.shape_cast %232 : vector<1x128x16xbf16> to vector<128x16xbf16>
    %cst_162 = arith.constant dense<0.000000e+00> : vector<16x16xf32>
    %234 = tpu.matmul %6, %233, %cst_162 {dimension_numbers = #tpu.dot_dimension_numbers<[1], [0], [0], [1], [0, 0, 1, 1], [], []>} : vector<16x128xbf16>, vector<128x16xbf16>, vector<16x16xf32> -> vector<16x16xf32>
    %c5_163 = arith.constant 5 : index
    %c0_164 = arith.constant 0 : index
    %c0_165 = arith.constant 0 : index
    %235 = vector.load %arg9[%c5_163, %c0_164, %c0_165] : memref<8x1x16xf32, #tpu.memory_space<vmem>>, vector<1x1x16xf32>
    %236 = vector.shape_cast %235 : vector<1x1x16xf32> to vector<1x16xf32>
    %237 = vector.broadcast %236 : vector<1x16xf32> to vector<16x16xf32>
    %238 = arith.addf %234, %237 : vector<16x16xf32>
    %239 = arith.truncf %224 : vector<16x16xf32> to vector<16x16xbf16>
    %240 = arith.truncf %231 : vector<16x16xf32> to vector<16x16xbf16>
    %cst_166 = arith.constant dense<0.000000e+00> : vector<16x16xf32>
    %241 = tpu.matmul %239, %240, %cst_166 {dimension_numbers = #tpu.dot_dimension_numbers<[1], [1], [0], [0], [0, 0, 1, 0], [], []>} : vector<16x16xbf16>, vector<16x16xbf16>, vector<16x16xf32> -> vector<16x16xf32>
    %cst_167 = arith.constant dense<0xFF800000> : vector<16xf32>
    %242 = vector.multi_reduction <maximumf>, %241, %cst_167 [1] : vector<16x16xf32> to vector<16xf32>
    %243 = vector.shape_cast %242 : vector<16xf32> to vector<16x1xf32>
    %244 = vector.broadcast %243 : vector<16x1xf32> to vector<16x16xf32>
    %245 = arith.subf %241, %244 : vector<16x16xf32>
    %246 = math.exp %245 : vector<16x16xf32>
    %cst_168 = arith.constant dense<0.000000e+00> : vector<16xf32>
    %247 = vector.multi_reduction <add>, %246, %cst_168 [1] : vector<16x16xf32> to vector<16xf32>
    %248 = vector.shape_cast %247 : vector<16xf32> to vector<16x1xf32>
    %249 = tpu.reciprocal %248 {approx = true} : vector<16x1xf32> -> vector<16x1xf32>
    %250 = vector.broadcast %249 : vector<16x1xf32> to vector<16x16xf32>
    %251 = arith.mulf %246, %250 : vector<16x16xf32>
    %252 = arith.truncf %251 : vector<16x16xf32> to vector<16x16xbf16>
    %253 = arith.truncf %238 : vector<16x16xf32> to vector<16x16xbf16>
    %cst_169 = arith.constant dense<0.000000e+00> : vector<16x16xf32>
    %254 = tpu.matmul %252, %253, %cst_169 {dimension_numbers = #tpu.dot_dimension_numbers<[1], [0], [0], [1], [0, 0, 1, 1], [], []>} : vector<16x16xbf16>, vector<16x16xbf16>, vector<16x16xf32> -> vector<16x16xf32>
    %255 = arith.truncf %254 : vector<16x16xf32> to vector<16x16xbf16>
    %c5_170 = arith.constant 5 : index
    %c0_171 = arith.constant 0 : index
    %c0_172 = arith.constant 0 : index
    %256 = vector.load %arg6[%c5_170, %c0_171, %c0_172] : memref<8x16x128xbf16, #tpu.memory_space<vmem>>, vector<1x16x128xbf16>
    %257 = vector.shape_cast %256 : vector<1x16x128xbf16> to vector<16x128xbf16>
    %cst_173 = arith.constant dense<0.000000e+00> : vector<16x128xf32>
    %258 = tpu.matmul %255, %257, %cst_173 {dimension_numbers = #tpu.dot_dimension_numbers<[1], [0], [0], [1], [0, 0, 1, 1], [], []>} : vector<16x16xbf16>, vector<16x128xbf16>, vector<16x128xf32> -> vector<16x128xf32>
    %259 = arith.addf %217, %258 : vector<16x128xf32>
    %c6 = arith.constant 6 : index
    %c0_174 = arith.constant 0 : index
    %c0_175 = arith.constant 0 : index
    %260 = vector.load %arg3[%c6, %c0_174, %c0_175] : memref<8x128x16xbf16, #tpu.memory_space<vmem>>, vector<1x128x16xbf16>
    %261 = vector.shape_cast %260 : vector<1x128x16xbf16> to vector<128x16xbf16>
    %cst_176 = arith.constant dense<0.000000e+00> : vector<16x16xf32>
    %262 = tpu.matmul %5, %261, %cst_176 {dimension_numbers = #tpu.dot_dimension_numbers<[1], [0], [0], [1], [0, 0, 1, 1], [], []>} : vector<16x128xbf16>, vector<128x16xbf16>, vector<16x16xf32> -> vector<16x16xf32>
    %c6_177 = arith.constant 6 : index
    %c0_178 = arith.constant 0 : index
    %c0_179 = arith.constant 0 : index
    %263 = vector.load %arg7[%c6_177, %c0_178, %c0_179] : memref<8x1x16xf32, #tpu.memory_space<vmem>>, vector<1x1x16xf32>
    %264 = vector.shape_cast %263 : vector<1x1x16xf32> to vector<1x16xf32>
    %265 = vector.broadcast %264 : vector<1x16xf32> to vector<16x16xf32>
    %266 = arith.addf %262, %265 : vector<16x16xf32>
    %c6_180 = arith.constant 6 : index
    %c0_181 = arith.constant 0 : index
    %c0_182 = arith.constant 0 : index
    %267 = vector.load %arg4[%c6_180, %c0_181, %c0_182] : memref<8x128x16xbf16, #tpu.memory_space<vmem>>, vector<1x128x16xbf16>
    %268 = vector.shape_cast %267 : vector<1x128x16xbf16> to vector<128x16xbf16>
    %cst_183 = arith.constant dense<0.000000e+00> : vector<16x16xf32>
    %269 = tpu.matmul %5, %268, %cst_183 {dimension_numbers = #tpu.dot_dimension_numbers<[1], [0], [0], [1], [0, 0, 1, 1], [], []>} : vector<16x128xbf16>, vector<128x16xbf16>, vector<16x16xf32> -> vector<16x16xf32>
    %c6_184 = arith.constant 6 : index
    %c0_185 = arith.constant 0 : index
    %c0_186 = arith.constant 0 : index
    %270 = vector.load %arg8[%c6_184, %c0_185, %c0_186] : memref<8x1x16xf32, #tpu.memory_space<vmem>>, vector<1x1x16xf32>
    %271 = vector.shape_cast %270 : vector<1x1x16xf32> to vector<1x16xf32>
    %272 = vector.broadcast %271 : vector<1x16xf32> to vector<16x16xf32>
    %273 = arith.addf %269, %272 : vector<16x16xf32>
    %c6_187 = arith.constant 6 : index
    %c0_188 = arith.constant 0 : index
    %c0_189 = arith.constant 0 : index
    %274 = vector.load %arg5[%c6_187, %c0_188, %c0_189] : memref<8x128x16xbf16, #tpu.memory_space<vmem>>, vector<1x128x16xbf16>
    %275 = vector.shape_cast %274 : vector<1x128x16xbf16> to vector<128x16xbf16>
    %cst_190 = arith.constant dense<0.000000e+00> : vector<16x16xf32>
    %276 = tpu.matmul %6, %275, %cst_190 {dimension_numbers = #tpu.dot_dimension_numbers<[1], [0], [0], [1], [0, 0, 1, 1], [], []>} : vector<16x128xbf16>, vector<128x16xbf16>, vector<16x16xf32> -> vector<16x16xf32>
    %c6_191 = arith.constant 6 : index
    %c0_192 = arith.constant 0 : index
    %c0_193 = arith.constant 0 : index
    %277 = vector.load %arg9[%c6_191, %c0_192, %c0_193] : memref<8x1x16xf32, #tpu.memory_space<vmem>>, vector<1x1x16xf32>
    %278 = vector.shape_cast %277 : vector<1x1x16xf32> to vector<1x16xf32>
    %279 = vector.broadcast %278 : vector<1x16xf32> to vector<16x16xf32>
    %280 = arith.addf %276, %279 : vector<16x16xf32>
    %281 = arith.truncf %266 : vector<16x16xf32> to vector<16x16xbf16>
    %282 = arith.truncf %273 : vector<16x16xf32> to vector<16x16xbf16>
    %cst_194 = arith.constant dense<0.000000e+00> : vector<16x16xf32>
    %283 = tpu.matmul %281, %282, %cst_194 {dimension_numbers = #tpu.dot_dimension_numbers<[1], [1], [0], [0], [0, 0, 1, 0], [], []>} : vector<16x16xbf16>, vector<16x16xbf16>, vector<16x16xf32> -> vector<16x16xf32>
    %cst_195 = arith.constant dense<0xFF800000> : vector<16xf32>
    %284 = vector.multi_reduction <maximumf>, %283, %cst_195 [1] : vector<16x16xf32> to vector<16xf32>
    %285 = vector.shape_cast %284 : vector<16xf32> to vector<16x1xf32>
    %286 = vector.broadcast %285 : vector<16x1xf32> to vector<16x16xf32>
    %287 = arith.subf %283, %286 : vector<16x16xf32>
    %288 = math.exp %287 : vector<16x16xf32>
    %cst_196 = arith.constant dense<0.000000e+00> : vector<16xf32>
    %289 = vector.multi_reduction <add>, %288, %cst_196 [1] : vector<16x16xf32> to vector<16xf32>
    %290 = vector.shape_cast %289 : vector<16xf32> to vector<16x1xf32>
    %291 = tpu.reciprocal %290 {approx = true} : vector<16x1xf32> -> vector<16x1xf32>
    %292 = vector.broadcast %291 : vector<16x1xf32> to vector<16x16xf32>
    %293 = arith.mulf %288, %292 : vector<16x16xf32>
    %294 = arith.truncf %293 : vector<16x16xf32> to vector<16x16xbf16>
    %295 = arith.truncf %280 : vector<16x16xf32> to vector<16x16xbf16>
    %cst_197 = arith.constant dense<0.000000e+00> : vector<16x16xf32>
    %296 = tpu.matmul %294, %295, %cst_197 {dimension_numbers = #tpu.dot_dimension_numbers<[1], [0], [0], [1], [0, 0, 1, 1], [], []>} : vector<16x16xbf16>, vector<16x16xbf16>, vector<16x16xf32> -> vector<16x16xf32>
    %297 = arith.truncf %296 : vector<16x16xf32> to vector<16x16xbf16>
    %c6_198 = arith.constant 6 : index
    %c0_199 = arith.constant 0 : index
    %c0_200 = arith.constant 0 : index
    %298 = vector.load %arg6[%c6_198, %c0_199, %c0_200] : memref<8x16x128xbf16, #tpu.memory_space<vmem>>, vector<1x16x128xbf16>
    %299 = vector.shape_cast %298 : vector<1x16x128xbf16> to vector<16x128xbf16>
    %cst_201 = arith.constant dense<0.000000e+00> : vector<16x128xf32>
    %300 = tpu.matmul %297, %299, %cst_201 {dimension_numbers = #tpu.dot_dimension_numbers<[1], [0], [0], [1], [0, 0, 1, 1], [], []>} : vector<16x16xbf16>, vector<16x128xbf16>, vector<16x128xf32> -> vector<16x128xf32>
    %301 = arith.addf %259, %300 : vector<16x128xf32>
    %c7 = arith.constant 7 : index
    %c0_202 = arith.constant 0 : index
    %c0_203 = arith.constant 0 : index
    %302 = vector.load %arg3[%c7, %c0_202, %c0_203] : memref<8x128x16xbf16, #tpu.memory_space<vmem>>, vector<1x128x16xbf16>
    %303 = vector.shape_cast %302 : vector<1x128x16xbf16> to vector<128x16xbf16>
    %cst_204 = arith.constant dense<0.000000e+00> : vector<16x16xf32>
    %304 = tpu.matmul %5, %303, %cst_204 {dimension_numbers = #tpu.dot_dimension_numbers<[1], [0], [0], [1], [0, 0, 1, 1], [], []>} : vector<16x128xbf16>, vector<128x16xbf16>, vector<16x16xf32> -> vector<16x16xf32>
    %c7_205 = arith.constant 7 : index
    %c0_206 = arith.constant 0 : index
    %c0_207 = arith.constant 0 : index
    %305 = vector.load %arg7[%c7_205, %c0_206, %c0_207] : memref<8x1x16xf32, #tpu.memory_space<vmem>>, vector<1x1x16xf32>
    %306 = vector.shape_cast %305 : vector<1x1x16xf32> to vector<1x16xf32>
    %307 = vector.broadcast %306 : vector<1x16xf32> to vector<16x16xf32>
    %308 = arith.addf %304, %307 : vector<16x16xf32>
    %c7_208 = arith.constant 7 : index
    %c0_209 = arith.constant 0 : index
    %c0_210 = arith.constant 0 : index
    %309 = vector.load %arg4[%c7_208, %c0_209, %c0_210] : memref<8x128x16xbf16, #tpu.memory_space<vmem>>, vector<1x128x16xbf16>
    %310 = vector.shape_cast %309 : vector<1x128x16xbf16> to vector<128x16xbf16>
    %cst_211 = arith.constant dense<0.000000e+00> : vector<16x16xf32>
    %311 = tpu.matmul %5, %310, %cst_211 {dimension_numbers = #tpu.dot_dimension_numbers<[1], [0], [0], [1], [0, 0, 1, 1], [], []>} : vector<16x128xbf16>, vector<128x16xbf16>, vector<16x16xf32> -> vector<16x16xf32>
    %c7_212 = arith.constant 7 : index
    %c0_213 = arith.constant 0 : index
    %c0_214 = arith.constant 0 : index
    %312 = vector.load %arg8[%c7_212, %c0_213, %c0_214] : memref<8x1x16xf32, #tpu.memory_space<vmem>>, vector<1x1x16xf32>
    %313 = vector.shape_cast %312 : vector<1x1x16xf32> to vector<1x16xf32>
    %314 = vector.broadcast %313 : vector<1x16xf32> to vector<16x16xf32>
    %315 = arith.addf %311, %314 : vector<16x16xf32>
    %c7_215 = arith.constant 7 : index
    %c0_216 = arith.constant 0 : index
    %c0_217 = arith.constant 0 : index
    %316 = vector.load %arg5[%c7_215, %c0_216, %c0_217] : memref<8x128x16xbf16, #tpu.memory_space<vmem>>, vector<1x128x16xbf16>
    %317 = vector.shape_cast %316 : vector<1x128x16xbf16> to vector<128x16xbf16>
    %cst_218 = arith.constant dense<0.000000e+00> : vector<16x16xf32>
    %318 = tpu.matmul %6, %317, %cst_218 {dimension_numbers = #tpu.dot_dimension_numbers<[1], [0], [0], [1], [0, 0, 1, 1], [], []>} : vector<16x128xbf16>, vector<128x16xbf16>, vector<16x16xf32> -> vector<16x16xf32>
    %c7_219 = arith.constant 7 : index
    %c0_220 = arith.constant 0 : index
    %c0_221 = arith.constant 0 : index
    %319 = vector.load %arg9[%c7_219, %c0_220, %c0_221] : memref<8x1x16xf32, #tpu.memory_space<vmem>>, vector<1x1x16xf32>
    %320 = vector.shape_cast %319 : vector<1x1x16xf32> to vector<1x16xf32>
    %321 = vector.broadcast %320 : vector<1x16xf32> to vector<16x16xf32>
    %322 = arith.addf %318, %321 : vector<16x16xf32>
    %323 = arith.truncf %308 : vector<16x16xf32> to vector<16x16xbf16>
    %324 = arith.truncf %315 : vector<16x16xf32> to vector<16x16xbf16>
    %cst_222 = arith.constant dense<0.000000e+00> : vector<16x16xf32>
    %325 = tpu.matmul %323, %324, %cst_222 {dimension_numbers = #tpu.dot_dimension_numbers<[1], [1], [0], [0], [0, 0, 1, 0], [], []>} : vector<16x16xbf16>, vector<16x16xbf16>, vector<16x16xf32> -> vector<16x16xf32>
    %cst_223 = arith.constant dense<0xFF800000> : vector<16xf32>
    %326 = vector.multi_reduction <maximumf>, %325, %cst_223 [1] : vector<16x16xf32> to vector<16xf32>
    %327 = vector.shape_cast %326 : vector<16xf32> to vector<16x1xf32>
    %328 = vector.broadcast %327 : vector<16x1xf32> to vector<16x16xf32>
    %329 = arith.subf %325, %328 : vector<16x16xf32>
    %330 = math.exp %329 : vector<16x16xf32>
    %cst_224 = arith.constant dense<0.000000e+00> : vector<16xf32>
    %331 = vector.multi_reduction <add>, %330, %cst_224 [1] : vector<16x16xf32> to vector<16xf32>
    %332 = vector.shape_cast %331 : vector<16xf32> to vector<16x1xf32>
    %333 = tpu.reciprocal %332 {approx = true} : vector<16x1xf32> -> vector<16x1xf32>
    %334 = vector.broadcast %333 : vector<16x1xf32> to vector<16x16xf32>
    %335 = arith.mulf %330, %334 : vector<16x16xf32>
    %336 = arith.truncf %335 : vector<16x16xf32> to vector<16x16xbf16>
    %337 = arith.truncf %322 : vector<16x16xf32> to vector<16x16xbf16>
    %cst_225 = arith.constant dense<0.000000e+00> : vector<16x16xf32>
    %338 = tpu.matmul %336, %337, %cst_225 {dimension_numbers = #tpu.dot_dimension_numbers<[1], [0], [0], [1], [0, 0, 1, 1], [], []>} : vector<16x16xbf16>, vector<16x16xbf16>, vector<16x16xf32> -> vector<16x16xf32>
    %339 = arith.truncf %338 : vector<16x16xf32> to vector<16x16xbf16>
    %c7_226 = arith.constant 7 : index
    %c0_227 = arith.constant 0 : index
    %c0_228 = arith.constant 0 : index
    %340 = vector.load %arg6[%c7_226, %c0_227, %c0_228] : memref<8x16x128xbf16, #tpu.memory_space<vmem>>, vector<1x16x128xbf16>
    %341 = vector.shape_cast %340 : vector<1x16x128xbf16> to vector<16x128xbf16>
    %cst_229 = arith.constant dense<0.000000e+00> : vector<16x128xf32>
    %342 = tpu.matmul %339, %341, %cst_229 {dimension_numbers = #tpu.dot_dimension_numbers<[1], [0], [0], [1], [0, 0, 1, 1], [], []>} : vector<16x16xbf16>, vector<16x128xbf16>, vector<16x128xf32> -> vector<16x128xf32>
    %343 = arith.addf %301, %342 : vector<16x128xf32>
    %c0_230 = arith.constant 0 : index
    %c0_231 = arith.constant 0 : index
    %344 = vector.load %arg10[%c0_230, %c0_231] : memref<1x128xf32, #tpu.memory_space<vmem>>, vector<1x128xf32>
    %345 = vector.broadcast %344 : vector<1x128xf32> to vector<16x128xf32>
    %346 = arith.addf %343, %345 : vector<16x128xf32>
    %347 = arith.addf %1, %346 : vector<16x128xf32>
    %cst_232 = arith.constant dense<0.000000e+00> : vector<16xf32>
    %348 = vector.multi_reduction <add>, %347, %cst_232 [1] : vector<16x128xf32> to vector<16xf32>
    %349 = vector.shape_cast %348 : vector<16xf32> to vector<16x1xf32>
    %cst_233 = arith.constant 1.280000e+02 : f32
    %350 = vector.broadcast %cst_233 : f32 to vector<16x1xf32>
    %351 = arith.divf %349, %350 : vector<16x1xf32>
    %352 = vector.broadcast %351 : vector<16x1xf32> to vector<16x128xf32>
    %353 = arith.subf %347, %352 : vector<16x128xf32>
    %354 = arith.mulf %353, %353 : vector<16x128xf32>
    %cst_234 = arith.constant dense<0.000000e+00> : vector<16xf32>
    %355 = vector.multi_reduction <add>, %354, %cst_234 [1] : vector<16x128xf32> to vector<16xf32>
    %356 = vector.shape_cast %355 : vector<16xf32> to vector<16x1xf32>
    %cst_235 = arith.constant 1.280000e+02 : f32
    %357 = vector.broadcast %cst_235 : f32 to vector<16x1xf32>
    %358 = arith.divf %356, %357 : vector<16x1xf32>
    %cst_236 = arith.constant 9.99999974E-6 : f32
    %359 = vector.broadcast %cst_236 : f32 to vector<16x1xf32>
    %360 = arith.addf %358, %359 : vector<16x1xf32>
    %361 = math.rsqrt %360 : vector<16x1xf32>
    %362 = vector.broadcast %361 : vector<16x1xf32> to vector<16x128xf32>
    %363 = arith.mulf %353, %362 : vector<16x128xf32>
    %c0_237 = arith.constant 0 : index
    %c0_238 = arith.constant 0 : index
    %364 = vector.load %arg11[%c0_237, %c0_238] : memref<1x128xf32, #tpu.memory_space<vmem>>, vector<1x128xf32>
    %365 = vector.broadcast %364 : vector<1x128xf32> to vector<16x128xf32>
    %366 = arith.mulf %363, %365 : vector<16x128xf32>
    %c0_239 = arith.constant 0 : index
    %c0_240 = arith.constant 0 : index
    %367 = vector.load %arg12[%c0_239, %c0_240] : memref<1x128xf32, #tpu.memory_space<vmem>>, vector<1x128xf32>
    %368 = vector.broadcast %367 : vector<1x128xf32> to vector<16x128xf32>
    %369 = arith.addf %366, %368 : vector<16x128xf32>
    %c0_241 = arith.constant 0 : index
    %c0_242 = arith.constant 0 : index
    %c0_243 = arith.constant 0 : index
    %370 = vector.load %arg13[%c0_241, %c0_242, %c0_243] : memref<1x16x128xf32, #tpu.memory_space<vmem>>, vector<1x16x128xf32>
    %371 = vector.shape_cast %370 : vector<1x16x128xf32> to vector<16x128xf32>
    %372 = vector.shape_cast %369 : vector<16x128xf32> to vector<1x16x128xf32>
    tpu.vector_store %arg13[%c0_241, %c0_242, %c0_243], %372 {strides = array<i32>} : memref<1x16x128xf32, #tpu.memory_space<vmem>>, vector<1x16x128xf32>,
    return
  }
  func.func @transform_0(%arg0: i32) -> (i32, i32, i32) {
    %c0_i32 = arith.constant 0 : i32
    %c0_i32_0 = arith.constant 0 : i32
    %c0_i32_1 = arith.constant 0 : i32
    return %arg0, %c0_i32, %c0_i32_0 : i32, i32, i32
  }
  func.func @transform_1(%arg0: i32) -> (i32, i32, i32) {
    %c0_i32 = arith.constant 0 : i32
    %c0_i32_0 = arith.constant 0 : i32
    %c0_i32_1 = arith.constant 0 : i32
    return %arg0, %c0_i32, %c0_i32_0 : i32, i32, i32
  }
  func.func @transform_2(%arg0: i32) -> (i32, i32, i32) {
    %c0_i32 = arith.constant 0 : i32
    %c0_i32_0 = arith.constant 0 : i32
    %c0_i32_1 = arith.constant 0 : i32
    %c0_i32_2 = arith.constant 0 : i32
    return %c0_i32, %c0_i32_0, %c0_i32_1 : i32, i32, i32
  }
  func.func @transform_3(%arg0: i32) -> (i32, i32, i32) {
    %c0_i32 = arith.constant 0 : i32
    %c0_i32_0 = arith.constant 0 : i32
    %c0_i32_1 = arith.constant 0 : i32
    %c0_i32_2 = arith.constant 0 : i32
    return %c0_i32, %c0_i32_0, %c0_i32_1 : i32, i32, i32
  }
  func.func @transform_4(%arg0: i32) -> (i32, i32, i32) {
    %c0_i32 = arith.constant 0 : i32
    %c0_i32_0 = arith.constant 0 : i32
    %c0_i32_1 = arith.constant 0 : i32
    %c0_i32_2 = arith.constant 0 : i32
    return %c0_i32, %c0_i32_0, %c0_i32_1 : i32, i32, i32
  }
  func.func @transform_5(%arg0: i32) -> (i32, i32, i32) {
    %c0_i32 = arith.constant 0 : i32
    %c0_i32_0 = arith.constant 0 : i32
    %c0_i32_1 = arith.constant 0 : i32
    %c0_i32_2 = arith.constant 0 : i32
    return %c0_i32, %c0_i32_0, %c0_i32_1 : i32, i32, i32
  }
  func.func @transform_6(%arg0: i32) -> (i32, i32, i32) {
    %c0_i32 = arith.constant 0 : i32
    %c0_i32_0 = arith.constant 0 : i32
    %c0_i32_1 = arith.constant 0 : i32
    %c0_i32_2 = arith.constant 0 : i32
    return %c0_i32, %c0_i32_0, %c0_i32_1 : i32, i32, i32
  }
  func.func @transform_7(%arg0: i32) -> (i32, i32, i32) {
    %c0_i32 = arith.constant 0 : i32
    %c0_i32_0 = arith.constant 0 : i32
    %c0_i32_1 = arith.constant 0 : i32
    %c0_i32_2 = arith.constant 0 : i32
    return %c0_i32, %c0_i32_0, %c0_i32_1 : i32, i32, i32
  }
  func.func @transform_8(%arg0: i32) -> (i32, i32, i32) {
    %c0_i32 = arith.constant 0 : i32
    %c0_i32_0 = arith.constant 0 : i32
    %c0_i32_1 = arith.constant 0 : i32
    %c0_i32_2 = arith.constant 0 : i32
    return %c0_i32, %c0_i32_0, %c0_i32_1 : i32, i32, i32
  }
  func.func @transform_9(%arg0: i32) -> (i32, i32) {
    %c0_i32 = arith.constant 0 : i32
    %c0_i32_0 = arith.constant 0 : i32
    %c0_i32_1 = arith.constant 0 : i32
    return %c0_i32, %c0_i32_0 : i32, i32
  }
  func.func @transform_10(%arg0: i32) -> (i32, i32) {
    %c0_i32 = arith.constant 0 : i32
    %c0_i32_0 = arith.constant 0 : i32
    %c0_i32_1 = arith.constant 0 : i32
    return %c0_i32, %c0_i32_0 : i32, i32
  }
  func.func @transform_11(%arg0: i32) -> (i32, i32) {
    %c0_i32 = arith.constant 0 : i32
    %c0_i32_0 = arith.constant 0 : i32
    %c0_i32_1 = arith.constant 0 : i32
    return %c0_i32, %c0_i32_0 : i32, i32
  }
  func.func @transform_12(%arg0: i32) -> (i32, i32, i32) {
    %c0_i32 = arith.constant 0 : i32
    %c0_i32_0 = arith.constant 0 : i32
    %c0_i32_1 = arith.constant 0 : i32
    return %arg0, %c0_i32, %c0_i32_0 : i32, i32, i32
  }
}

</mosaic_0001>

<llo_original>
// kernel: tpu_custom_call.1
$region0: #{tpu_custom_call.1}
  #allocation0 [shape = 'u32[]', space=smem, size = 0x4, offset = 0x4, fixed_abs, tag = 'smem constant byte address 0x4 - core index']
  #allocation1 [shape = 'u32[72,128]{1,0:T(1,128)}', space=vmem, size = 0x9000, scoped, tag = 'internal scratch']
  %s0 = inlined_call_operand.vmem [shape: f32[2,16,128], index: 0, kind: input, shape index: {}]
  %s1 = inlined_call_operand.vmem [shape: f32[2,16,128], index: 1, kind: input, shape index: {}]
  %s2 = inlined_call_operand.vmem [shape: bf16[8,128,16], index: 2, kind: input, shape index: {}]
  %s3 = inlined_call_operand.vmem [shape: bf16[8,128,16], index: 3, kind: input, shape index: {}]
  %s4 = inlined_call_operand.vmem [shape: bf16[8,128,16], index: 4, kind: input, shape index: {}]
  %s5 = inlined_call_operand.vmem [shape: bf16[8,16,128], index: 5, kind: input, shape index: {}]
  %s6 = inlined_call_operand.vmem [shape: f32[8,1,16], index: 6, kind: input, shape index: {}]
  %s7 = inlined_call_operand.vmem [shape: f32[8,1,16], index: 7, kind: input, shape index: {}]
  %s8 = inlined_call_operand.vmem [shape: f32[8,1,16], index: 8, kind: input, shape index: {}]
  %s9 = inlined_call_operand.vmem [shape: f32[1,128], index: 9, kind: input, shape index: {}]
  %s10 = inlined_call_operand.vmem [shape: f32[1,128], index: 10, kind: input, shape index: {}]
  %s11 = inlined_call_operand.vmem [shape: f32[1,128], index: 11, kind: input, shape index: {}]
  %s12 = inlined_call_operand.hbm [shape: f32[2,16,128], index: 12, kind: output, shape index: {}]
  %s13 = sld [smem:[#allocation0]]
  $region81: #{tpu_custom_call.1} parent=0
    _
  %s15 = ssub.s32 1, %s13
  %s16 = scalar_select 0, %s15, %s13
  $region1: #{tpu_custom_call.1} parent=0
    #allocation2 [shape = 'u8[16384]{0}', space=vmem, size = 0x4000, scoped, tag = 'output window, operand 0']
    #allocation3 [shape = 's32[2]{0}', space=sflag, size = 0x8, scoped, tag = 'scoped memory for tpu_custom_call.1']
    %17 = vsyncpa [#allocation3], 0
    %s18 = scalar_lea.sflag [#allocation3], 1
    %19 = vsyncpa %s18, 0
    loop: start=0, step=1, limit=4
    $region2: #{tpu_custom_call.1} parent=1 // loop_pre_header
      _
    $region3: #{tpu_custom_call.1} parent=1 // loop_header
      %s21 = sphi 0, %s25
      %p22 = scmp.ge.s32.totalorder %s21, 4
      %s31 = sphi 0, %s33
      %s34 = sphi 0, %s31
      %s35 = sphi 0, %s34
      %s51 = sphi 0, %s35
      %s57 = sphi 0, %s59
      %s60 = sphi 0, %s57
      %s61 = sphi 0, %s60
      %s77 = sphi 0, %s61
      %s81 = sphi 0, %s81
      %s83 = sphi 0, %s81
      %s84 = sphi 0, %s83
      %s98 = sphi 0, %s84
      %s102 = sphi 0, %s102
      %s104 = sphi 0, %s102
      %s105 = sphi 0, %s104
      %s119 = sphi 0, %s105
      %s123 = sphi 0, %s123
      %s125 = sphi 0, %s123
      %s126 = sphi 0, %s125
      %s140 = sphi 0, %s126
      %s144 = sphi 0, %s144
      %s146 = sphi 0, %s144
      %s147 = sphi 0, %s146
      %s161 = sphi 0, %s147
      %s165 = sphi 0, %s165
      %s167 = sphi 0, %s165
      %s168 = sphi 0, %s167
      %s182 = sphi 0, %s168
      %s186 = sphi 0, %s186
      %s188 = sphi 0, %s186
      %s189 = sphi 0, %s188
      %s203 = sphi 0, %s189
      %s207 = sphi 0, %s207
      %s209 = sphi 0, %s207
      %s210 = sphi 0, %s209
      %s224 = sphi 0, %s210
      %s228 = sphi 0, %s228
      %s230 = sphi 0, %s228
      %s231 = sphi 0, %s230
      %s245 = sphi 0, %s231
      %s249 = sphi 0, %s249
      %s251 = sphi 0, %s249
      %s252 = sphi 0, %s251
      %s266 = sphi 0, %s252
      %s270 = sphi 0, %s270
      %s272 = sphi 0, %s270
      %s273 = sphi 0, %s272
      %s287 = sphi 0, %s273
      %s293 = sphi 0, %s295
      %s296 = sphi 0, %s293
      %s297 = sphi 0, %s296
      %s313 = sphi 0, %s297
    $region4: #{tpu_custom_call.1} parent=1 // loop_header_branch
      %24 = sbr.rel (%p22) target = $region8
    $region5: #{tpu_custom_call.1} parent=1 // loop_body
      %s26 = ssub.s32 %s21, 1
      %s27 = ssub.s32 %s21, 2
      %s28 = sadd.s32 %s21, 1
      %s29 = ssub.s32 %s21, %s28
      %p30 = scmp.eq.s32.totalorder %s29, 0
      %s32 = sadd.s32 %s31, 1
      %s33 = scalar_select %p30, %s31, %s32
      %p36 = pneg %p30
      %p37 = scmp.eq.s32.totalorder %s21, 1
      %p38 = por %p36, %p37
      %p39 = scmp.ne.s32.totalorder %s31, %s34
      %p40 = scmp.eq.s32.totalorder %s21, 0
      %p41 = por %p39, %p40
      %p42 = scmp.ne.s32.totalorder %s31, %s34
      %p43 = scmp.eq.s32.totalorder %s26, 1
      %p44 = por %p42, %p43
      %p45 = scmp.ne.s32.totalorder %s34, %s35
      %p46 = scmp.eq.s32.totalorder %s26, 0
      %p47 = por %p45, %p46
      %p48 = scmp.ne.s32.totalorder %s34, %s35
      %p49 = scmp.eq.s32.totalorder %s27, 1
      %p50 = por %p48, %p49
      %p52 = scmp.ne.s32.totalorder %s35, %s51
      %p53 = scmp.eq.s32.totalorder %s27, 0
      %p54 = por %p52, %p53
      %s55 = ssub.s32 %s21, %s28
      %p56 = scmp.eq.s32.totalorder %s55, 0
      %s58 = sadd.s32 %s57, 1
      %s59 = scalar_select %p56, %s57, %s58
      %p62 = pneg %p56
      %p63 = scmp.eq.s32.totalorder %s21, 1
      %p64 = por %p62, %p63
      %p65 = scmp.ne.s32.totalorder %s57, %s60
      %p66 = scmp.eq.s32.totalorder %s21, 0
      %p67 = por %p65, %p66
      %p68 = scmp.ne.s32.totalorder %s57, %s60
      %p69 = scmp.eq.s32.totalorder %s26, 1
      %p70 = por %p68, %p69
      %p71 = scmp.ne.s32.totalorder %s60, %s61
      %p72 = scmp.eq.s32.totalorder %s26, 0
      %p73 = por %p71, %p72
      %p74 = scmp.ne.s32.totalorder %s60, %s61
      %p75 = scmp.eq.s32.totalorder %s27, 1
      %p76 = por %p74, %p75
      %p78 = scmp.ne.s32.totalorder %s61, %s77
      %p79 = scmp.eq.s32.totalorder %s27, 0
      %p80 = por %p78, %p79
      %s82 = sadd.s32 %s81, 1
      %p85 = scmp.eq.s32.totalorder %s21, 1
      %p86 = scmp.ne.s32.totalorder %s81, %s83
      %p87 = scmp.eq.s32.totalorder %s21, 0
      %p88 = por %p86, %p87
      %p89 = scmp.ne.s32.totalorder %s81, %s83
      %p90 = scmp.eq.s32.totalorder %s26, 1
      %p91 = por %p89, %p90
      %p92 = scmp.ne.s32.totalorder %s83, %s84
      %p93 = scmp.eq.s32.totalorder %s26, 0
      %p94 = por %p92, %p93
      %p95 = scmp.ne.s32.totalorder %s83, %s84
      %p96 = scmp.eq.s32.totalorder %s27, 1
      %p97 = por %p95, %p96
      %p99 = scmp.ne.s32.totalorder %s84, %s98
      %p100 = scmp.eq.s32.totalorder %s27, 0
      %p101 = por %p99, %p100
      %s103 = sadd.s32 %s102, 1
      %p106 = scmp.eq.s32.totalorder %s21, 1
      %p107 = scmp.ne.s32.totalorder %s102, %s104
      %p108 = scmp.eq.s32.totalorder %s21, 0
      %p109 = por %p107, %p108
      %p110 = scmp.ne.s32.totalorder %s102, %s104
      %p111 = scmp.eq.s32.totalorder %s26, 1
      %p112 = por %p110, %p111
      %p113 = scmp.ne.s32.totalorder %s104, %s105
      %p114 = scmp.eq.s32.totalorder %s26, 0
      %p115 = por %p113, %p114
      %p116 = scmp.ne.s32.totalorder %s104, %s105
      %p117 = scmp.eq.s32.totalorder %s27, 1
      %p118 = por %p116, %p117
      %p120 = scmp.ne.s32.totalorder %s105, %s119
      %p121 = scmp.eq.s32.totalorder %s27, 0
      %p122 = por %p120, %p121
      %s124 = sadd.s32 %s123, 1
      %p127 = scmp.eq.s32.totalorder %s21, 1
      %p128 = scmp.ne.s32.totalorder %s123, %s125
      %p129 = scmp.eq.s32.totalorder %s21, 0
      %p130 = por %p128, %p129
      %p131 = scmp.ne.s32.totalorder %s123, %s125
      %p132 = scmp.eq.s32.totalorder %s26, 1
      %p133 = por %p131, %p132
      %p134 = scmp.ne.s32.totalorder %s125, %s126
      %p135 = scmp.eq.s32.totalorder %s26, 0
      %p136 = por %p134, %p135
      %p137 = scmp.ne.s32.totalorder %s125, %s126
      %p138 = scmp.eq.s32.totalorder %s27, 1
      %p139 = por %p137, %p138
      %p141 = scmp.ne.s32.totalorder %s126, %s140
      %p142 = scmp.eq.s32.totalorder %s27, 0
      %p143 = por %p141, %p142
      %s145 = sadd.s32 %s144, 1
      %p148 = scmp.eq.s32.totalorder %s21, 1
      %p149 = scmp.ne.s32.totalorder %s144, %s146
      %p150 = scmp.eq.s32.totalorder %s21, 0
      %p151 = por %p149, %p150
      %p152 = scmp.ne.s32.totalorder %s144, %s146
      %p153 = scmp.eq.s32.totalorder %s26, 1
      %p154 = por %p152, %p153
      %p155 = scmp.ne.s32.totalorder %s146, %s147
      %p156 = scmp.eq.s32.totalorder %s26, 0
      %p157 = por %p155, %p156
      %p158 = scmp.ne.s32.totalorder %s146, %s147
      %p159 = scmp.eq.s32.totalorder %s27, 1
      %p160 = por %p158, %p159
      %p162 = scmp.ne.s32.totalorder %s147, %s161
      %p163 = scmp.eq.s32.totalorder %s27, 0
      %p164 = por %p162, %p163
      %s166 = sadd.s32 %s165, 1
      %p169 = scmp.eq.s32.totalorder %s21, 1
      %p170 = scmp.ne.s32.totalorder %s165, %s167
      %p171 = scmp.eq.s32.totalorder %s21, 0
      %p172 = por %p170, %p171
      %p173 = scmp.ne.s32.totalorder %s165, %s167
      %p174 = scmp.eq.s32.totalorder %s26, 1
      %p175 = por %p173, %p174
      %p176 = scmp.ne.s32.totalorder %s167, %s168
      %p177 = scmp.eq.s32.totalorder %s26, 0
      %p178 = por %p176, %p177
      %p179 = scmp.ne.s32.totalorder %s167, %s168
      %p180 = scmp.eq.s32.totalorder %s27, 1
      %p181 = por %p179, %p180
      %p183 = scmp.ne.s32.totalorder %s168, %s182
      %p184 = scmp.eq.s32.totalorder %s27, 0
      %p185 = por %p183, %p184
      %s187 = sadd.s32 %s186, 1
      %p190 = scmp.eq.s32.totalorder %s21, 1
      %p191 = scmp.ne.s32.totalorder %s186, %s188
      %p192 = scmp.eq.s32.totalorder %s21, 0
      %p193 = por %p191, %p192
      %p194 = scmp.ne.s32.totalorder %s186, %s188
      %p195 = scmp.eq.s32.totalorder %s26, 1
      %p196 = por %p194, %p195
      %p197 = scmp.ne.s32.totalorder %s188, %s189
      %p198 = scmp.eq.s32.totalorder %s26, 0
      %p199 = por %p197, %p198
      %p200 = scmp.ne.s32.totalorder %s188, %s189
      %p201 = scmp.eq.s32.totalorder %s27, 1
      %p202 = por %p200, %p201
      %p204 = scmp.ne.s32.totalorder %s189, %s203
      %p205 = scmp.eq.s32.totalorder %s27, 0
      %p206 = por %p204, %p205
      %s208 = sadd.s32 %s207, 1
      %p211 = scmp.eq.s32.totalorder %s21, 1
      %p212 = scmp.ne.s32.totalorder %s207, %s209
      %p213 = scmp.eq.s32.totalorder %s21, 0
      %p214 = por %p212, %p213
      %p215 = scmp.ne.s32.totalorder %s207, %s209
      %p216 = scmp.eq.s32.totalorder %s26, 1
      %p217 = por %p215, %p216
      %p218 = scmp.ne.s32.totalorder %s209, %s210
      %p219 = scmp.eq.s32.totalorder %s26, 0
      %p220 = por %p218, %p219
      %p221 = scmp.ne.s32.totalorder %s209, %s210
      %p222 = scmp.eq.s32.totalorder %s27, 1
      %p223 = por %p221, %p222
      %p225 = scmp.ne.s32.totalorder %s210, %s224
      %p226 = scmp.eq.s32.totalorder %s27, 0
      %p227 = por %p225, %p226
      %s229 = sadd.s32 %s228, 1
      %p232 = scmp.eq.s32.totalorder %s21, 1
      %p233 = scmp.ne.s32.totalorder %s228, %s230
      %p234 = scmp.eq.s32.totalorder %s21, 0
      %p235 = por %p233, %p234
      %p236 = scmp.ne.s32.totalorder %s228, %s230
      %p237 = scmp.eq.s32.totalorder %s26, 1
      %p238 = por %p236, %p237
      %p239 = scmp.ne.s32.totalorder %s230, %s231
      %p240 = scmp.eq.s32.totalorder %s26, 0
      %p241 = por %p239, %p240
      %p242 = scmp.ne.s32.totalorder %s230, %s231
      %p243 = scmp.eq.s32.totalorder %s27, 1
      %p244 = por %p242, %p243
      %p246 = scmp.ne.s32.totalorder %s231, %s245
      %p247 = scmp.eq.s32.totalorder %s27, 0
      %p248 = por %p246, %p247
      %s250 = sadd.s32 %s249, 1
      %p253 = scmp.eq.s32.totalorder %s21, 1
      %p254 = scmp.ne.s32.totalorder %s249, %s251
      %p255 = scmp.eq.s32.totalorder %s21, 0
      %p256 = por %p254, %p255
      %p257 = scmp.ne.s32.totalorder %s249, %s251
      %p258 = scmp.eq.s32.totalorder %s26, 1
      %p259 = por %p257, %p258
      %p260 = scmp.ne.s32.totalorder %s251, %s252
      %p261 = scmp.eq.s32.totalorder %s26, 0
      %p262 = por %p260, %p261
      %p263 = scmp.ne.s32.totalorder %s251, %s252
      %p264 = scmp.eq.s32.totalorder %s27, 1
      %p265 = por %p263, %p264
      %p267 = scmp.ne.s32.totalorder %s252, %s266
      %p268 = scmp.eq.s32.totalorder %s27, 0
      %p269 = por %p267, %p268
      %s271 = sadd.s32 %s270, 1
      %p274 = scmp.eq.s32.totalorder %s21, 1
      %p275 = scmp.ne.s32.totalorder %s270, %s272
      %p276 = scmp.eq.s32.totalorder %s21, 0
      %p277 = por %p275, %p276
      %p278 = scmp.ne.s32.totalorder %s270, %s272
      %p279 = scmp.eq.s32.totalorder %s26, 1
      %p280 = por %p278, %p279
      %p281 = scmp.ne.s32.totalorder %s272, %s273
      %p282 = scmp.eq.s32.totalorder %s26, 0
      %p283 = por %p281, %p282
      %p284 = scmp.ne.s32.totalorder %s272, %s273
      %p285 = scmp.eq.s32.totalorder %s27, 1
      %p286 = por %p284, %p285
      %p288 = scmp.ne.s32.totalorder %s273, %s287
      %p289 = scmp.eq.s32.totalorder %s27, 0
      %p290 = por %p288, %p289
      %s291 = ssub.s32 %s21, %s28
      %p292 = scmp.eq.s32.totalorder %s291, 0
      %s294 = sadd.s32 %s293, 1
      %s295 = scalar_select %p292, %s293, %s294
      %p298 = pneg %p292
      %p299 = scmp.eq.s32.totalorder %s21, 1
      %p300 = por %p298, %p299
      %p301 = scmp.ne.s32.totalorder %s293, %s296
      %p302 = scmp.eq.s32.totalorder %s21, 0
      %p303 = por %p301, %p302
      %p304 = scmp.ne.s32.totalorder %s293, %s296
      %p305 = scmp.eq.s32.totalorder %s26, 1
      %p306 = por %p304, %p305
      %p307 = scmp.ne.s32.totalorder %s296, %s297
      %p308 = scmp.eq.s32.totalorder %s26, 0
      %p309 = por %p307, %p308
      %p310 = scmp.ne.s32.totalorder %s296, %s297
      %p311 = scmp.eq.s32.totalorder %s27, 1
      %p312 = por %p310, %p311
      %p314 = scmp.ne.s32.totalorder %s297, %s313
      %p315 = scmp.eq.s32.totalorder %s27, 0
      %p316 = por %p314, %p315
      %p317 = scmp.le.s32.totalorder 1, %s21
      %p318 = scmp.lt.s32.totalorder %s21, 3
      %p319 = pnand %p317, %p318
      %p320 = pneg %p319
      // Predicated region
      $region9: #{tpu_custom_call.1} parent=5 // pred_check
        _
      $region10: #{tpu_custom_call.1} parent=5 // pred_check_branch
        %322 = sbr.rel (%p319) target = $region12
      $region11: #{tpu_custom_call.1} parent=5 // pred_region
        %s323 = ssub.s32 %s21, 1
        // Predicated region
        $region13: #{tpu_custom_call.1} parent=11 // pred_check
          %p324 = pneg %p94
        $region14: #{tpu_custom_call.1} parent=11 // pred_check_branch
          %326 = sbr.rel (%p324) target = $region16
        $region15: #{tpu_custom_call.1} parent=11 // pred_region
          _
        $region16: #{tpu_custom_call.1} parent=11 // pred_fallthru
          _
        // Predicated region
        $region17: #{tpu_custom_call.1} parent=11 // pred_check
          %p327 = pneg %p115
        $region18: #{tpu_custom_call.1} parent=11 // pred_check_branch
          %329 = sbr.rel (%p327) target = $region20
        $region19: #{tpu_custom_call.1} parent=11 // pred_region
          _
        $region20: #{tpu_custom_call.1} parent=11 // pred_fallthru
          _
        // Predicated region
        $region21: #{tpu_custom_call.1} parent=11 // pred_check
          %p330 = pneg %p136
        $region22: #{tpu_custom_call.1} parent=11 // pred_check_branch
          %332 = sbr.rel (%p330) target = $region24
        $region23: #{tpu_custom_call.1} parent=11 // pred_region
          _
        $region24: #{tpu_custom_call.1} parent=11 // pred_fallthru
          _
        // Predicated region
        $region25: #{tpu_custom_call.1} parent=11 // pred_check
          %p333 = pneg %p157
        $region26: #{tpu_custom_call.1} parent=11 // pred_check_branch
          %335 = sbr.rel (%p333) target = $region28
        $region27: #{tpu_custom_call.1} parent=11 // pred_region
          _
        $region28: #{tpu_custom_call.1} parent=11 // pred_fallthru
          _
        // Predicated region
        $region29: #{tpu_custom_call.1} parent=11 // pred_check
          %p336 = pneg %p178
        $region30: #{tpu_custom_call.1} parent=11 // pred_check_branch
          %338 = sbr.rel (%p336) target = $region32
        $region31: #{tpu_custom_call.1} parent=11 // pred_region
          _
        $region32: #{tpu_custom_call.1} parent=11 // pred_fallthru
          _
        // Predicated region
        $region33: #{tpu_custom_call.1} parent=11 // pred_check
          %p339 = pneg %p199
        $region34: #{tpu_custom_call.1} parent=11 // pred_check_branch
          %341 = sbr.rel (%p339) target = $region36
        $region35: #{tpu_custom_call.1} parent=11 // pred_region
          _
        $region36: #{tpu_custom_call.1} parent=11 // pred_fallthru
          _
        // Predicated region
        $region37: #{tpu_custom_call.1} parent=11 // pred_check
          %p342 = pneg %p220
        $region38: #{tpu_custom_call.1} parent=11 // pred_check_branch
          %344 = sbr.rel (%p342) target = $region40
        $region39: #{tpu_custom_call.1} parent=11 // pred_region
          _
        $region40: #{tpu_custom_call.1} parent=11 // pred_fallthru
          _
        // Predicated region
        $region41: #{tpu_custom_call.1} parent=11 // pred_check
          %p345 = pneg %p241
        $region42: #{tpu_custom_call.1} parent=11 // pred_check_branch
          %347 = sbr.rel (%p345) target = $region44
        $region43: #{tpu_custom_call.1} parent=11 // pred_region
          _
        $region44: #{tpu_custom_call.1} parent=11 // pred_fallthru
          _
        // Predicated region
        $region45: #{tpu_custom_call.1} parent=11 // pred_check
          %p348 = pneg %p262
        $region46: #{tpu_custom_call.1} parent=11 // pred_check_branch
          %350 = sbr.rel (%p348) target = $region48
        $region47: #{tpu_custom_call.1} parent=11 // pred_region
          _
        $region48: #{tpu_custom_call.1} parent=11 // pred_fallthru
          _
        // Predicated region
        $region49: #{tpu_custom_call.1} parent=11 // pred_check
          %p351 = pneg %p283
        $region50: #{tpu_custom_call.1} parent=11 // pred_check_branch
          %353 = sbr.rel (%p351) target = $region52
        $region51: #{tpu_custom_call.1} parent=11 // pred_region
          _
        $region52: #{tpu_custom_call.1} parent=11 // pred_fallthru
          _
      $region12: #{tpu_custom_call.1} parent=5 // pred_fallthru
        _
      %p354 = scmp.lt.s32.totalorder %s21, 2
      // Predicated region
      $region53: #{tpu_custom_call.1} parent=5 // pred_check
        %p355 = pneg %p354
      $region54: #{tpu_custom_call.1} parent=5 // pred_check_branch
        %357 = sbr.rel (%p355) target = $region56
      $region55: #{tpu_custom_call.1} parent=5 // pred_region
        // Predicated region
        $region57: #{tpu_custom_call.1} parent=55 // pred_check
          %p358 = pneg %p41
        $region58: #{tpu_custom_call.1} parent=55 // pred_check_branch
          %360 = sbr.rel (%p358) target = $region60
        $region59: #{tpu_custom_call.1} parent=55 // pred_region
          %p361 = scmp.lt.s32.totalorder %s21, 1
          %s362 = scalar_select %p361, %s21, 1
          %s363 = smul.addr %s362, 2
          %s364 = smul.addr %s363, 8
          %s365 = scalar_lea.vmem %s0, %s364
        $region60: #{tpu_custom_call.1} parent=55 // pred_fallthru
          _
        // Predicated region
        $region61: #{tpu_custom_call.1} parent=55 // pred_check
          %p366 = pneg %p67
        $region62: #{tpu_custom_call.1} parent=55 // pred_check_branch
          %368 = sbr.rel (%p366) target = $region64
        $region63: #{tpu_custom_call.1} parent=55 // pred_region
          %p369 = scmp.lt.s32.totalorder %s21, 1
          %s370 = scalar_select %p369, %s21, 1
          %s371 = smul.addr %s370, 2
          %s372 = smul.addr %s371, 8
          %s373 = scalar_lea.vmem %s1, %s372
        $region64: #{tpu_custom_call.1} parent=55 // pred_fallthru
          _
      $region56: #{tpu_custom_call.1} parent=5 // pred_fallthru
        _
      %p374 = scmp.le.s32.totalorder 1, %s21
      %p375 = scmp.lt.s32.totalorder %s21, 3
      %p376 = pnand %p374, %p375
      %p377 = pneg %p376
      // Predicated region
      $region65: #{tpu_custom_call.1} parent=5 // pred_check
        _
      $region66: #{tpu_custom_call.1} parent=5 // pred_check_branch
        %379 = sbr.rel (%p376) target = $region68
      $region67: #{tpu_custom_call.1} parent=5 // pred_region
        %s380 = ssub.s32 %s21, 1
        %p381 = scmp.lt.s32.totalorder %s26, 1
        %s382 = scalar_select %p381, %s26, 1
        %s383 = smul.addr %s382, 2
        %s384 = smul.addr %s383, 8
        %s385 = scalar_lea.vmem %s0, %s384
        %p386 = pneg %p47
        %p387 = pneg %p44
        %p388 = scmp.lt.s32.totalorder %s26, 1
        %s389 = scalar_select %p388, %s26, 1
        %s390 = smul.addr %s389, 2
        %s391 = smul.addr %s390, 8
        %s392 = scalar_lea.vmem %s1, %s391
        %p393 = pneg %p73
        %p394 = pneg %p70
        %p395 = pneg %p94
        %p396 = pneg %p91
        %p397 = pneg %p115
        %p398 = pneg %p112
        %p399 = pneg %p136
        %p400 = pneg %p133
        %p401 = pneg %p157
        %p402 = pneg %p154
        %p403 = pneg %p178
        %p404 = pneg %p175
        %p405 = pneg %p199
        %p406 = pneg %p196
        %p407 = pneg %p220
        %p408 = pneg %p217
        %p409 = pneg %p241
        %p410 = pneg %p238
        %p411 = pneg %p262
        %p412 = pneg %p259
        %p413 = pneg %p283
        %p414 = pneg %p280
        %p415 = pneg %p309
        %p416 = pneg %p306
        %s417 = sand.u32 %s296, 1
        %s418 = scalar_lea.sflag [#allocation3], %s417
        %s419 = sand.u32 %s296, 1
        %s420 = smul.addr %s419, 16
        %s421 = scalar_lea.vmem [#allocation2], %s420
        %p422 = scmp.lt.s32.totalorder %s26, 1
        %s423 = scalar_select %p422, %s26, 1
        %s424 = smul.addr %s423, 2
        %s425 = smul.addr %s424, 8
        %s426 = scalar_lea.vmem %s0, %s425
        %p427 = scmp.lt.s32.totalorder %s26, 1
        %s428 = scalar_select %p427, %s26, 1
        %s429 = smul.addr %s428, 2
        %s430 = smul.addr %s429, 8
        %s431 = scalar_lea.vmem %s1, %s430
        %v433 = vld [vmem:[%s426] sm:$0xff]
        %v434 = vld [vmem:[%s426 + $0x8] sm:$0xff]
        %v435 = vld [vmem:[%s431] sm:$0xff]
        %v436 = vld [vmem:[%s431 + $0x8] sm:$0xff]
        %v437 = vadd.f32 %v433, %v435
        %v438 = vadd.f32 %v434, %v436
        %v439 = vpack.c.bf16 %v438, %v437
        %v440 = vpack.c.bf16 %v434, %v433
        %v441 = vld [vmem:[%s2] sm:$0xf]
        %v442 = vld [vmem:[%s2 + $0x4] sm:$0xf]
        %v443 = vld [vmem:[%s2 + $0x8] sm:$0xf]
        %v444 = vld [vmem:[%s2 + $0xc] sm:$0xf]
        %v445 = vld [vmem:[%s2 + $0x10] sm:$0xf]
        %v446 = vld [vmem:[%s2 + $0x14] sm:$0xf]
        %v447 = vld [vmem:[%s2 + $0x18] sm:$0xf]
        %v448 = vld [vmem:[%s2 + $0x1c] sm:$0xf]
        %v449 = vld [vmem:[%s2 + $0x20] sm:$0xf]
        %v450 = vld [vmem:[%s2 + $0x24] sm:$0xf]
        %v451 = vld [vmem:[%s2 + $0x28] sm:$0xf]
        %v452 = vld [vmem:[%s2 + $0x2c] sm:$0xf]
        %v453 = vld [vmem:[%s2 + $0x30] sm:$0xf]
        %v454 = vld [vmem:[%s2 + $0x34] sm:$0xf]
        %v455 = vld [vmem:[%s2 + $0x38] sm:$0xf]
        %v456 = vld [vmem:[%s2 + $0x3c] sm:$0xf]
        %v457 = vld [vmem:[%s6] sm:$0x1]
        %v459 = vperm.slane %v457, 0
        %v477 = vunpack.c.l.b16 %v441
        %v478 = vunpack.c.l.b16 %v442
        %v479 = vunpack.c.l.b16 %v443
        %v480 = vunpack.c.l.b16 %v444
        %v481 = vunpack.c.l.b16 %v445
        %v482 = vunpack.c.l.b16 %v446
        %v483 = vunpack.c.l.b16 %v447
        %v484 = vunpack.c.l.b16 %v448
        %v485 = vunpack.c.l.b16 %v449
        %v486 = vunpack.c.l.b16 %v450
        %v487 = vunpack.c.l.b16 %v451
        %v488 = vunpack.c.l.b16 %v452
        %v489 = vunpack.c.l.b16 %v453
        %v490 = vunpack.c.l.b16 %v454
        %v491 = vunpack.c.l.b16 %v455
        %v492 = vunpack.c.l.b16 %v456
        %v493 = vpack.c.b16 %v478, %v477
        %v494 = vpack.c.b16 %v480, %v479
        %v495 = vpack.c.b16 %v482, %v481
        %v496 = vpack.c.b16 %v484, %v483
        %v497 = vpack.c.b16 %v486, %v485
        %v498 = vpack.c.b16 %v488, %v487
        %v499 = vpack.c.b16 %v490, %v489
        %v500 = vpack.c.b16 %v492, %v491
        %509 = vmatpush.bf16.msra.mxu0 %v500
        %510 = vmatpush.bf16.msra.mxu0 %v499
        %511 = vmatpush.bf16.msra.mxu0 %v498
        %512 = vmatpush.bf16.msra.mxu0 %v497
        %513 = vmatpush.bf16.msra.mxu0 %v496
        %514 = vmatpush.bf16.msra.mxu0 %v495
        %515 = vmatpush.bf16.msra.mxu0 %v494
        %516 = vmatpush.bf16.msra.mxu0 %v493
        %517 = vmatmul.bf16.gmra.mxu0 %v439
        %v518 = vpop.f32.mrf.mxu0
        %v519 = vadd.f32 %v459, %v518
        %v520 = vpop.f32.mrf.mxu0
        %v521 = vadd.f32 %v459, %v520
        %522 = vdwg.mxu0
        %v523 = vld [vmem:[%s3] sm:$0xf]
        %v524 = vld [vmem:[%s3 + $0x4] sm:$0xf]
        %v525 = vld [vmem:[%s3 + $0x8] sm:$0xf]
        %v526 = vld [vmem:[%s3 + $0xc] sm:$0xf]
        %v527 = vld [vmem:[%s3 + $0x10] sm:$0xf]
        %v528 = vld [vmem:[%s3 + $0x14] sm:$0xf]
        %v529 = vld [vmem:[%s3 + $0x18] sm:$0xf]
        %v530 = vld [vmem:[%s3 + $0x1c] sm:$0xf]
        %v531 = vld [vmem:[%s3 + $0x20] sm:$0xf]
        %v532 = vld [vmem:[%s3 + $0x24] sm:$0xf]
        %v533 = vld [vmem:[%s3 + $0x28] sm:$0xf]
        %v534 = vld [vmem:[%s3 + $0x2c] sm:$0xf]
        %v535 = vld [vmem:[%s3 + $0x30] sm:$0xf]
        %v536 = vld [vmem:[%s3 + $0x34] sm:$0xf]
        %v537 = vld [vmem:[%s3 + $0x38] sm:$0xf]
        %v538 = vld [vmem:[%s3 + $0x3c] sm:$0xf]
        %v539 = vld [vmem:[%s7] sm:$0x1]
        %v541 = vperm.slane %v539, 0
        %v559 = vunpack.c.l.b16 %v523
        %v560 = vunpack.c.l.b16 %v524
        %v561 = vunpack.c.l.b16 %v525
        %v562 = vunpack.c.l.b16 %v526
        %v563 = vunpack.c.l.b16 %v527
        %v564 = vunpack.c.l.b16 %v528
        %v565 = vunpack.c.l.b16 %v529
        %v566 = vunpack.c.l.b16 %v530
        %v567 = vunpack.c.l.b16 %v531
        %v568 = vunpack.c.l.b16 %v532
        %v569 = vunpack.c.l.b16 %v533
        %v570 = vunpack.c.l.b16 %v534
        %v571 = vunpack.c.l.b16 %v535
        %v572 = vunpack.c.l.b16 %v536
        %v573 = vunpack.c.l.b16 %v537
        %v574 = vunpack.c.l.b16 %v538
        %v575 = vpack.c.b16 %v560, %v559
        %v576 = vpack.c.b16 %v562, %v561
        %v577 = vpack.c.b16 %v564, %v563
        %v578 = vpack.c.b16 %v566, %v565
        %v579 = vpack.c.b16 %v568, %v567
        %v580 = vpack.c.b16 %v570, %v569
        %v581 = vpack.c.b16 %v572, %v571
        %v582 = vpack.c.b16 %v574, %v573
        %591 = vmatpush.bf16.msra.mxu0 %v582
        %592 = vmatpush.bf16.msra.mxu0 %v581
        %593 = vmatpush.bf16.msra.mxu0 %v580
        %594 = vmatpush.bf16.msra.mxu0 %v579
        %595 = vmatpush.bf16.msra.mxu0 %v578
        %596 = vmatpush.bf16.msra.mxu0 %v577
        %597 = vmatpush.bf16.msra.mxu0 %v576
        %598 = vmatpush.bf16.msra.mxu0 %v575
        %599 = vmatmul.bf16.gmra.mxu0 %v439
        %v600 = vpop.f32.mrf.mxu0
        %v601 = vadd.f32 %v541, %v600
        %v602 = vpop.f32.mrf.mxu0
        %v603 = vadd.f32 %v541, %v602
        %604 = vdwg.mxu0
        %v605 = vld [vmem:[%s4] sm:$0xf]
        %v606 = vld [vmem:[%s4 + $0x4] sm:$0xf]
        %v607 = vld [vmem:[%s4 + $0x8] sm:$0xf]
        %v608 = vld [vmem:[%s4 + $0xc] sm:$0xf]
        %v609 = vld [vmem:[%s4 + $0x10] sm:$0xf]
        %v610 = vld [vmem:[%s4 + $0x14] sm:$0xf]
        %v611 = vld [vmem:[%s4 + $0x18] sm:$0xf]
        %v612 = vld [vmem:[%s4 + $0x1c] sm:$0xf]
        %v613 = vld [vmem:[%s4 + $0x20] sm:$0xf]
        %v614 = vld [vmem:[%s4 + $0x24] sm:$0xf]
        %v615 = vld [vmem:[%s4 + $0x28] sm:$0xf]
        %v616 = vld [vmem:[%s4 + $0x2c] sm:$0xf]
        %v617 = vld [vmem:[%s4 + $0x30] sm:$0xf]
        %v618 = vld [vmem:[%s4 + $0x34] sm:$0xf]
        %v619 = vld [vmem:[%s4 + $0x38] sm:$0xf]
        %v620 = vld [vmem:[%s4 + $0x3c] sm:$0xf]
        %v621 = vld [vmem:[%s8] sm:$0x1]
        %v623 = vperm.slane %v621, 0
        %v641 = vunpack.c.l.b16 %v605
        %v642 = vunpack.c.l.b16 %v606
        %v643 = vunpack.c.l.b16 %v607
        %v644 = vunpack.c.l.b16 %v608
        %v645 = vunpack.c.l.b16 %v609
        %v646 = vunpack.c.l.b16 %v610
        %v647 = vunpack.c.l.b16 %v611
        %v648 = vunpack.c.l.b16 %v612
        %v649 = vunpack.c.l.b16 %v613
        %v650 = vunpack.c.l.b16 %v614
        %v651 = vunpack.c.l.b16 %v615
        %v652 = vunpack.c.l.b16 %v616
        %v653 = vunpack.c.l.b16 %v617
        %v654 = vunpack.c.l.b16 %v618
        %v655 = vunpack.c.l.b16 %v619
        %v656 = vunpack.c.l.b16 %v620
        %v657 = vpack.c.b16 %v642, %v641
        %v658 = vpack.c.b16 %v644, %v643
        %v659 = vpack.c.b16 %v646, %v645
        %v660 = vpack.c.b16 %v648, %v647
        %v661 = vpack.c.b16 %v650, %v649
        %v662 = vpack.c.b16 %v652, %v651
        %v663 = vpack.c.b16 %v654, %v653
        %v664 = vpack.c.b16 %v656, %v655
        %673 = vmatpush.bf16.msra.mxu0 %v664
        %674 = vmatpush.bf16.msra.mxu0 %v663
        %675 = vmatpush.bf16.msra.mxu0 %v662
        %676 = vmatpush.bf16.msra.mxu0 %v661
        %677 = vmatpush.bf16.msra.mxu0 %v660
        %678 = vmatpush.bf16.msra.mxu0 %v659
        %679 = vmatpush.bf16.msra.mxu0 %v658
        %680 = vmatpush.bf16.msra.mxu0 %v657
        %681 = vmatmul.bf16.gmra.mxu0 %v440
        %v682 = vpop.f32.mrf.mxu0
        %v683 = vadd.f32 %v623, %v682
        %v684 = vpop.f32.mrf.mxu0
        %v685 = vadd.f32 %v623, %v684
        %686 = vdwg.mxu0
        %v687 = vpack.c.bf16 %v521, %v519
        %v688 = vpack.c.bf16 %v603, %v601
        %vm689 = vcmask 130048
        %v691 = vsel %vm689, %v687, 0
        %v694 = vsel %vm689, %v688, 0
        %696 = vmatpush.bf16.xpose.msra.mxu0 0
        %697 = vmatpush.bf16.xpose.msra.mxu0 0
        %698 = vmatpush.bf16.xpose.msra.mxu0 0
        %699 = vmatpush.bf16.xpose.msra.mxu0 0
        %700 = vmatpush.bf16.xpose.msra.mxu0 0
        %701 = vmatpush.bf16.xpose.msra.mxu0 0
        %702 = vmatpush.bf16.xpose.msra.mxu0 0
        %703 = vmatpush.bf16.xpose.msra.mxu0 %v694
        %704 = vmatmul.bf16.gmra.mxu0 %v691
        %v705 = vpop.f32.mrf.mxu0
        %v706 = vadd.f32 0.0, %v705
        %v707 = vpop.f32.mrf.mxu0
        %v708 = vadd.f32 0.0, %v707
        %709 = vdwg.mxu0
        %v710 = vsel %vm689, %v706, -inf
        %711 = vmax.xlane.f32.xlu0 %v710
        %v712 = vpop.xlane.xlu0 %711
        %v713 = vsel %vm689, %v708, -inf
        %714 = vmax.xlane.f32.xlu0 %v713
        %v715 = vpop.xlane.xlu0 %714
        %v716 = vsub.f32 %v706, %v712
        %v717 = vsub.f32 %v708, %v715
        %v718 = vmul.f32 %v716, 1.442695
        %v719 = vpow.pop %v718
        %v720 = vmul.f32 %v717, 1.442695
        %v721 = vpow.pop %v720
        %v722 = vsel %vm689, %v719, 0.0
        %723 = vadd.xlane.f32.xlu0 %v722
        %v724 = vpop.xlane.xlu0 %723
        %v725 = vsel %vm689, %v721, 0.0
        %726 = vadd.xlane.f32.xlu0 %v725
        %v727 = vpop.xlane.xlu0 %726
        %v728 = vrcp.pop %v724
        %v729 = vrcp.pop %v727
        %v730 = vmul.f32 %v719, %v728
        %v731 = vmul.f32 %v721, %v729
        %v732 = vpack.c.bf16 %v731, %v730
        %v733 = vpack.c.bf16 %v685, %v683
        %v735 = vsel %vm689, %v732, 0
        %737 = vmatpush.bf16.msra.mxu0 0
        %738 = vmatpush.bf16.msra.mxu0 0
        %739 = vmatpush.bf16.msra.mxu0 0
        %740 = vmatpush.bf16.msra.mxu0 0
        %741 = vmatpush.bf16.msra.mxu0 0
        %742 = vmatpush.bf16.msra.mxu0 0
        %743 = vmatpush.bf16.msra.mxu0 0
        %744 = vmatpush.bf16.msra.mxu0 %v733
        %745 = vmatmul.bf16.gmra.mxu0 %v735
        %v746 = vpop.f32.mrf.mxu0
        %v747 = vadd.f32 0.0, %v746
        %v748 = vpop.f32.mrf.mxu0
        %v749 = vadd.f32 0.0, %v748
        %750 = vdwg.mxu0
        %v751 = vpack.c.bf16 %v749, %v747
        %v752 = vld [vmem:[%s5] sm:$0xf]
        %v753 = vld [vmem:[%s5 + $0x4] sm:$0xf]
        %s754 = scalar_lea.vmem %s2, 64
        %v755 = vld [vmem:[%s754] sm:$0xf]
        %v756 = vld [vmem:[%s754 + $0x4] sm:$0xf]
        %v757 = vld [vmem:[%s754 + $0x8] sm:$0xf]
        %v758 = vld [vmem:[%s754 + $0xc] sm:$0xf]
        %v759 = vld [vmem:[%s754 + $0x10] sm:$0xf]
        %v760 = vld [vmem:[%s754 + $0x14] sm:$0xf]
        %v761 = vld [vmem:[%s754 + $0x18] sm:$0xf]
        %v762 = vld [vmem:[%s754 + $0x1c] sm:$0xf]
        %v763 = vld [vmem:[%s754 + $0x20] sm:$0xf]
        %v764 = vld [vmem:[%s754 + $0x24] sm:$0xf]
        %v765 = vld [vmem:[%s754 + $0x28] sm:$0xf]
        %v766 = vld [vmem:[%s754 + $0x2c] sm:$0xf]
        %v767 = vld [vmem:[%s754 + $0x30] sm:$0xf]
        %v768 = vld [vmem:[%s754 + $0x34] sm:$0xf]
        %v769 = vld [vmem:[%s754 + $0x38] sm:$0xf]
        %v770 = vld [vmem:[%s754 + $0x3c] sm:$0xf]
        %s771 = scalar_lea.vmem %s6, 1
        %v772 = vld [vmem:[%s771] sm:$0x1]
        %v774 = vperm.slane %v772, 0
        %v792 = vunpack.c.l.b16 %v755
        %v793 = vunpack.c.l.b16 %v756
        %v794 = vunpack.c.l.b16 %v757
        %v795 = vunpack.c.l.b16 %v758
        %v796 = vunpack.c.l.b16 %v759
        %v797 = vunpack.c.l.b16 %v760
        %v798 = vunpack.c.l.b16 %v761
        %v799 = vunpack.c.l.b16 %v762
        %v800 = vunpack.c.l.b16 %v763
        %v801 = vunpack.c.l.b16 %v764
        %v802 = vunpack.c.l.b16 %v765
        %v803 = vunpack.c.l.b16 %v766
        %v804 = vunpack.c.l.b16 %v767
        %v805 = vunpack.c.l.b16 %v768
        %v806 = vunpack.c.l.b16 %v769
        %v807 = vunpack.c.l.b16 %v770
        %v808 = vpack.c.b16 %v793, %v792
        %v809 = vpack.c.b16 %v795, %v794
        %v810 = vpack.c.b16 %v797, %v796
        %v811 = vpack.c.b16 %v799, %v798
        %v812 = vpack.c.b16 %v801, %v800
        %v813 = vpack.c.b16 %v803, %v802
        %v814 = vpack.c.b16 %v805, %v804
        %v815 = vpack.c.b16 %v807, %v806
        %824 = vmatpush.bf16.msra.mxu0 %v815
        %825 = vmatpush.bf16.msra.mxu0 %v814
        %826 = vmatpush.bf16.msra.mxu0 %v813
        %827 = vmatpush.bf16.msra.mxu0 %v812
        %828 = vmatpush.bf16.msra.mxu0 %v811
        %829 = vmatpush.bf16.msra.mxu0 %v810
        %830 = vmatpush.bf16.msra.mxu0 %v809
        %831 = vmatpush.bf16.msra.mxu0 %v808
        %832 = vmatmul.bf16.gmra.mxu0 %v439
        %v833 = vpop.f32.mrf.mxu0
        %v834 = vadd.f32 %v774, %v833
        %v835 = vpop.f32.mrf.mxu0
        %v836 = vadd.f32 %v774, %v835
        %837 = vdwg.mxu0
        %s838 = scalar_lea.vmem %s3, 64
        %v839 = vld [vmem:[%s838] sm:$0xf]
        %v840 = vld [vmem:[%s838 + $0x4] sm:$0xf]
        %v841 = vld [vmem:[%s838 + $0x8] sm:$0xf]
        %v842 = vld [vmem:[%s838 + $0xc] sm:$0xf]
        %v843 = vld [vmem:[%s838 + $0x10] sm:$0xf]
        %v844 = vld [vmem:[%s838 + $0x14] sm:$0xf]
        %v845 = vld [vmem:[%s838 + $0x18] sm:$0xf]
        %v846 = vld [vmem:[%s838 + $0x1c] sm:$0xf]
        %v847 = vld [vmem:[%s838 + $0x20] sm:$0xf]
        %v848 = vld [vmem:[%s838 + $0x24] sm:$0xf]
        %v849 = vld [vmem:[%s838 + $0x28] sm:$0xf]
        %v850 = vld [vmem:[%s838 + $0x2c] sm:$0xf]
        %v851 = vld [vmem:[%s838 + $0x30] sm:$0xf]
        %v852 = vld [vmem:[%s838 + $0x34] sm:$0xf]
        %v853 = vld [vmem:[%s838 + $0x38] sm:$0xf]
        %v854 = vld [vmem:[%s838 + $0x3c] sm:$0xf]
        %s855 = scalar_lea.vmem %s7, 1
        %v856 = vld [vmem:[%s855] sm:$0x1]
        %v858 = vperm.slane %v856, 0
        %v876 = vunpack.c.l.b16 %v839
        %v877 = vunpack.c.l.b16 %v840
        %v878 = vunpack.c.l.b16 %v841
        %v879 = vunpack.c.l.b16 %v842
        %v880 = vunpack.c.l.b16 %v843
        %v881 = vunpack.c.l.b16 %v844
        %v882 = vunpack.c.l.b16 %v845
        %v883 = vunpack.c.l.b16 %v846
        %v884 = vunpack.c.l.b16 %v847
        %v885 = vunpack.c.l.b16 %v848
        %v886 = vunpack.c.l.b16 %v849
        %v887 = vunpack.c.l.b16 %v850
        %v888 = vunpack.c.l.b16 %v851
        %v889 = vunpack.c.l.b16 %v852
        %v890 = vunpack.c.l.b16 %v853
        %v891 = vunpack.c.l.b16 %v854
        %v892 = vpack.c.b16 %v877, %v876
        %v893 = vpack.c.b16 %v879, %v878
        %v894 = vpack.c.b16 %v881, %v880
        %v895 = vpack.c.b16 %v883, %v882
        %v896 = vpack.c.b16 %v885, %v884
        %v897 = vpack.c.b16 %v887, %v886
        %v898 = vpack.c.b16 %v889, %v888
        %v899 = vpack.c.b16 %v891, %v890
        %908 = vmatpush.bf16.msra.mxu0 %v899
        %909 = vmatpush.bf16.msra.mxu0 %v898
        %910 = vmatpush.bf16.msra.mxu0 %v897
        %911 = vmatpush.bf16.msra.mxu0 %v896
        %912 = vmatpush.bf16.msra.mxu0 %v895
        %913 = vmatpush.bf16.msra.mxu0 %v894
        %914 = vmatpush.bf16.msra.mxu0 %v893
        %915 = vmatpush.bf16.msra.mxu0 %v892
        %916 = vmatmul.bf16.gmra.mxu0 %v439
        %v917 = vpop.f32.mrf.mxu0
        %v918 = vadd.f32 %v858, %v917
        %v919 = vpop.f32.mrf.mxu0
        %v920 = vadd.f32 %v858, %v919
        %921 = vdwg.mxu0
        %s922 = scalar_lea.vmem %s4, 64
        %v923 = vld [vmem:[%s922] sm:$0xf]
        %v924 = vld [vmem:[%s922 + $0x4] sm:$0xf]
        %v925 = vld [vmem:[%s922 + $0x8] sm:$0xf]
        %v926 = vld [vmem:[%s922 + $0xc] sm:$0xf]
        %v927 = vld [vmem:[%s922 + $0x10] sm:$0xf]
        %v928 = vld [vmem:[%s922 + $0x14] sm:$0xf]
        %v929 = vld [vmem:[%s922 + $0x18] sm:$0xf]
        %v930 = vld [vmem:[%s922 + $0x1c] sm:$0xf]
        %v931 = vld [vmem:[%s922 + $0x20] sm:$0xf]
        %v932 = vld [vmem:[%s922 + $0x24] sm:$0xf]
        %v933 = vld [vmem:[%s922 + $0x28] sm:$0xf]
        %v934 = vld [vmem:[%s922 + $0x2c] sm:$0xf]
        %v935 = vld [vmem:[%s922 + $0x30] sm:$0xf]
        %v936 = vld [vmem:[%s922 + $0x34] sm:$0xf]
        %v937 = vld [vmem:[%s922 + $0x38] sm:$0xf]
        %v938 = vld [vmem:[%s922 + $0x3c] sm:$0xf]
        %s939 = scalar_lea.vmem %s8, 1
        %v940 = vld [vmem:[%s939] sm:$0x1]
        %v942 = vperm.slane %v940, 0
        %v960 = vunpack.c.l.b16 %v923
        %v961 = vunpack.c.l.b16 %v924
        %v962 = vunpack.c.l.b16 %v925
        %v963 = vunpack.c.l.b16 %v926
        %v964 = vunpack.c.l.b16 %v927
        %v965 = vunpack.c.l.b16 %v928
        %v966 = vunpack.c.l.b16 %v929
        %v967 = vunpack.c.l.b16 %v930
        %v968 = vunpack.c.l.b16 %v931
        %v969 = vunpack.c.l.b16 %v932
        %v970 = vunpack.c.l.b16 %v933
        %v971 = vunpack.c.l.b16 %v934
        %v972 = vunpack.c.l.b16 %v935
        %v973 = vunpack.c.l.b16 %v936
        %v974 = vunpack.c.l.b16 %v937
        %v975 = vunpack.c.l.b16 %v938
        %v976 = vpack.c.b16 %v961, %v960
        %v977 = vpack.c.b16 %v963, %v962
        %v978 = vpack.c.b16 %v965, %v964
        %v979 = vpack.c.b16 %v967, %v966
        %v980 = vpack.c.b16 %v969, %v968
        %v981 = vpack.c.b16 %v971, %v970
        %v982 = vpack.c.b16 %v973, %v972
        %v983 = vpack.c.b16 %v975, %v974
        %992 = vmatpush.bf16.msra.mxu0 %v983
        %993 = vmatpush.bf16.msra.mxu0 %v982
        %994 = vmatpush.bf16.msra.mxu0 %v981
        %995 = vmatpush.bf16.msra.mxu0 %v980
        %996 = vmatpush.bf16.msra.mxu0 %v979
        %997 = vmatpush.bf16.msra.mxu0 %v978
        %998 = vmatpush.bf16.msra.mxu0 %v977
        %999 = vmatpush.bf16.msra.mxu0 %v976
        %1000 = vmatmul.bf16.gmra.mxu0 %v440
        %v1001 = vpop.f32.mrf.mxu0
        %v1002 = vadd.f32 %v942, %v1001
        %v1003 = vpop.f32.mrf.mxu0
        %v1004 = vadd.f32 %v942, %v1003
        %1005 = vdwg.mxu0
        %v1006 = vpack.c.bf16 %v836, %v834
        %v1007 = vpack.c.bf16 %v920, %v918
        %v1009 = vsel %vm689, %v1006, 0
        %v1012 = vsel %vm689, %v1007, 0
        %1014 = vmatpush.bf16.xpose.msra.mxu0 0
        %1015 = vmatpush.bf16.xpose.msra.mxu0 0
        %1016 = vmatpush.bf16.xpose.msra.mxu0 0
        %1017 = vmatpush.bf16.xpose.msra.mxu0 0
        %1018 = vmatpush.bf16.xpose.msra.mxu0 0
        %1019 = vmatpush.bf16.xpose.msra.mxu0 0
        %1020 = vmatpush.bf16.xpose.msra.mxu0 0
        %1021 = vmatpush.bf16.xpose.msra.mxu0 %v1012
        %1022 = vmatmul.bf16.gmra.mxu0 %v1009
        %v1023 = vpop.f32.mrf.mxu0
        %v1024 = vadd.f32 0.0, %v1023
        %v1025 = vpop.f32.mrf.mxu0
        %v1026 = vadd.f32 0.0, %v1025
        %1027 = vdwg.mxu0
        %v1028 = vsel %vm689, %v1024, -inf
        %1029 = vmax.xlane.f32.xlu0 %v1028
        %v1030 = vpop.xlane.xlu0 %1029
        %v1031 = vsel %vm689, %v1026, -inf
        %1032 = vmax.xlane.f32.xlu0 %v1031
        %v1033 = vpop.xlane.xlu0 %1032
        %v1034 = vsub.f32 %v1024, %v1030
        %v1035 = vsub.f32 %v1026, %v1033
        %v1036 = vmul.f32 %v1034, 1.442695
        %v1037 = vpow.pop %v1036
        %v1038 = vmul.f32 %v1035, 1.442695
        %v1039 = vpow.pop %v1038
        %v1040 = vsel %vm689, %v1037, 0.0
        %1041 = vadd.xlane.f32.xlu0 %v1040
        %v1042 = vpop.xlane.xlu0 %1041
        %v1043 = vsel %vm689, %v1039, 0.0
        %1044 = vadd.xlane.f32.xlu0 %v1043
        %v1045 = vpop.xlane.xlu0 %1044
        %v1046 = vrcp.pop %v1042
        %v1047 = vrcp.pop %v1045
        %v1048 = vmul.f32 %v1037, %v1046
        %v1049 = vmul.f32 %v1039, %v1047
        %v1050 = vpack.c.bf16 %v1049, %v1048
        %v1051 = vpack.c.bf16 %v1004, %v1002
        %v1053 = vsel %vm689, %v1050, 0
        %1055 = vmatpush.bf16.msra.mxu0 0
        %1056 = vmatpush.bf16.msra.mxu0 0
        %1057 = vmatpush.bf16.msra.mxu0 0
        %1058 = vmatpush.bf16.msra.mxu0 0
        %1059 = vmatpush.bf16.msra.mxu0 0
        %1060 = vmatpush.bf16.msra.mxu0 0
        %1061 = vmatpush.bf16.msra.mxu0 0
        %1062 = vmatpush.bf16.msra.mxu0 %v1051
        %1063 = vmatmul.bf16.gmra.mxu0 %v1053
        %v1064 = vpop.f32.mrf.mxu0
        %v1065 = vadd.f32 0.0, %v1064
        %v1066 = vpop.f32.mrf.mxu0
        %v1067 = vadd.f32 0.0, %v1066
        %1068 = vdwg.mxu0
        %v1069 = vpack.c.bf16 %v1067, %v1065
        %s1070 = scalar_lea.vmem %s5, 8
        %v1071 = vld [vmem:[%s1070] sm:$0xf]
        %v1072 = vld [vmem:[%s1070 + $0x4] sm:$0xf]
        %v1075 = vunpack.c.l.b16 %v1071
        %v1076 = vunpack.c.l.b16 %v1072
        %v1077 = vpack.c.b16 %v1076, %v1075
        %v1080 = vsel %vm689, %v1069, 0
        %1082 = vmatpush.bf16.msra.mxu0 0
        %1083 = vmatpush.bf16.msra.mxu0 0
        %1084 = vmatpush.bf16.msra.mxu0 0
        %1085 = vmatpush.bf16.msra.mxu0 0
        %1086 = vmatpush.bf16.msra.mxu0 0
        %1087 = vmatpush.bf16.msra.mxu0 0
        %1088 = vmatpush.bf16.msra.mxu0 0
        %1089 = vmatpush.bf16.msra.mxu0 %v1077
        %1090 = vmatmul.bf16.gmra.mxu0 %v1080
        %v1091 = vpop.f32.mrf.mxu0
        %v1092 = vadd.f32 0.0, %v1091
        %v1093 = vpop.f32.mrf.mxu0
        %v1094 = vadd.f32 0.0, %v1093
        %1095 = vdwg.mxu0
        %v1098 = vunpack.c.l.b16 %v752
        %v1099 = vunpack.c.l.b16 %v753
        %v1100 = vpack.c.b16 %v1099, %v1098
        %v1103 = vsel %vm689, %v751, 0
        %1105 = vmatpush.bf16.msra.mxu0 0
        %1106 = vmatpush.bf16.msra.mxu0 0
        %1107 = vmatpush.bf16.msra.mxu0 0
        %1108 = vmatpush.bf16.msra.mxu0 0
        %1109 = vmatpush.bf16.msra.mxu0 0
        %1110 = vmatpush.bf16.msra.mxu0 0
        %1111 = vmatpush.bf16.msra.mxu0 0
        %1112 = vmatpush.bf16.msra.mxu0 %v1100
        %1113 = vmatmul.bf16.gmra.mxu0 %v1103
        %v1114 = vpop.f32.mrf.mxu0
        %v1115 = vadd.f32 %v1092, %v1114
        %v1116 = vpop.f32.mrf.mxu0
        %v1117 = vadd.f32 %v1094, %v1116
        %1118 = vdwg.mxu0
        %s1119 = scalar_lea.vmem %s2, 128
        %v1120 = vld [vmem:[%s1119] sm:$0xf]
        %v1121 = vld [vmem:[%s1119 + $0x4] sm:$0xf]
        %v1122 = vld [vmem:[%s1119 + $0x8] sm:$0xf]
        %v1123 = vld [vmem:[%s1119 + $0xc] sm:$0xf]
        %v1124 = vld [vmem:[%s1119 + $0x10] sm:$0xf]
        %v1125 = vld [vmem:[%s1119 + $0x14] sm:$0xf]
        %v1126 = vld [vmem:[%s1119 + $0x18] sm:$0xf]
        %v1127 = vld [vmem:[%s1119 + $0x1c] sm:$0xf]
        %v1128 = vld [vmem:[%s1119 + $0x20] sm:$0xf]
        %v1129 = vld [vmem:[%s1119 + $0x24] sm:$0xf]
        %v1130 = vld [vmem:[%s1119 + $0x28] sm:$0xf]
        %v1131 = vld [vmem:[%s1119 + $0x2c] sm:$0xf]
        %v1132 = vld [vmem:[%s1119 + $0x30] sm:$0xf]
        %v1133 = vld [vmem:[%s1119 + $0x34] sm:$0xf]
        %v1134 = vld [vmem:[%s1119 + $0x38] sm:$0xf]
        %v1135 = vld [vmem:[%s1119 + $0x3c] sm:$0xf]
        %s1136 = scalar_lea.vmem %s6, 2
        %v1137 = vld [vmem:[%s1136] sm:$0x1]
        %v1139 = vperm.slane %v1137, 0
        %v1157 = vunpack.c.l.b16 %v1120
        %v1158 = vunpack.c.l.b16 %v1121
        %v1159 = vunpack.c.l.b16 %v1122
        %v1160 = vunpack.c.l.b16 %v1123
        %v1161 = vunpack.c.l.b16 %v1124
        %v1162 = vunpack.c.l.b16 %v1125
        %v1163 = vunpack.c.l.b16 %v1126
        %v1164 = vunpack.c.l.b16 %v1127
        %v1165 = vunpack.c.l.b16 %v1128
        %v1166 = vunpack.c.l.b16 %v1129
        %v1167 = vunpack.c.l.b16 %v1130
        %v1168 = vunpack.c.l.b16 %v1131
        %v1169 = vunpack.c.l.b16 %v1132
        %v1170 = vunpack.c.l.b16 %v1133
        %v1171 = vunpack.c.l.b16 %v1134
        %v1172 = vunpack.c.l.b16 %v1135
        %v1173 = vpack.c.b16 %v1158, %v1157
        %v1174 = vpack.c.b16 %v1160, %v1159
        %v1175 = vpack.c.b16 %v1162, %v1161
        %v1176 = vpack.c.b16 %v1164, %v1163
        %v1177 = vpack.c.b16 %v1166, %v1165
        %v1178 = vpack.c.b16 %v1168, %v1167
        %v1179 = vpack.c.b16 %v1170, %v1169
        %v1180 = vpack.c.b16 %v1172, %v1171
        %1189 = vmatpush.bf16.msra.mxu0 %v1180
        %1190 = vmatpush.bf16.msra.mxu0 %v1179
        %1191 = vmatpush.bf16.msra.mxu0 %v1178
        %1192 = vmatpush.bf16.msra.mxu0 %v1177
        %1193 = vmatpush.bf16.msra.mxu0 %v1176
        %1194 = vmatpush.bf16.msra.mxu0 %v1175
        %1195 = vmatpush.bf16.msra.mxu0 %v1174
        %1196 = vmatpush.bf16.msra.mxu0 %v1173
        %1197 = vmatmul.bf16.gmra.mxu0 %v439
        %v1198 = vpop.f32.mrf.mxu0
        %v1199 = vadd.f32 %v1139, %v1198
        %v1200 = vpop.f32.mrf.mxu0
        %v1201 = vadd.f32 %v1139, %v1200
        %1202 = vdwg.mxu0
        %s1203 = scalar_lea.vmem %s3, 128
        %v1204 = vld [vmem:[%s1203] sm:$0xf]
        %v1205 = vld [vmem:[%s1203 + $0x4] sm:$0xf]
        %v1206 = vld [vmem:[%s1203 + $0x8] sm:$0xf]
        %v1207 = vld [vmem:[%s1203 + $0xc] sm:$0xf]
        %v1208 = vld [vmem:[%s1203 + $0x10] sm:$0xf]
        %v1209 = vld [vmem:[%s1203 + $0x14] sm:$0xf]
        %v1210 = vld [vmem:[%s1203 + $0x18] sm:$0xf]
        %v1211 = vld [vmem:[%s1203 + $0x1c] sm:$0xf]
        %v1212 = vld [vmem:[%s1203 + $0x20] sm:$0xf]
        %v1213 = vld [vmem:[%s1203 + $0x24] sm:$0xf]
        %v1214 = vld [vmem:[%s1203 + $0x28] sm:$0xf]
        %v1215 = vld [vmem:[%s1203 + $0x2c] sm:$0xf]
        %v1216 = vld [vmem:[%s1203 + $0x30] sm:$0xf]
        %v1217 = vld [vmem:[%s1203 + $0x34] sm:$0xf]
        %v1218 = vld [vmem:[%s1203 + $0x38] sm:$0xf]
        %v1219 = vld [vmem:[%s1203 + $0x3c] sm:$0xf]
        %s1220 = scalar_lea.vmem %s7, 2
        %v1221 = vld [vmem:[%s1220] sm:$0x1]
        %v1223 = vperm.slane %v1221, 0
        %v1241 = vunpack.c.l.b16 %v1204
        %v1242 = vunpack.c.l.b16 %v1205
        %v1243 = vunpack.c.l.b16 %v1206
        %v1244 = vunpack.c.l.b16 %v1207
        %v1245 = vunpack.c.l.b16 %v1208
        %v1246 = vunpack.c.l.b16 %v1209
        %v1247 = vunpack.c.l.b16 %v1210
        %v1248 = vunpack.c.l.b16 %v1211
        %v1249 = vunpack.c.l.b16 %v1212
        %v1250 = vunpack.c.l.b16 %v1213
        %v1251 = vunpack.c.l.b16 %v1214
        %v1252 = vunpack.c.l.b16 %v1215
        %v1253 = vunpack.c.l.b16 %v1216
        %v1254 = vunpack.c.l.b16 %v1217
        %v1255 = vunpack.c.l.b16 %v1218
        %v1256 = vunpack.c.l.b16 %v1219
        %v1257 = vpack.c.b16 %v1242, %v1241
        %v1258 = vpack.c.b16 %v1244, %v1243
        %v1259 = vpack.c.b16 %v1246, %v1245
        %v1260 = vpack.c.b16 %v1248, %v1247
        %v1261 = vpack.c.b16 %v1250, %v1249
        %v1262 = vpack.c.b16 %v1252, %v1251
        %v1263 = vpack.c.b16 %v1254, %v1253
        %v1264 = vpack.c.b16 %v1256, %v1255
        %1273 = vmatpush.bf16.msra.mxu0 %v1264
        %1274 = vmatpush.bf16.msra.mxu0 %v1263
        %1275 = vmatpush.bf16.msra.mxu0 %v1262
        %1276 = vmatpush.bf16.msra.mxu0 %v1261
        %1277 = vmatpush.bf16.msra.mxu0 %v1260
        %1278 = vmatpush.bf16.msra.mxu0 %v1259
        %1279 = vmatpush.bf16.msra.mxu0 %v1258
        %1280 = vmatpush.bf16.msra.mxu0 %v1257
        %1281 = vmatmul.bf16.gmra.mxu0 %v439
        %v1282 = vpop.f32.mrf.mxu0
        %v1283 = vadd.f32 %v1223, %v1282
        %v1284 = vpop.f32.mrf.mxu0
        %v1285 = vadd.f32 %v1223, %v1284
        %1286 = vdwg.mxu0
        %s1287 = scalar_lea.vmem %s4, 128
        %v1288 = vld [vmem:[%s1287] sm:$0xf]
        %v1289 = vld [vmem:[%s1287 + $0x4] sm:$0xf]
        %v1290 = vld [vmem:[%s1287 + $0x8] sm:$0xf]
        %v1291 = vld [vmem:[%s1287 + $0xc] sm:$0xf]
        %v1292 = vld [vmem:[%s1287 + $0x10] sm:$0xf]
        %v1293 = vld [vmem:[%s1287 + $0x14] sm:$0xf]
        %v1294 = vld [vmem:[%s1287 + $0x18] sm:$0xf]
        %v1295 = vld [vmem:[%s1287 + $0x1c] sm:$0xf]
        %v1296 = vld [vmem:[%s1287 + $0x20] sm:$0xf]
        %v1297 = vld [vmem:[%s1287 + $0x24] sm:$0xf]
        %v1298 = vld [vmem:[%s1287 + $0x28] sm:$0xf]
        %v1299 = vld [vmem:[%s1287 + $0x2c] sm:$0xf]
        %v1300 = vld [vmem:[%s1287 + $0x30] sm:$0xf]
        %v1301 = vld [vmem:[%s1287 + $0x34] sm:$0xf]
        %v1302 = vld [vmem:[%s1287 + $0x38] sm:$0xf]
        %v1303 = vld [vmem:[%s1287 + $0x3c] sm:$0xf]
        %s1304 = scalar_lea.vmem %s8, 2
        %v1305 = vld [vmem:[%s1304] sm:$0x1]
        %v1307 = vperm.slane %v1305, 0
        %v1325 = vunpack.c.l.b16 %v1288
        %v1326 = vunpack.c.l.b16 %v1289
        %v1327 = vunpack.c.l.b16 %v1290
        %v1328 = vunpack.c.l.b16 %v1291
        %v1329 = vunpack.c.l.b16 %v1292
        %v1330 = vunpack.c.l.b16 %v1293
        %v1331 = vunpack.c.l.b16 %v1294
        %v1332 = vunpack.c.l.b16 %v1295
        %v1333 = vunpack.c.l.b16 %v1296
        %v1334 = vunpack.c.l.b16 %v1297
        %v1335 = vunpack.c.l.b16 %v1298
        %v1336 = vunpack.c.l.b16 %v1299
        %v1337 = vunpack.c.l.b16 %v1300
        %v1338 = vunpack.c.l.b16 %v1301
        %v1339 = vunpack.c.l.b16 %v1302
        %v1340 = vunpack.c.l.b16 %v1303
        %v1341 = vpack.c.b16 %v1326, %v1325
        %v1342 = vpack.c.b16 %v1328, %v1327
        %v1343 = vpack.c.b16 %v1330, %v1329
        %v1344 = vpack.c.b16 %v1332, %v1331
        %v1345 = vpack.c.b16 %v1334, %v1333
        %v1346 = vpack.c.b16 %v1336, %v1335
        %v1347 = vpack.c.b16 %v1338, %v1337
        %v1348 = vpack.c.b16 %v1340, %v1339
        %1357 = vmatpush.bf16.msra.mxu0 %v1348
        %1358 = vmatpush.bf16.msra.mxu0 %v1347
        %1359 = vmatpush.bf16.msra.mxu0 %v1346
        %1360 = vmatpush.bf16.msra.mxu0 %v1345
        %1361 = vmatpush.bf16.msra.mxu0 %v1344
        %1362 = vmatpush.bf16.msra.mxu0 %v1343
        %1363 = vmatpush.bf16.msra.mxu0 %v1342
        %1364 = vmatpush.bf16.msra.mxu0 %v1341
        %1365 = vmatmul.bf16.gmra.mxu0 %v440
        %v1366 = vpop.f32.mrf.mxu0
        %v1367 = vadd.f32 %v1307, %v1366
        %v1368 = vpop.f32.mrf.mxu0
        %v1369 = vadd.f32 %v1307, %v1368
        %1370 = vdwg.mxu0
        %v1371 = vpack.c.bf16 %v1201, %v1199
        %v1372 = vpack.c.bf16 %v1285, %v1283
        %v1374 = vsel %vm689, %v1371, 0
        %v1377 = vsel %vm689, %v1372, 0
        %1379 = vmatpush.bf16.xpose.msra.mxu0 0
        %1380 = vmatpush.bf16.xpose.msra.mxu0 0
        %1381 = vmatpush.bf16.xpose.msra.mxu0 0
        %1382 = vmatpush.bf16.xpose.msra.mxu0 0
        %1383 = vmatpush.bf16.xpose.msra.mxu0 0
        %1384 = vmatpush.bf16.xpose.msra.mxu0 0
        %1385 = vmatpush.bf16.xpose.msra.mxu0 0
        %1386 = vmatpush.bf16.xpose.msra.mxu0 %v1377
        %1387 = vmatmul.bf16.gmra.mxu0 %v1374
        %v1388 = vpop.f32.mrf.mxu0
        %v1389 = vadd.f32 0.0, %v1388
        %v1390 = vpop.f32.mrf.mxu0
        %v1391 = vadd.f32 0.0, %v1390
        %1392 = vdwg.mxu0
        %v1393 = vsel %vm689, %v1389, -inf
        %1394 = vmax.xlane.f32.xlu0 %v1393
        %v1395 = vpop.xlane.xlu0 %1394
        %v1396 = vsel %vm689, %v1391, -inf
        %1397 = vmax.xlane.f32.xlu0 %v1396
        %v1398 = vpop.xlane.xlu0 %1397
        %v1399 = vsub.f32 %v1389, %v1395
        %v1400 = vsub.f32 %v1391, %v1398
        %v1401 = vmul.f32 %v1399, 1.442695
        %v1402 = vpow.pop %v1401
        %v1403 = vmul.f32 %v1400, 1.442695
        %v1404 = vpow.pop %v1403
        %v1405 = vsel %vm689, %v1402, 0.0
        %1406 = vadd.xlane.f32.xlu0 %v1405
        %v1407 = vpop.xlane.xlu0 %1406
        %v1408 = vsel %vm689, %v1404, 0.0
        %1409 = vadd.xlane.f32.xlu0 %v1408
        %v1410 = vpop.xlane.xlu0 %1409
        %v1411 = vrcp.pop %v1407
        %v1412 = vrcp.pop %v1410
        %v1413 = vmul.f32 %v1402, %v1411
        %v1414 = vmul.f32 %v1404, %v1412
        %v1415 = vpack.c.bf16 %v1414, %v1413
        %v1416 = vpack.c.bf16 %v1369, %v1367
        %v1418 = vsel %vm689, %v1415, 0
        %1420 = vmatpush.bf16.msra.mxu0 0
        %1421 = vmatpush.bf16.msra.mxu0 0
        %1422 = vmatpush.bf16.msra.mxu0 0
        %1423 = vmatpush.bf16.msra.mxu0 0
        %1424 = vmatpush.bf16.msra.mxu0 0
        %1425 = vmatpush.bf16.msra.mxu0 0
        %1426 = vmatpush.bf16.msra.mxu0 0
        %1427 = vmatpush.bf16.msra.mxu0 %v1416
        %1428 = vmatmul.bf16.gmra.mxu0 %v1418
        %v1429 = vpop.f32.mrf.mxu0
        %v1430 = vadd.f32 0.0, %v1429
        %v1431 = vpop.f32.mrf.mxu0
        %v1432 = vadd.f32 0.0, %v1431
        %1433 = vdwg.mxu0
        %v1434 = vpack.c.bf16 %v1432, %v1430
        %s1435 = scalar_lea.vmem %s5, 16
        %v1436 = vld [vmem:[%s1435] sm:$0xf]
        %v1437 = vld [vmem:[%s1435 + $0x4] sm:$0xf]
        %v1440 = vunpack.c.l.b16 %v1436
        %v1441 = vunpack.c.l.b16 %v1437
        %v1442 = vpack.c.b16 %v1441, %v1440
        %v1445 = vsel %vm689, %v1434, 0
        %1447 = vmatpush.bf16.msra.mxu0 0
        %1448 = vmatpush.bf16.msra.mxu0 0
        %1449 = vmatpush.bf16.msra.mxu0 0
        %1450 = vmatpush.bf16.msra.mxu0 0
        %1451 = vmatpush.bf16.msra.mxu0 0
        %1452 = vmatpush.bf16.msra.mxu0 0
        %1453 = vmatpush.bf16.msra.mxu0 0
        %1454 = vmatpush.bf16.msra.mxu0 %v1442
        %1455 = vmatmul.bf16.gmra.mxu0 %v1445
        %v1456 = vpop.f32.mrf.mxu0
        %v1457 = vadd.f32 0.0, %v1456
        %v1458 = vpop.f32.mrf.mxu0
        %v1459 = vadd.f32 0.0, %v1458
        %1460 = vdwg.mxu0
        %v1461 = vadd.f32 %v1115, %v1457
        %v1462 = vadd.f32 %v1117, %v1459
        %s1463 = scalar_lea.vmem %s2, 192
        %v1464 = vld [vmem:[%s1463] sm:$0xf]
        %v1465 = vld [vmem:[%s1463 + $0x4] sm:$0xf]
        %v1466 = vld [vmem:[%s1463 + $0x8] sm:$0xf]
        %v1467 = vld [vmem:[%s1463 + $0xc] sm:$0xf]
        %v1468 = vld [vmem:[%s1463 + $0x10] sm:$0xf]
        %v1469 = vld [vmem:[%s1463 + $0x14] sm:$0xf]
        %v1470 = vld [vmem:[%s1463 + $0x18] sm:$0xf]
        %v1471 = vld [vmem:[%s1463 + $0x1c] sm:$0xf]
        %v1472 = vld [vmem:[%s1463 + $0x20] sm:$0xf]
        %v1473 = vld [vmem:[%s1463 + $0x24] sm:$0xf]
        %v1474 = vld [vmem:[%s1463 + $0x28] sm:$0xf]
        %v1475 = vld [vmem:[%s1463 + $0x2c] sm:$0xf]
        %v1476 = vld [vmem:[%s1463 + $0x30] sm:$0xf]
        %v1477 = vld [vmem:[%s1463 + $0x34] sm:$0xf]
        %v1478 = vld [vmem:[%s1463 + $0x38] sm:$0xf]
        %v1479 = vld [vmem:[%s1463 + $0x3c] sm:$0xf]
        %s1480 = scalar_lea.vmem %s6, 3
        %v1481 = vld [vmem:[%s1480] sm:$0x1]
        %v1483 = vperm.slane %v1481, 0
        %v1501 = vunpack.c.l.b16 %v1464
        %v1502 = vunpack.c.l.b16 %v1465
        %v1503 = vunpack.c.l.b16 %v1466
        %v1504 = vunpack.c.l.b16 %v1467
        %v1505 = vunpack.c.l.b16 %v1468
        %v1506 = vunpack.c.l.b16 %v1469
        %v1507 = vunpack.c.l.b16 %v1470
        %v1508 = vunpack.c.l.b16 %v1471
        %v1509 = vunpack.c.l.b16 %v1472
        %v1510 = vunpack.c.l.b16 %v1473
        %v1511 = vunpack.c.l.b16 %v1474
        %v1512 = vunpack.c.l.b16 %v1475
        %v1513 = vunpack.c.l.b16 %v1476
        %v1514 = vunpack.c.l.b16 %v1477
        %v1515 = vunpack.c.l.b16 %v1478
        %v1516 = vunpack.c.l.b16 %v1479
        %v1517 = vpack.c.b16 %v1502, %v1501
        %v1518 = vpack.c.b16 %v1504, %v1503
        %v1519 = vpack.c.b16 %v1506, %v1505
        %v1520 = vpack.c.b16 %v1508, %v1507
        %v1521 = vpack.c.b16 %v1510, %v1509
        %v1522 = vpack.c.b16 %v1512, %v1511
        %v1523 = vpack.c.b16 %v1514, %v1513
        %v1524 = vpack.c.b16 %v1516, %v1515
        %1533 = vmatpush.bf16.msra.mxu0 %v1524
        %1534 = vmatpush.bf16.msra.mxu0 %v1523
        %1535 = vmatpush.bf16.msra.mxu0 %v1522
        %1536 = vmatpush.bf16.msra.mxu0 %v1521
        %1537 = vmatpush.bf16.msra.mxu0 %v1520
        %1538 = vmatpush.bf16.msra.mxu0 %v1519
        %1539 = vmatpush.bf16.msra.mxu0 %v1518
        %1540 = vmatpush.bf16.msra.mxu0 %v1517
        %1541 = vmatmul.bf16.gmra.mxu0 %v439
        %v1542 = vpop.f32.mrf.mxu0
        %v1543 = vadd.f32 %v1483, %v1542
        %v1544 = vpop.f32.mrf.mxu0
        %v1545 = vadd.f32 %v1483, %v1544
        %1546 = vdwg.mxu0
        %s1547 = scalar_lea.vmem %s3, 192
        %v1548 = vld [vmem:[%s1547] sm:$0xf]
        %v1549 = vld [vmem:[%s1547 + $0x4] sm:$0xf]
        %v1550 = vld [vmem:[%s1547 + $0x8] sm:$0xf]
        %v1551 = vld [vmem:[%s1547 + $0xc] sm:$0xf]
        %v1552 = vld [vmem:[%s1547 + $0x10] sm:$0xf]
        %v1553 = vld [vmem:[%s1547 + $0x14] sm:$0xf]
        %v1554 = vld [vmem:[%s1547 + $0x18] sm:$0xf]
        %v1555 = vld [vmem:[%s1547 + $0x1c] sm:$0xf]
        %v1556 = vld [vmem:[%s1547 + $0x20] sm:$0xf]
        %v1557 = vld [vmem:[%s1547 + $0x24] sm:$0xf]
        %v1558 = vld [vmem:[%s1547 + $0x28] sm:$0xf]
        %v1559 = vld [vmem:[%s1547 + $0x2c] sm:$0xf]
        %v1560 = vld [vmem:[%s1547 + $0x30] sm:$0xf]
        %v1561 = vld [vmem:[%s1547 + $0x34] sm:$0xf]
        %v1562 = vld [vmem:[%s1547 + $0x38] sm:$0xf]
        %v1563 = vld [vmem:[%s1547 + $0x3c] sm:$0xf]
        %s1564 = scalar_lea.vmem %s7, 3
        %v1565 = vld [vmem:[%s1564] sm:$0x1]
        %v1567 = vperm.slane %v1565, 0
        %v1585 = vunpack.c.l.b16 %v1548
        %v1586 = vunpack.c.l.b16 %v1549
        %v1587 = vunpack.c.l.b16 %v1550
        %v1588 = vunpack.c.l.b16 %v1551
        %v1589 = vunpack.c.l.b16 %v1552
        %v1590 = vunpack.c.l.b16 %v1553
        %v1591 = vunpack.c.l.b16 %v1554
        %v1592 = vunpack.c.l.b16 %v1555
        %v1593 = vunpack.c.l.b16 %v1556
        %v1594 = vunpack.c.l.b16 %v1557
        %v1595 = vunpack.c.l.b16 %v1558
        %v1596 = vunpack.c.l.b16 %v1559
        %v1597 = vunpack.c.l.b16 %v1560
        %v1598 = vunpack.c.l.b16 %v1561
        %v1599 = vunpack.c.l.b16 %v1562
        %v1600 = vunpack.c.l.b16 %v1563
        %v1601 = vpack.c.b16 %v1586, %v1585
        %v1602 = vpack.c.b16 %v1588, %v1587
        %v1603 = vpack.c.b16 %v1590, %v1589
        %v1604 = vpack.c.b16 %v1592, %v1591
        %v1605 = vpack.c.b16 %v1594, %v1593
        %v1606 = vpack.c.b16 %v1596, %v1595
        %v1607 = vpack.c.b16 %v1598, %v1597
        %v1608 = vpack.c.b16 %v1600, %v1599
        %1617 = vmatpush.bf16.msra.mxu0 %v1608
        %1618 = vmatpush.bf16.msra.mxu0 %v1607
        %1619 = vmatpush.bf16.msra.mxu0 %v1606
        %1620 = vmatpush.bf16.msra.mxu0 %v1605
        %1621 = vmatpush.bf16.msra.mxu0 %v1604
        %1622 = vmatpush.bf16.msra.mxu0 %v1603
        %1623 = vmatpush.bf16.msra.mxu0 %v1602
        %1624 = vmatpush.bf16.msra.mxu0 %v1601
        %1625 = vmatmul.bf16.gmra.mxu0 %v439
        %v1626 = vpop.f32.mrf.mxu0
        %v1627 = vadd.f32 %v1567, %v1626
        %v1628 = vpop.f32.mrf.mxu0
        %v1629 = vadd.f32 %v1567, %v1628
        %1630 = vdwg.mxu0
        %s1631 = scalar_lea.vmem %s4, 192
        %v1632 = vld [vmem:[%s1631] sm:$0xf]
        %v1633 = vld [vmem:[%s1631 + $0x4] sm:$0xf]
        %v1634 = vld [vmem:[%s1631 + $0x8] sm:$0xf]
        %v1635 = vld [vmem:[%s1631 + $0xc] sm:$0xf]
        %v1636 = vld [vmem:[%s1631 + $0x10] sm:$0xf]
        %v1637 = vld [vmem:[%s1631 + $0x14] sm:$0xf]
        %v1638 = vld [vmem:[%s1631 + $0x18] sm:$0xf]
        %v1639 = vld [vmem:[%s1631 + $0x1c] sm:$0xf]
        %v1640 = vld [vmem:[%s1631 + $0x20] sm:$0xf]
        %v1641 = vld [vmem:[%s1631 + $0x24] sm:$0xf]
        %v1642 = vld [vmem:[%s1631 + $0x28] sm:$0xf]
        %v1643 = vld [vmem:[%s1631 + $0x2c] sm:$0xf]
        %v1644 = vld [vmem:[%s1631 + $0x30] sm:$0xf]
        %v1645 = vld [vmem:[%s1631 + $0x34] sm:$0xf]
        %v1646 = vld [vmem:[%s1631 + $0x38] sm:$0xf]
        %v1647 = vld [vmem:[%s1631 + $0x3c] sm:$0xf]
        %s1648 = scalar_lea.vmem %s8, 3
        %v1649 = vld [vmem:[%s1648] sm:$0x1]
        %v1651 = vperm.slane %v1649, 0
        %v1669 = vunpack.c.l.b16 %v1632
        %v1670 = vunpack.c.l.b16 %v1633
        %v1671 = vunpack.c.l.b16 %v1634
        %v1672 = vunpack.c.l.b16 %v1635
        %v1673 = vunpack.c.l.b16 %v1636
        %v1674 = vunpack.c.l.b16 %v1637
        %v1675 = vunpack.c.l.b16 %v1638
        %v1676 = vunpack.c.l.b16 %v1639
        %v1677 = vunpack.c.l.b16 %v1640
        %v1678 = vunpack.c.l.b16 %v1641
        %v1679 = vunpack.c.l.b16 %v1642
        %v1680 = vunpack.c.l.b16 %v1643
        %v1681 = vunpack.c.l.b16 %v1644
        %v1682 = vunpack.c.l.b16 %v1645
        %v1683 = vunpack.c.l.b16 %v1646
        %v1684 = vunpack.c.l.b16 %v1647
        %v1685 = vpack.c.b16 %v1670, %v1669
        %v1686 = vpack.c.b16 %v1672, %v1671
        %v1687 = vpack.c.b16 %v1674, %v1673
        %v1688 = vpack.c.b16 %v1676, %v1675
        %v1689 = vpack.c.b16 %v1678, %v1677
        %v1690 = vpack.c.b16 %v1680, %v1679
        %v1691 = vpack.c.b16 %v1682, %v1681
        %v1692 = vpack.c.b16 %v1684, %v1683
        %1701 = vmatpush.bf16.msra.mxu0 %v1692
        %1702 = vmatpush.bf16.msra.mxu0 %v1691
        %1703 = vmatpush.bf16.msra.mxu0 %v1690
        %1704 = vmatpush.bf16.msra.mxu0 %v1689
        %1705 = vmatpush.bf16.msra.mxu0 %v1688
        %1706 = vmatpush.bf16.msra.mxu0 %v1687
        %1707 = vmatpush.bf16.msra.mxu0 %v1686
        %1708 = vmatpush.bf16.msra.mxu0 %v1685
        %1709 = vmatmul.bf16.gmra.mxu0 %v440
        %v1710 = vpop.f32.mrf.mxu0
        %v1711 = vadd.f32 %v1651, %v1710
        %v1712 = vpop.f32.mrf.mxu0
        %v1713 = vadd.f32 %v1651, %v1712
        %1714 = vdwg.mxu0
        %v1715 = vpack.c.bf16 %v1545, %v1543
        %v1716 = vpack.c.bf16 %v1629, %v1627
        %v1718 = vsel %vm689, %v1715, 0
        %v1721 = vsel %vm689, %v1716, 0
        %1723 = vmatpush.bf16.xpose.msra.mxu0 0
        %1724 = vmatpush.bf16.xpose.msra.mxu0 0
        %1725 = vmatpush.bf16.xpose.msra.mxu0 0
        %1726 = vmatpush.bf16.xpose.msra.mxu0 0
        %1727 = vmatpush.bf16.xpose.msra.mxu0 0
        %1728 = vmatpush.bf16.xpose.msra.mxu0 0
        %1729 = vmatpush.bf16.xpose.msra.mxu0 0
        %1730 = vmatpush.bf16.xpose.msra.mxu0 %v1721
        %1731 = vmatmul.bf16.gmra.mxu0 %v1718
        %v1732 = vpop.f32.mrf.mxu0
        %v1733 = vadd.f32 0.0, %v1732
        %v1734 = vpop.f32.mrf.mxu0
        %v1735 = vadd.f32 0.0, %v1734
        %1736 = vdwg.mxu0
        %v1737 = vsel %vm689, %v1733, -inf
        %1738 = vmax.xlane.f32.xlu0 %v1737
        %v1739 = vpop.xlane.xlu0 %1738
        %v1740 = vsel %vm689, %v1735, -inf
        %1741 = vmax.xlane.f32.xlu0 %v1740
        %v1742 = vpop.xlane.xlu0 %1741
        %v1743 = vsub.f32 %v1733, %v1739
        %v1744 = vsub.f32 %v1735, %v1742
        %v1745 = vmul.f32 %v1743, 1.442695
        %v1746 = vpow.pop %v1745
        %v1747 = vmul.f32 %v1744, 1.442695
        %v1748 = vpow.pop %v1747
        %v1749 = vsel %vm689, %v1746, 0.0
        %1750 = vadd.xlane.f32.xlu0 %v1749
        %v1751 = vpop.xlane.xlu0 %1750
        %v1752 = vsel %vm689, %v1748, 0.0
        %1753 = vadd.xlane.f32.xlu0 %v1752
        %v1754 = vpop.xlane.xlu0 %1753
        %v1755 = vrcp.pop %v1751
        %v1756 = vrcp.pop %v1754
        %v1757 = vmul.f32 %v1746, %v1755
        %v1758 = vmul.f32 %v1748, %v1756
        %v1759 = vpack.c.bf16 %v1758, %v1757
        %v1760 = vpack.c.bf16 %v1713, %v1711
        %v1762 = vsel %vm689, %v1759, 0
        %1764 = vmatpush.bf16.msra.mxu0 0
        %1765 = vmatpush.bf16.msra.mxu0 0
        %1766 = vmatpush.bf16.msra.mxu0 0
        %1767 = vmatpush.bf16.msra.mxu0 0
        %1768 = vmatpush.bf16.msra.mxu0 0
        %1769 = vmatpush.bf16.msra.mxu0 0
        %1770 = vmatpush.bf16.msra.mxu0 0
        %1771 = vmatpush.bf16.msra.mxu0 %v1760
        %1772 = vmatmul.bf16.gmra.mxu0 %v1762
        %v1773 = vpop.f32.mrf.mxu0
        %v1774 = vadd.f32 0.0, %v1773
        %v1775 = vpop.f32.mrf.mxu0
        %v1776 = vadd.f32 0.0, %v1775
        %1777 = vdwg.mxu0
        %v1778 = vpack.c.bf16 %v1776, %v1774
        %s1779 = scalar_lea.vmem %s5, 24
        %v1780 = vld [vmem:[%s1779] sm:$0xf]
        %v1781 = vld [vmem:[%s1779 + $0x4] sm:$0xf]
        %v1784 = vunpack.c.l.b16 %v1780
        %v1785 = vunpack.c.l.b16 %v1781
        %v1786 = vpack.c.b16 %v1785, %v1784
        %v1789 = vsel %vm689, %v1778, 0
        %1791 = vmatpush.bf16.msra.mxu0 0
        %1792 = vmatpush.bf16.msra.mxu0 0
        %1793 = vmatpush.bf16.msra.mxu0 0
        %1794 = vmatpush.bf16.msra.mxu0 0
        %1795 = vmatpush.bf16.msra.mxu0 0
        %1796 = vmatpush.bf16.msra.mxu0 0
        %1797 = vmatpush.bf16.msra.mxu0 0
        %1798 = vmatpush.bf16.msra.mxu0 %v1786
        %1799 = vmatmul.bf16.gmra.mxu0 %v1789
        %v1800 = vpop.f32.mrf.mxu0
        %v1801 = vadd.f32 0.0, %v1800
        %v1802 = vpop.f32.mrf.mxu0
        %v1803 = vadd.f32 0.0, %v1802
        %1804 = vdwg.mxu0
        %v1805 = vadd.f32 %v1461, %v1801
        %v1806 = vadd.f32 %v1462, %v1803
        %s1807 = scalar_lea.vmem %s2, 256
        %v1808 = vld [vmem:[%s1807] sm:$0xf]
        %v1809 = vld [vmem:[%s1807 + $0x4] sm:$0xf]
        %v1810 = vld [vmem:[%s1807 + $0x8] sm:$0xf]
        %v1811 = vld [vmem:[%s1807 + $0xc] sm:$0xf]
        %v1812 = vld [vmem:[%s1807 + $0x10] sm:$0xf]
        %v1813 = vld [vmem:[%s1807 + $0x14] sm:$0xf]
        %v1814 = vld [vmem:[%s1807 + $0x18] sm:$0xf]
        %v1815 = vld [vmem:[%s1807 + $0x1c] sm:$0xf]
        %v1816 = vld [vmem:[%s1807 + $0x20] sm:$0xf]
        %v1817 = vld [vmem:[%s1807 + $0x24] sm:$0xf]
        %v1818 = vld [vmem:[%s1807 + $0x28] sm:$0xf]
        %v1819 = vld [vmem:[%s1807 + $0x2c] sm:$0xf]
        %v1820 = vld [vmem:[%s1807 + $0x30] sm:$0xf]
        %v1821 = vld [vmem:[%s1807 + $0x34] sm:$0xf]
        %v1822 = vld [vmem:[%s1807 + $0x38] sm:$0xf]
        %v1823 = vld [vmem:[%s1807 + $0x3c] sm:$0xf]
        %s1824 = scalar_lea.vmem %s6, 4
        %v1825 = vld [vmem:[%s1824] sm:$0x1]
        %v1827 = vperm.slane %v1825, 0
        %v1845 = vunpack.c.l.b16 %v1808
        %v1846 = vunpack.c.l.b16 %v1809
        %v1847 = vunpack.c.l.b16 %v1810
        %v1848 = vunpack.c.l.b16 %v1811
        %v1849 = vunpack.c.l.b16 %v1812
        %v1850 = vunpack.c.l.b16 %v1813
        %v1851 = vunpack.c.l.b16 %v1814
        %v1852 = vunpack.c.l.b16 %v1815
        %v1853 = vunpack.c.l.b16 %v1816
        %v1854 = vunpack.c.l.b16 %v1817
        %v1855 = vunpack.c.l.b16 %v1818
        %v1856 = vunpack.c.l.b16 %v1819
        %v1857 = vunpack.c.l.b16 %v1820
        %v1858 = vunpack.c.l.b16 %v1821
        %v1859 = vunpack.c.l.b16 %v1822
        %v1860 = vunpack.c.l.b16 %v1823
        %v1861 = vpack.c.b16 %v1846, %v1845
        %v1862 = vpack.c.b16 %v1848, %v1847
        %v1863 = vpack.c.b16 %v1850, %v1849
        %v1864 = vpack.c.b16 %v1852, %v1851
        %v1865 = vpack.c.b16 %v1854, %v1853
        %v1866 = vpack.c.b16 %v1856, %v1855
        %v1867 = vpack.c.b16 %v1858, %v1857
        %v1868 = vpack.c.b16 %v1860, %v1859
        %1877 = vmatpush.bf16.msra.mxu0 %v1868
        %1878 = vmatpush.bf16.msra.mxu0 %v1867
        %1879 = vmatpush.bf16.msra.mxu0 %v1866
        %1880 = vmatpush.bf16.msra.mxu0 %v1865
        %1881 = vmatpush.bf16.msra.mxu0 %v1864
        %1882 = vmatpush.bf16.msra.mxu0 %v1863
        %1883 = vmatpush.bf16.msra.mxu0 %v1862
        %1884 = vmatpush.bf16.msra.mxu0 %v1861
        %1885 = vmatmul.bf16.gmra.mxu0 %v439
        %v1886 = vpop.f32.mrf.mxu0
        %v1887 = vadd.f32 %v1827, %v1886
        %v1888 = vpop.f32.mrf.mxu0
        %v1889 = vadd.f32 %v1827, %v1888
        %1890 = vdwg.mxu0
        %s1891 = scalar_lea.vmem %s3, 256
        %v1892 = vld [vmem:[%s1891] sm:$0xf]
        %v1893 = vld [vmem:[%s1891 + $0x4] sm:$0xf]
        %v1894 = vld [vmem:[%s1891 + $0x8] sm:$0xf]
        %v1895 = vld [vmem:[%s1891 + $0xc] sm:$0xf]
        %v1896 = vld [vmem:[%s1891 + $0x10] sm:$0xf]
        %v1897 = vld [vmem:[%s1891 + $0x14] sm:$0xf]
        %v1898 = vld [vmem:[%s1891 + $0x18] sm:$0xf]
        %v1899 = vld [vmem:[%s1891 + $0x1c] sm:$0xf]
        %v1900 = vld [vmem:[%s1891 + $0x20] sm:$0xf]
        %v1901 = vld [vmem:[%s1891 + $0x24] sm:$0xf]
        %v1902 = vld [vmem:[%s1891 + $0x28] sm:$0xf]
        %v1903 = vld [vmem:[%s1891 + $0x2c] sm:$0xf]
        %v1904 = vld [vmem:[%s1891 + $0x30] sm:$0xf]
        %v1905 = vld [vmem:[%s1891 + $0x34] sm:$0xf]
        %v1906 = vld [vmem:[%s1891 + $0x38] sm:$0xf]
        %v1907 = vld [vmem:[%s1891 + $0x3c] sm:$0xf]
        %s1908 = scalar_lea.vmem %s7, 4
        %v1909 = vld [vmem:[%s1908] sm:$0x1]
        %v1911 = vperm.slane %v1909, 0
        %v1929 = vunpack.c.l.b16 %v1892
        %v1930 = vunpack.c.l.b16 %v1893
        %v1931 = vunpack.c.l.b16 %v1894
        %v1932 = vunpack.c.l.b16 %v1895
        %v1933 = vunpack.c.l.b16 %v1896
        %v1934 = vunpack.c.l.b16 %v1897
        %v1935 = vunpack.c.l.b16 %v1898
        %v1936 = vunpack.c.l.b16 %v1899
        %v1937 = vunpack.c.l.b16 %v1900
        %v1938 = vunpack.c.l.b16 %v1901
        %v1939 = vunpack.c.l.b16 %v1902
        %v1940 = vunpack.c.l.b16 %v1903
        %v1941 = vunpack.c.l.b16 %v1904
        %v1942 = vunpack.c.l.b16 %v1905
        %v1943 = vunpack.c.l.b16 %v1906
        %v1944 = vunpack.c.l.b16 %v1907
        %v1945 = vpack.c.b16 %v1930, %v1929
        %v1946 = vpack.c.b16 %v1932, %v1931
        %v1947 = vpack.c.b16 %v1934, %v1933
        %v1948 = vpack.c.b16 %v1936, %v1935
        %v1949 = vpack.c.b16 %v1938, %v1937
        %v1950 = vpack.c.b16 %v1940, %v1939
        %v1951 = vpack.c.b16 %v1942, %v1941
        %v1952 = vpack.c.b16 %v1944, %v1943
        %1961 = vmatpush.bf16.msra.mxu0 %v1952
        %1962 = vmatpush.bf16.msra.mxu0 %v1951
        %1963 = vmatpush.bf16.msra.mxu0 %v1950
        %1964 = vmatpush.bf16.msra.mxu0 %v1949
        %1965 = vmatpush.bf16.msra.mxu0 %v1948
        %1966 = vmatpush.bf16.msra.mxu0 %v1947
        %1967 = vmatpush.bf16.msra.mxu0 %v1946
        %1968 = vmatpush.bf16.msra.mxu0 %v1945
        %1969 = vmatmul.bf16.gmra.mxu0 %v439
        %v1970 = vpop.f32.mrf.mxu0
        %v1971 = vadd.f32 %v1911, %v1970
        %v1972 = vpop.f32.mrf.mxu0
        %v1973 = vadd.f32 %v1911, %v1972
        %1974 = vdwg.mxu0
        %s1975 = scalar_lea.vmem %s4, 256
        %v1976 = vld [vmem:[%s1975] sm:$0xf]
        %v1977 = vld [vmem:[%s1975 + $0x4] sm:$0xf]
        %v1978 = vld [vmem:[%s1975 + $0x8] sm:$0xf]
        %v1979 = vld [vmem:[%s1975 + $0xc] sm:$0xf]
        %v1980 = vld [vmem:[%s1975 + $0x10] sm:$0xf]
        %v1981 = vld [vmem:[%s1975 + $0x14] sm:$0xf]
        %v1982 = vld [vmem:[%s1975 + $0x18] sm:$0xf]
        %v1983 = vld [vmem:[%s1975 + $0x1c] sm:$0xf]
        %v1984 = vld [vmem:[%s1975 + $0x20] sm:$0xf]
        %v1985 = vld [vmem:[%s1975 + $0x24] sm:$0xf]
        %v1986 = vld [vmem:[%s1975 + $0x28] sm:$0xf]
        %v1987 = vld [vmem:[%s1975 + $0x2c] sm:$0xf]
        %v1988 = vld [vmem:[%s1975 + $0x30] sm:$0xf]
        %v1989 = vld [vmem:[%s1975 + $0x34] sm:$0xf]
        %v1990 = vld [vmem:[%s1975 + $0x38] sm:$0xf]
        %v1991 = vld [vmem:[%s1975 + $0x3c] sm:$0xf]
        %s1992 = scalar_lea.vmem %s8, 4
        %v1993 = vld [vmem:[%s1992] sm:$0x1]
        %v1995 = vperm.slane %v1993, 0
        %v2013 = vunpack.c.l.b16 %v1976
        %v2014 = vunpack.c.l.b16 %v1977
        %v2015 = vunpack.c.l.b16 %v1978
        %v2016 = vunpack.c.l.b16 %v1979
        %v2017 = vunpack.c.l.b16 %v1980
        %v2018 = vunpack.c.l.b16 %v1981
        %v2019 = vunpack.c.l.b16 %v1982
        %v2020 = vunpack.c.l.b16 %v1983
        %v2021 = vunpack.c.l.b16 %v1984
        %v2022 = vunpack.c.l.b16 %v1985
        %v2023 = vunpack.c.l.b16 %v1986
        %v2024 = vunpack.c.l.b16 %v1987
        %v2025 = vunpack.c.l.b16 %v1988
        %v2026 = vunpack.c.l.b16 %v1989
        %v2027 = vunpack.c.l.b16 %v1990
        %v2028 = vunpack.c.l.b16 %v1991
        %v2029 = vpack.c.b16 %v2014, %v2013
        %v2030 = vpack.c.b16 %v2016, %v2015
        %v2031 = vpack.c.b16 %v2018, %v2017
        %v2032 = vpack.c.b16 %v2020, %v2019
        %v2033 = vpack.c.b16 %v2022, %v2021
        %v2034 = vpack.c.b16 %v2024, %v2023
        %v2035 = vpack.c.b16 %v2026, %v2025
        %v2036 = vpack.c.b16 %v2028, %v2027
        %2045 = vmatpush.bf16.msra.mxu0 %v2036
        %2046 = vmatpush.bf16.msra.mxu0 %v2035
        %2047 = vmatpush.bf16.msra.mxu0 %v2034
        %2048 = vmatpush.bf16.msra.mxu0 %v2033
        %2049 = vmatpush.bf16.msra.mxu0 %v2032
        %2050 = vmatpush.bf16.msra.mxu0 %v2031
        %2051 = vmatpush.bf16.msra.mxu0 %v2030
        %2052 = vmatpush.bf16.msra.mxu0 %v2029
        %2053 = vmatmul.bf16.gmra.mxu0 %v440
        %v2054 = vpop.f32.mrf.mxu0
        %v2055 = vadd.f32 %v1995, %v2054
        %v2056 = vpop.f32.mrf.mxu0
        %v2057 = vadd.f32 %v1995, %v2056
        %2058 = vdwg.mxu0
        %v2059 = vpack.c.bf16 %v1889, %v1887
        %v2060 = vpack.c.bf16 %v1973, %v1971
        %v2062 = vsel %vm689, %v2059, 0
        %v2065 = vsel %vm689, %v2060, 0
        %2067 = vmatpush.bf16.xpose.msra.mxu0 0
        %2068 = vmatpush.bf16.xpose.msra.mxu0 0
        %2069 = vmatpush.bf16.xpose.msra.mxu0 0
        %2070 = vmatpush.bf16.xpose.msra.mxu0 0
        %2071 = vmatpush.bf16.xpose.msra.mxu0 0
        %2072 = vmatpush.bf16.xpose.msra.mxu0 0
        %2073 = vmatpush.bf16.xpose.msra.mxu0 0
        %2074 = vmatpush.bf16.xpose.msra.mxu0 %v2065
        %2075 = vmatmul.bf16.gmra.mxu0 %v2062
        %v2076 = vpop.f32.mrf.mxu0
        %v2077 = vadd.f32 0.0, %v2076
        %v2078 = vpop.f32.mrf.mxu0
        %v2079 = vadd.f32 0.0, %v2078
        %2080 = vdwg.mxu0
        %v2081 = vsel %vm689, %v2077, -inf
        %2082 = vmax.xlane.f32.xlu0 %v2081
        %v2083 = vpop.xlane.xlu0 %2082
        %v2084 = vsel %vm689, %v2079, -inf
        %2085 = vmax.xlane.f32.xlu0 %v2084
        %v2086 = vpop.xlane.xlu0 %2085
        %v2087 = vsub.f32 %v2077, %v2083
        %v2088 = vsub.f32 %v2079, %v2086
        %v2089 = vmul.f32 %v2087, 1.442695
        %v2090 = vpow.pop %v2089
        %v2091 = vmul.f32 %v2088, 1.442695
        %v2092 = vpow.pop %v2091
        %v2093 = vsel %vm689, %v2090, 0.0
        %2094 = vadd.xlane.f32.xlu0 %v2093
        %v2095 = vpop.xlane.xlu0 %2094
        %v2096 = vsel %vm689, %v2092, 0.0
        %2097 = vadd.xlane.f32.xlu0 %v2096
        %v2098 = vpop.xlane.xlu0 %2097
        %v2099 = vrcp.pop %v2095
        %v2100 = vrcp.pop %v2098
        %v2101 = vmul.f32 %v2090, %v2099
        %v2102 = vmul.f32 %v2092, %v2100
        %v2103 = vpack.c.bf16 %v2102, %v2101
        %v2104 = vpack.c.bf16 %v2057, %v2055
        %v2106 = vsel %vm689, %v2103, 0
        %2108 = vmatpush.bf16.msra.mxu0 0
        %2109 = vmatpush.bf16.msra.mxu0 0
        %2110 = vmatpush.bf16.msra.mxu0 0
        %2111 = vmatpush.bf16.msra.mxu0 0
        %2112 = vmatpush.bf16.msra.mxu0 0
        %2113 = vmatpush.bf16.msra.mxu0 0
        %2114 = vmatpush.bf16.msra.mxu0 0
        %2115 = vmatpush.bf16.msra.mxu0 %v2104
        %2116 = vmatmul.bf16.gmra.mxu0 %v2106
        %v2117 = vpop.f32.mrf.mxu0
        %v2118 = vadd.f32 0.0, %v2117
        %v2119 = vpop.f32.mrf.mxu0
        %v2120 = vadd.f32 0.0, %v2119
        %2121 = vdwg.mxu0
        %v2122 = vpack.c.bf16 %v2120, %v2118
        %s2123 = scalar_lea.vmem %s5, 32
        %v2124 = vld [vmem:[%s2123] sm:$0xf]
        %v2125 = vld [vmem:[%s2123 + $0x4] sm:$0xf]
        %v2128 = vunpack.c.l.b16 %v2124
        %v2129 = vunpack.c.l.b16 %v2125
        %v2130 = vpack.c.b16 %v2129, %v2128
        %v2133 = vsel %vm689, %v2122, 0
        %2135 = vmatpush.bf16.msra.mxu0 0
        %2136 = vmatpush.bf16.msra.mxu0 0
        %2137 = vmatpush.bf16.msra.mxu0 0
        %2138 = vmatpush.bf16.msra.mxu0 0
        %2139 = vmatpush.bf16.msra.mxu0 0
        %2140 = vmatpush.bf16.msra.mxu0 0
        %2141 = vmatpush.bf16.msra.mxu0 0
        %2142 = vmatpush.bf16.msra.mxu0 %v2130
        %2143 = vmatmul.bf16.gmra.mxu0 %v2133
        %v2144 = vpop.f32.mrf.mxu0
        %v2145 = vadd.f32 0.0, %v2144
        %v2146 = vpop.f32.mrf.mxu0
        %v2147 = vadd.f32 0.0, %v2146
        %2148 = vdwg.mxu0
        %v2149 = vadd.f32 %v1805, %v2145
        %v2150 = vadd.f32 %v1806, %v2147
        %s2151 = scalar_lea.vmem %s2, 320
        %v2152 = vld [vmem:[%s2151] sm:$0xf]
        %v2153 = vld [vmem:[%s2151 + $0x4] sm:$0xf]
        %v2154 = vld [vmem:[%s2151 + $0x8] sm:$0xf]
        %v2155 = vld [vmem:[%s2151 + $0xc] sm:$0xf]
        %v2156 = vld [vmem:[%s2151 + $0x10] sm:$0xf]
        %v2157 = vld [vmem:[%s2151 + $0x14] sm:$0xf]
        %v2158 = vld [vmem:[%s2151 + $0x18] sm:$0xf]
        %v2159 = vld [vmem:[%s2151 + $0x1c] sm:$0xf]
        %v2160 = vld [vmem:[%s2151 + $0x20] sm:$0xf]
        %v2161 = vld [vmem:[%s2151 + $0x24] sm:$0xf]
        %v2162 = vld [vmem:[%s2151 + $0x28] sm:$0xf]
        %v2163 = vld [vmem:[%s2151 + $0x2c] sm:$0xf]
        %v2164 = vld [vmem:[%s2151 + $0x30] sm:$0xf]
        %v2165 = vld [vmem:[%s2151 + $0x34] sm:$0xf]
        %v2166 = vld [vmem:[%s2151 + $0x38] sm:$0xf]
        %v2167 = vld [vmem:[%s2151 + $0x3c] sm:$0xf]
        %s2168 = scalar_lea.vmem %s6, 5
        %v2169 = vld [vmem:[%s2168] sm:$0x1]
        %v2171 = vperm.slane %v2169, 0
        %v2189 = vunpack.c.l.b16 %v2152
        %v2190 = vunpack.c.l.b16 %v2153
        %v2191 = vunpack.c.l.b16 %v2154
        %v2192 = vunpack.c.l.b16 %v2155
        %v2193 = vunpack.c.l.b16 %v2156
        %v2194 = vunpack.c.l.b16 %v2157
        %v2195 = vunpack.c.l.b16 %v2158
        %v2196 = vunpack.c.l.b16 %v2159
        %v2197 = vunpack.c.l.b16 %v2160
        %v2198 = vunpack.c.l.b16 %v2161
        %v2199 = vunpack.c.l.b16 %v2162
        %v2200 = vunpack.c.l.b16 %v2163
        %v2201 = vunpack.c.l.b16 %v2164
        %v2202 = vunpack.c.l.b16 %v2165
        %v2203 = vunpack.c.l.b16 %v2166
        %v2204 = vunpack.c.l.b16 %v2167
        %v2205 = vpack.c.b16 %v2190, %v2189
        %v2206 = vpack.c.b16 %v2192, %v2191
        %v2207 = vpack.c.b16 %v2194, %v2193
        %v2208 = vpack.c.b16 %v2196, %v2195
        %v2209 = vpack.c.b16 %v2198, %v2197
        %v2210 = vpack.c.b16 %v2200, %v2199
        %v2211 = vpack.c.b16 %v2202, %v2201
        %v2212 = vpack.c.b16 %v2204, %v2203
        %2221 = vmatpush.bf16.msra.mxu0 %v2212
        %2222 = vmatpush.bf16.msra.mxu0 %v2211
        %2223 = vmatpush.bf16.msra.mxu0 %v2210
        %2224 = vmatpush.bf16.msra.mxu0 %v2209
        %2225 = vmatpush.bf16.msra.mxu0 %v2208
        %2226 = vmatpush.bf16.msra.mxu0 %v2207
        %2227 = vmatpush.bf16.msra.mxu0 %v2206
        %2228 = vmatpush.bf16.msra.mxu0 %v2205
        %2229 = vmatmul.bf16.gmra.mxu0 %v439
        %v2230 = vpop.f32.mrf.mxu0
        %v2231 = vadd.f32 %v2171, %v2230
        %v2232 = vpop.f32.mrf.mxu0
        %v2233 = vadd.f32 %v2171, %v2232
        %2234 = vdwg.mxu0
        %s2235 = scalar_lea.vmem %s3, 320
        %v2236 = vld [vmem:[%s2235] sm:$0xf]
        %v2237 = vld [vmem:[%s2235 + $0x4] sm:$0xf]
        %v2238 = vld [vmem:[%s2235 + $0x8] sm:$0xf]
        %v2239 = vld [vmem:[%s2235 + $0xc] sm:$0xf]
        %v2240 = vld [vmem:[%s2235 + $0x10] sm:$0xf]
        %v2241 = vld [vmem:[%s2235 + $0x14] sm:$0xf]
        %v2242 = vld [vmem:[%s2235 + $0x18] sm:$0xf]
        %v2243 = vld [vmem:[%s2235 + $0x1c] sm:$0xf]
        %v2244 = vld [vmem:[%s2235 + $0x20] sm:$0xf]
        %v2245 = vld [vmem:[%s2235 + $0x24] sm:$0xf]
        %v2246 = vld [vmem:[%s2235 + $0x28] sm:$0xf]
        %v2247 = vld [vmem:[%s2235 + $0x2c] sm:$0xf]
        %v2248 = vld [vmem:[%s2235 + $0x30] sm:$0xf]
        %v2249 = vld [vmem:[%s2235 + $0x34] sm:$0xf]
        %v2250 = vld [vmem:[%s2235 + $0x38] sm:$0xf]
        %v2251 = vld [vmem:[%s2235 + $0x3c] sm:$0xf]
        %s2252 = scalar_lea.vmem %s7, 5
        %v2253 = vld [vmem:[%s2252] sm:$0x1]
        %v2255 = vperm.slane %v2253, 0
        %v2273 = vunpack.c.l.b16 %v2236
        %v2274 = vunpack.c.l.b16 %v2237
        %v2275 = vunpack.c.l.b16 %v2238
        %v2276 = vunpack.c.l.b16 %v2239
        %v2277 = vunpack.c.l.b16 %v2240
        %v2278 = vunpack.c.l.b16 %v2241
        %v2279 = vunpack.c.l.b16 %v2242
        %v2280 = vunpack.c.l.b16 %v2243
        %v2281 = vunpack.c.l.b16 %v2244
        %v2282 = vunpack.c.l.b16 %v2245
        %v2283 = vunpack.c.l.b16 %v2246
        %v2284 = vunpack.c.l.b16 %v2247
        %v2285 = vunpack.c.l.b16 %v2248
        %v2286 = vunpack.c.l.b16 %v2249
        %v2287 = vunpack.c.l.b16 %v2250
        %v2288 = vunpack.c.l.b16 %v2251
        %v2289 = vpack.c.b16 %v2274, %v2273
        %v2290 = vpack.c.b16 %v2276, %v2275
        %v2291 = vpack.c.b16 %v2278, %v2277
        %v2292 = vpack.c.b16 %v2280, %v2279
        %v2293 = vpack.c.b16 %v2282, %v2281
        %v2294 = vpack.c.b16 %v2284, %v2283
        %v2295 = vpack.c.b16 %v2286, %v2285
        %v2296 = vpack.c.b16 %v2288, %v2287
        %2305 = vmatpush.bf16.msra.mxu0 %v2296
        %2306 = vmatpush.bf16.msra.mxu0 %v2295
        %2307 = vmatpush.bf16.msra.mxu0 %v2294
        %2308 = vmatpush.bf16.msra.mxu0 %v2293
        %2309 = vmatpush.bf16.msra.mxu0 %v2292
        %2310 = vmatpush.bf16.msra.mxu0 %v2291
        %2311 = vmatpush.bf16.msra.mxu0 %v2290
        %2312 = vmatpush.bf16.msra.mxu0 %v2289
        %2313 = vmatmul.bf16.gmra.mxu0 %v439
        %v2314 = vpop.f32.mrf.mxu0
        %v2315 = vadd.f32 %v2255, %v2314
        %v2316 = vpop.f32.mrf.mxu0
        %v2317 = vadd.f32 %v2255, %v2316
        %2318 = vdwg.mxu0
        %s2319 = scalar_lea.vmem %s4, 320
        %v2320 = vld [vmem:[%s2319] sm:$0xf]
        %v2321 = vld [vmem:[%s2319 + $0x4] sm:$0xf]
        %v2322 = vld [vmem:[%s2319 + $0x8] sm:$0xf]
        %v2323 = vld [vmem:[%s2319 + $0xc] sm:$0xf]
        %v2324 = vld [vmem:[%s2319 + $0x10] sm:$0xf]
        %v2325 = vld [vmem:[%s2319 + $0x14] sm:$0xf]
        %v2326 = vld [vmem:[%s2319 + $0x18] sm:$0xf]
        %v2327 = vld [vmem:[%s2319 + $0x1c] sm:$0xf]
        %v2328 = vld [vmem:[%s2319 + $0x20] sm:$0xf]
        %v2329 = vld [vmem:[%s2319 + $0x24] sm:$0xf]
        %v2330 = vld [vmem:[%s2319 + $0x28] sm:$0xf]
        %v2331 = vld [vmem:[%s2319 + $0x2c] sm:$0xf]
        %v2332 = vld [vmem:[%s2319 + $0x30] sm:$0xf]
        %v2333 = vld [vmem:[%s2319 + $0x34] sm:$0xf]
        %v2334 = vld [vmem:[%s2319 + $0x38] sm:$0xf]
        %v2335 = vld [vmem:[%s2319 + $0x3c] sm:$0xf]
        %s2336 = scalar_lea.vmem %s8, 5
        %v2337 = vld [vmem:[%s2336] sm:$0x1]
        %v2339 = vperm.slane %v2337, 0
        %v2357 = vunpack.c.l.b16 %v2320
        %v2358 = vunpack.c.l.b16 %v2321
        %v2359 = vunpack.c.l.b16 %v2322
        %v2360 = vunpack.c.l.b16 %v2323
        %v2361 = vunpack.c.l.b16 %v2324
        %v2362 = vunpack.c.l.b16 %v2325
        %v2363 = vunpack.c.l.b16 %v2326
        %v2364 = vunpack.c.l.b16 %v2327
        %v2365 = vunpack.c.l.b16 %v2328
        %v2366 = vunpack.c.l.b16 %v2329
        %v2367 = vunpack.c.l.b16 %v2330
        %v2368 = vunpack.c.l.b16 %v2331
        %v2369 = vunpack.c.l.b16 %v2332
        %v2370 = vunpack.c.l.b16 %v2333
        %v2371 = vunpack.c.l.b16 %v2334
        %v2372 = vunpack.c.l.b16 %v2335
        %v2373 = vpack.c.b16 %v2358, %v2357
        %v2374 = vpack.c.b16 %v2360, %v2359
        %v2375 = vpack.c.b16 %v2362, %v2361
        %v2376 = vpack.c.b16 %v2364, %v2363
        %v2377 = vpack.c.b16 %v2366, %v2365
        %v2378 = vpack.c.b16 %v2368, %v2367
        %v2379 = vpack.c.b16 %v2370, %v2369
        %v2380 = vpack.c.b16 %v2372, %v2371
        %2389 = vmatpush.bf16.msra.mxu0 %v2380
        %2390 = vmatpush.bf16.msra.mxu0 %v2379
        %2391 = vmatpush.bf16.msra.mxu0 %v2378
        %2392 = vmatpush.bf16.msra.mxu0 %v2377
        %2393 = vmatpush.bf16.msra.mxu0 %v2376
        %2394 = vmatpush.bf16.msra.mxu0 %v2375
        %2395 = vmatpush.bf16.msra.mxu0 %v2374
        %2396 = vmatpush.bf16.msra.mxu0 %v2373
        %2397 = vmatmul.bf16.gmra.mxu0 %v440
        %v2398 = vpop.f32.mrf.mxu0
        %v2399 = vadd.f32 %v2339, %v2398
        %v2400 = vpop.f32.mrf.mxu0
        %v2401 = vadd.f32 %v2339, %v2400
        %2402 = vdwg.mxu0
        %v2403 = vpack.c.bf16 %v2233, %v2231
        %v2404 = vpack.c.bf16 %v2317, %v2315
        %v2406 = vsel %vm689, %v2403, 0
        %v2409 = vsel %vm689, %v2404, 0
        %2411 = vmatpush.bf16.xpose.msra.mxu0 0
        %2412 = vmatpush.bf16.xpose.msra.mxu0 0
        %2413 = vmatpush.bf16.xpose.msra.mxu0 0
        %2414 = vmatpush.bf16.xpose.msra.mxu0 0
        %2415 = vmatpush.bf16.xpose.msra.mxu0 0
        %2416 = vmatpush.bf16.xpose.msra.mxu0 0
        %2417 = vmatpush.bf16.xpose.msra.mxu0 0
        %2418 = vmatpush.bf16.xpose.msra.mxu0 %v2409
        %2419 = vmatmul.bf16.gmra.mxu0 %v2406
        %v2420 = vpop.f32.mrf.mxu0
        %v2421 = vadd.f32 0.0, %v2420
        %v2422 = vpop.f32.mrf.mxu0
        %v2423 = vadd.f32 0.0, %v2422
        %2424 = vdwg.mxu0
        %v2425 = vsel %vm689, %v2421, -inf
        %2426 = vmax.xlane.f32.xlu0 %v2425
        %v2427 = vpop.xlane.xlu0 %2426
        %v2428 = vsel %vm689, %v2423, -inf
        %2429 = vmax.xlane.f32.xlu0 %v2428
        %v2430 = vpop.xlane.xlu0 %2429
        %v2431 = vsub.f32 %v2421, %v2427
        %v2432 = vsub.f32 %v2423, %v2430
        %v2433 = vmul.f32 %v2431, 1.442695
        %v2434 = vpow.pop %v2433
        %v2435 = vmul.f32 %v2432, 1.442695
        %v2436 = vpow.pop %v2435
        %v2437 = vsel %vm689, %v2434, 0.0
        %2438 = vadd.xlane.f32.xlu0 %v2437
        %v2439 = vpop.xlane.xlu0 %2438
        %v2440 = vsel %vm689, %v2436, 0.0
        %2441 = vadd.xlane.f32.xlu0 %v2440
        %v2442 = vpop.xlane.xlu0 %2441
        %v2443 = vrcp.pop %v2439
        %v2444 = vrcp.pop %v2442
        %v2445 = vmul.f32 %v2434, %v2443
        %v2446 = vmul.f32 %v2436, %v2444
        %v2447 = vpack.c.bf16 %v2446, %v2445
        %v2448 = vpack.c.bf16 %v2401, %v2399
        %v2450 = vsel %vm689, %v2447, 0
        %2452 = vmatpush.bf16.msra.mxu0 0
        %2453 = vmatpush.bf16.msra.mxu0 0
        %2454 = vmatpush.bf16.msra.mxu0 0
        %2455 = vmatpush.bf16.msra.mxu0 0
        %2456 = vmatpush.bf16.msra.mxu0 0
        %2457 = vmatpush.bf16.msra.mxu0 0
        %2458 = vmatpush.bf16.msra.mxu0 0
        %2459 = vmatpush.bf16.msra.mxu0 %v2448
        %2460 = vmatmul.bf16.gmra.mxu0 %v2450
        %v2461 = vpop.f32.mrf.mxu0
        %v2462 = vadd.f32 0.0, %v2461
        %v2463 = vpop.f32.mrf.mxu0
        %v2464 = vadd.f32 0.0, %v2463
        %2465 = vdwg.mxu0
        %v2466 = vpack.c.bf16 %v2464, %v2462
        %s2467 = scalar_lea.vmem %s5, 40
        %v2468 = vld [vmem:[%s2467] sm:$0xf]
        %v2469 = vld [vmem:[%s2467 + $0x4] sm:$0xf]
        %v2472 = vunpack.c.l.b16 %v2468
        %v2473 = vunpack.c.l.b16 %v2469
        %v2474 = vpack.c.b16 %v2473, %v2472
        %v2477 = vsel %vm689, %v2466, 0
        %2479 = vmatpush.bf16.msra.mxu0 0
        %2480 = vmatpush.bf16.msra.mxu0 0
        %2481 = vmatpush.bf16.msra.mxu0 0
        %2482 = vmatpush.bf16.msra.mxu0 0
        %2483 = vmatpush.bf16.msra.mxu0 0
        %2484 = vmatpush.bf16.msra.mxu0 0
        %2485 = vmatpush.bf16.msra.mxu0 0
        %2486 = vmatpush.bf16.msra.mxu0 %v2474
        %2487 = vmatmul.bf16.gmra.mxu0 %v2477
        %v2488 = vpop.f32.mrf.mxu0
        %v2489 = vadd.f32 0.0, %v2488
        %v2490 = vpop.f32.mrf.mxu0
        %v2491 = vadd.f32 0.0, %v2490
        %2492 = vdwg.mxu0
        %v2493 = vadd.f32 %v2149, %v2489
        %v2494 = vadd.f32 %v2150, %v2491
        %s2495 = scalar_lea.vmem %s2, 384
        %v2496 = vld [vmem:[%s2495] sm:$0xf]
        %v2497 = vld [vmem:[%s2495 + $0x4] sm:$0xf]
        %v2498 = vld [vmem:[%s2495 + $0x8] sm:$0xf]
        %v2499 = vld [vmem:[%s2495 + $0xc] sm:$0xf]
        %v2500 = vld [vmem:[%s2495 + $0x10] sm:$0xf]
        %v2501 = vld [vmem:[%s2495 + $0x14] sm:$0xf]
        %v2502 = vld [vmem:[%s2495 + $0x18] sm:$0xf]
        %v2503 = vld [vmem:[%s2495 + $0x1c] sm:$0xf]
        %v2504 = vld [vmem:[%s2495 + $0x20] sm:$0xf]
        %v2505 = vld [vmem:[%s2495 + $0x24] sm:$0xf]
        %v2506 = vld [vmem:[%s2495 + $0x28] sm:$0xf]
        %v2507 = vld [vmem:[%s2495 + $0x2c] sm:$0xf]
        %v2508 = vld [vmem:[%s2495 + $0x30] sm:$0xf]
        %v2509 = vld [vmem:[%s2495 + $0x34] sm:$0xf]
        %v2510 = vld [vmem:[%s2495 + $0x38] sm:$0xf]
        %v2511 = vld [vmem:[%s2495 + $0x3c] sm:$0xf]
        %s2512 = scalar_lea.vmem %s6, 6
        %v2513 = vld [vmem:[%s2512] sm:$0x1]
        %v2515 = vperm.slane %v2513, 0
        %v2533 = vunpack.c.l.b16 %v2496
        %v2534 = vunpack.c.l.b16 %v2497
        %v2535 = vunpack.c.l.b16 %v2498
        %v2536 = vunpack.c.l.b16 %v2499
        %v2537 = vunpack.c.l.b16 %v2500
        %v2538 = vunpack.c.l.b16 %v2501
        %v2539 = vunpack.c.l.b16 %v2502
        %v2540 = vunpack.c.l.b16 %v2503
        %v2541 = vunpack.c.l.b16 %v2504
        %v2542 = vunpack.c.l.b16 %v2505
        %v2543 = vunpack.c.l.b16 %v2506
        %v2544 = vunpack.c.l.b16 %v2507
        %v2545 = vunpack.c.l.b16 %v2508
        %v2546 = vunpack.c.l.b16 %v2509
        %v2547 = vunpack.c.l.b16 %v2510
        %v2548 = vunpack.c.l.b16 %v2511
        %v2549 = vpack.c.b16 %v2534, %v2533
        %v2550 = vpack.c.b16 %v2536, %v2535
        %v2551 = vpack.c.b16 %v2538, %v2537
        %v2552 = vpack.c.b16 %v2540, %v2539
        %v2553 = vpack.c.b16 %v2542, %v2541
        %v2554 = vpack.c.b16 %v2544, %v2543
        %v2555 = vpack.c.b16 %v2546, %v2545
        %v2556 = vpack.c.b16 %v2548, %v2547
        %2565 = vmatpush.bf16.msra.mxu0 %v2556
        %2566 = vmatpush.bf16.msra.mxu0 %v2555
        %2567 = vmatpush.bf16.msra.mxu0 %v2554
        %2568 = vmatpush.bf16.msra.mxu0 %v2553
        %2569 = vmatpush.bf16.msra.mxu0 %v2552
        %2570 = vmatpush.bf16.msra.mxu0 %v2551
        %2571 = vmatpush.bf16.msra.mxu0 %v2550
        %2572 = vmatpush.bf16.msra.mxu0 %v2549
        %2573 = vmatmul.bf16.gmra.mxu0 %v439
        %v2574 = vpop.f32.mrf.mxu0
        %v2575 = vadd.f32 %v2515, %v2574
        %v2576 = vpop.f32.mrf.mxu0
        %v2577 = vadd.f32 %v2515, %v2576
        %2578 = vdwg.mxu0
        %s2579 = scalar_lea.vmem %s3, 384
        %v2580 = vld [vmem:[%s2579] sm:$0xf]
        %v2581 = vld [vmem:[%s2579 + $0x4] sm:$0xf]
        %v2582 = vld [vmem:[%s2579 + $0x8] sm:$0xf]
        %v2583 = vld [vmem:[%s2579 + $0xc] sm:$0xf]
        %v2584 = vld [vmem:[%s2579 + $0x10] sm:$0xf]
        %v2585 = vld [vmem:[%s2579 + $0x14] sm:$0xf]
        %v2586 = vld [vmem:[%s2579 + $0x18] sm:$0xf]
        %v2587 = vld [vmem:[%s2579 + $0x1c] sm:$0xf]
        %v2588 = vld [vmem:[%s2579 + $0x20] sm:$0xf]
        %v2589 = vld [vmem:[%s2579 + $0x24] sm:$0xf]
        %v2590 = vld [vmem:[%s2579 + $0x28] sm:$0xf]
        %v2591 = vld [vmem:[%s2579 + $0x2c] sm:$0xf]
        %v2592 = vld [vmem:[%s2579 + $0x30] sm:$0xf]
        %v2593 = vld [vmem:[%s2579 + $0x34] sm:$0xf]
        %v2594 = vld [vmem:[%s2579 + $0x38] sm:$0xf]
        %v2595 = vld [vmem:[%s2579 + $0x3c] sm:$0xf]
        %s2596 = scalar_lea.vmem %s7, 6
        %v2597 = vld [vmem:[%s2596] sm:$0x1]
        %v2599 = vperm.slane %v2597, 0
        %v2617 = vunpack.c.l.b16 %v2580
        %v2618 = vunpack.c.l.b16 %v2581
        %v2619 = vunpack.c.l.b16 %v2582
        %v2620 = vunpack.c.l.b16 %v2583
        %v2621 = vunpack.c.l.b16 %v2584
        %v2622 = vunpack.c.l.b16 %v2585
        %v2623 = vunpack.c.l.b16 %v2586
        %v2624 = vunpack.c.l.b16 %v2587
        %v2625 = vunpack.c.l.b16 %v2588
        %v2626 = vunpack.c.l.b16 %v2589
        %v2627 = vunpack.c.l.b16 %v2590
        %v2628 = vunpack.c.l.b16 %v2591
        %v2629 = vunpack.c.l.b16 %v2592
        %v2630 = vunpack.c.l.b16 %v2593
        %v2631 = vunpack.c.l.b16 %v2594
        %v2632 = vunpack.c.l.b16 %v2595
        %v2633 = vpack.c.b16 %v2618, %v2617
        %v2634 = vpack.c.b16 %v2620, %v2619
        %v2635 = vpack.c.b16 %v2622, %v2621
        %v2636 = vpack.c.b16 %v2624, %v2623
        %v2637 = vpack.c.b16 %v2626, %v2625
        %v2638 = vpack.c.b16 %v2628, %v2627
        %v2639 = vpack.c.b16 %v2630, %v2629
        %v2640 = vpack.c.b16 %v2632, %v2631
        %2649 = vmatpush.bf16.msra.mxu0 %v2640
        %2650 = vmatpush.bf16.msra.mxu0 %v2639
        %2651 = vmatpush.bf16.msra.mxu0 %v2638
        %2652 = vmatpush.bf16.msra.mxu0 %v2637
        %2653 = vmatpush.bf16.msra.mxu0 %v2636
        %2654 = vmatpush.bf16.msra.mxu0 %v2635
        %2655 = vmatpush.bf16.msra.mxu0 %v2634
        %2656 = vmatpush.bf16.msra.mxu0 %v2633
        %2657 = vmatmul.bf16.gmra.mxu0 %v439
        %v2658 = vpop.f32.mrf.mxu0
        %v2659 = vadd.f32 %v2599, %v2658
        %v2660 = vpop.f32.mrf.mxu0
        %v2661 = vadd.f32 %v2599, %v2660
        %2662 = vdwg.mxu0
        %s2663 = scalar_lea.vmem %s4, 384
        %v2664 = vld [vmem:[%s2663] sm:$0xf]
        %v2665 = vld [vmem:[%s2663 + $0x4] sm:$0xf]
        %v2666 = vld [vmem:[%s2663 + $0x8] sm:$0xf]
        %v2667 = vld [vmem:[%s2663 + $0xc] sm:$0xf]
        %v2668 = vld [vmem:[%s2663 + $0x10] sm:$0xf]
        %v2669 = vld [vmem:[%s2663 + $0x14] sm:$0xf]
        %v2670 = vld [vmem:[%s2663 + $0x18] sm:$0xf]
        %v2671 = vld [vmem:[%s2663 + $0x1c] sm:$0xf]
        %v2672 = vld [vmem:[%s2663 + $0x20] sm:$0xf]
        %v2673 = vld [vmem:[%s2663 + $0x24] sm:$0xf]
        %v2674 = vld [vmem:[%s2663 + $0x28] sm:$0xf]
        %v2675 = vld [vmem:[%s2663 + $0x2c] sm:$0xf]
        %v2676 = vld [vmem:[%s2663 + $0x30] sm:$0xf]
        %v2677 = vld [vmem:[%s2663 + $0x34] sm:$0xf]
        %v2678 = vld [vmem:[%s2663 + $0x38] sm:$0xf]
        %v2679 = vld [vmem:[%s2663 + $0x3c] sm:$0xf]
        %s2680 = scalar_lea.vmem %s8, 6
        %v2681 = vld [vmem:[%s2680] sm:$0x1]
        %v2683 = vperm.slane %v2681, 0
        %v2701 = vunpack.c.l.b16 %v2664
        %v2702 = vunpack.c.l.b16 %v2665
        %v2703 = vunpack.c.l.b16 %v2666
        %v2704 = vunpack.c.l.b16 %v2667
        %v2705 = vunpack.c.l.b16 %v2668
        %v2706 = vunpack.c.l.b16 %v2669
        %v2707 = vunpack.c.l.b16 %v2670
        %v2708 = vunpack.c.l.b16 %v2671
        %v2709 = vunpack.c.l.b16 %v2672
        %v2710 = vunpack.c.l.b16 %v2673
        %v2711 = vunpack.c.l.b16 %v2674
        %v2712 = vunpack.c.l.b16 %v2675
        %v2713 = vunpack.c.l.b16 %v2676
        %v2714 = vunpack.c.l.b16 %v2677
        %v2715 = vunpack.c.l.b16 %v2678
        %v2716 = vunpack.c.l.b16 %v2679
        %v2717 = vpack.c.b16 %v2702, %v2701
        %v2718 = vpack.c.b16 %v2704, %v2703
        %v2719 = vpack.c.b16 %v2706, %v2705
        %v2720 = vpack.c.b16 %v2708, %v2707
        %v2721 = vpack.c.b16 %v2710, %v2709
        %v2722 = vpack.c.b16 %v2712, %v2711
        %v2723 = vpack.c.b16 %v2714, %v2713
        %v2724 = vpack.c.b16 %v2716, %v2715
        %2733 = vmatpush.bf16.msra.mxu0 %v2724
        %2734 = vmatpush.bf16.msra.mxu0 %v2723
        %2735 = vmatpush.bf16.msra.mxu0 %v2722
        %2736 = vmatpush.bf16.msra.mxu0 %v2721
        %2737 = vmatpush.bf16.msra.mxu0 %v2720
        %2738 = vmatpush.bf16.msra.mxu0 %v2719
        %2739 = vmatpush.bf16.msra.mxu0 %v2718
        %2740 = vmatpush.bf16.msra.mxu0 %v2717
        %2741 = vmatmul.bf16.gmra.mxu0 %v440
        %v2742 = vpop.f32.mrf.mxu0
        %v2743 = vadd.f32 %v2683, %v2742
        %v2744 = vpop.f32.mrf.mxu0
        %v2745 = vadd.f32 %v2683, %v2744
        %2746 = vdwg.mxu0
        %v2747 = vpack.c.bf16 %v2577, %v2575
        %v2748 = vpack.c.bf16 %v2661, %v2659
        %v2750 = vsel %vm689, %v2747, 0
        %v2753 = vsel %vm689, %v2748, 0
        %2755 = vmatpush.bf16.xpose.msra.mxu0 0
        %2756 = vmatpush.bf16.xpose.msra.mxu0 0
        %2757 = vmatpush.bf16.xpose.msra.mxu0 0
        %2758 = vmatpush.bf16.xpose.msra.mxu0 0
        %2759 = vmatpush.bf16.xpose.msra.mxu0 0
        %2760 = vmatpush.bf16.xpose.msra.mxu0 0
        %2761 = vmatpush.bf16.xpose.msra.mxu0 0
        %2762 = vmatpush.bf16.xpose.msra.mxu0 %v2753
        %2763 = vmatmul.bf16.gmra.mxu0 %v2750
        %v2764 = vpop.f32.mrf.mxu0
        %v2765 = vadd.f32 0.0, %v2764
        %v2766 = vpop.f32.mrf.mxu0
        %v2767 = vadd.f32 0.0, %v2766
        %2768 = vdwg.mxu0
        %v2769 = vsel %vm689, %v2765, -inf
        %2770 = vmax.xlane.f32.xlu0 %v2769
        %v2771 = vpop.xlane.xlu0 %2770
        %v2772 = vsel %vm689, %v2767, -inf
        %2773 = vmax.xlane.f32.xlu0 %v2772
        %v2774 = vpop.xlane.xlu0 %2773
        %v2775 = vsub.f32 %v2765, %v2771
        %v2776 = vsub.f32 %v2767, %v2774
        %v2777 = vmul.f32 %v2775, 1.442695
        %v2778 = vpow.pop %v2777
        %v2779 = vmul.f32 %v2776, 1.442695
        %v2780 = vpow.pop %v2779
        %v2781 = vsel %vm689, %v2778, 0.0
        %2782 = vadd.xlane.f32.xlu0 %v2781
        %v2783 = vpop.xlane.xlu0 %2782
        %v2784 = vsel %vm689, %v2780, 0.0
        %2785 = vadd.xlane.f32.xlu0 %v2784
        %v2786 = vpop.xlane.xlu0 %2785
        %v2787 = vrcp.pop %v2783
        %v2788 = vrcp.pop %v2786
        %v2789 = vmul.f32 %v2778, %v2787
        %v2790 = vmul.f32 %v2780, %v2788
        %v2791 = vpack.c.bf16 %v2790, %v2789
        %v2792 = vpack.c.bf16 %v2745, %v2743
        %v2794 = vsel %vm689, %v2791, 0
        %2796 = vmatpush.bf16.msra.mxu0 0
        %2797 = vmatpush.bf16.msra.mxu0 0
        %2798 = vmatpush.bf16.msra.mxu0 0
        %2799 = vmatpush.bf16.msra.mxu0 0
        %2800 = vmatpush.bf16.msra.mxu0 0
        %2801 = vmatpush.bf16.msra.mxu0 0
        %2802 = vmatpush.bf16.msra.mxu0 0
        %2803 = vmatpush.bf16.msra.mxu0 %v2792
        %2804 = vmatmul.bf16.gmra.mxu0 %v2794
        %v2805 = vpop.f32.mrf.mxu0
        %v2806 = vadd.f32 0.0, %v2805
        %v2807 = vpop.f32.mrf.mxu0
        %v2808 = vadd.f32 0.0, %v2807
        %2809 = vdwg.mxu0
        %v2810 = vpack.c.bf16 %v2808, %v2806
        %s2811 = scalar_lea.vmem %s5, 48
        %v2812 = vld [vmem:[%s2811] sm:$0xf]
        %v2813 = vld [vmem:[%s2811 + $0x4] sm:$0xf]
        %v2816 = vunpack.c.l.b16 %v2812
        %v2817 = vunpack.c.l.b16 %v2813
        %v2818 = vpack.c.b16 %v2817, %v2816
        %v2821 = vsel %vm689, %v2810, 0
        %2823 = vmatpush.bf16.msra.mxu0 0
        %2824 = vmatpush.bf16.msra.mxu0 0
        %2825 = vmatpush.bf16.msra.mxu0 0
        %2826 = vmatpush.bf16.msra.mxu0 0
        %2827 = vmatpush.bf16.msra.mxu0 0
        %2828 = vmatpush.bf16.msra.mxu0 0
        %2829 = vmatpush.bf16.msra.mxu0 0
        %2830 = vmatpush.bf16.msra.mxu0 %v2818
        %2831 = vmatmul.bf16.gmra.mxu0 %v2821
        %v2832 = vpop.f32.mrf.mxu0
        %v2833 = vadd.f32 0.0, %v2832
        %v2834 = vpop.f32.mrf.mxu0
        %v2835 = vadd.f32 0.0, %v2834
        %2836 = vdwg.mxu0
        %v2837 = vadd.f32 %v2493, %v2833
        %v2838 = vadd.f32 %v2494, %v2835
        %s2839 = scalar_lea.vmem %s2, 448
        %v2840 = vld [vmem:[%s2839] sm:$0xf]
        %v2841 = vld [vmem:[%s2839 + $0x4] sm:$0xf]
        %v2842 = vld [vmem:[%s2839 + $0x8] sm:$0xf]
        %v2843 = vld [vmem:[%s2839 + $0xc] sm:$0xf]
        %v2844 = vld [vmem:[%s2839 + $0x10] sm:$0xf]
        %v2845 = vld [vmem:[%s2839 + $0x14] sm:$0xf]
        %v2846 = vld [vmem:[%s2839 + $0x18] sm:$0xf]
        %v2847 = vld [vmem:[%s2839 + $0x1c] sm:$0xf]
        %v2848 = vld [vmem:[%s2839 + $0x20] sm:$0xf]
        %v2849 = vld [vmem:[%s2839 + $0x24] sm:$0xf]
        %v2850 = vld [vmem:[%s2839 + $0x28] sm:$0xf]
        %v2851 = vld [vmem:[%s2839 + $0x2c] sm:$0xf]
        %v2852 = vld [vmem:[%s2839 + $0x30] sm:$0xf]
        %v2853 = vld [vmem:[%s2839 + $0x34] sm:$0xf]
        %v2854 = vld [vmem:[%s2839 + $0x38] sm:$0xf]
        %v2855 = vld [vmem:[%s2839 + $0x3c] sm:$0xf]
        %s2856 = scalar_lea.vmem %s6, 7
        %v2857 = vld [vmem:[%s2856] sm:$0x1]
        %v2859 = vperm.slane %v2857, 0
        %v2877 = vunpack.c.l.b16 %v2840
        %v2878 = vunpack.c.l.b16 %v2841
        %v2879 = vunpack.c.l.b16 %v2842
        %v2880 = vunpack.c.l.b16 %v2843
        %v2881 = vunpack.c.l.b16 %v2844
        %v2882 = vunpack.c.l.b16 %v2845
        %v2883 = vunpack.c.l.b16 %v2846
        %v2884 = vunpack.c.l.b16 %v2847
        %v2885 = vunpack.c.l.b16 %v2848
        %v2886 = vunpack.c.l.b16 %v2849
        %v2887 = vunpack.c.l.b16 %v2850
        %v2888 = vunpack.c.l.b16 %v2851
        %v2889 = vunpack.c.l.b16 %v2852
        %v2890 = vunpack.c.l.b16 %v2853
        %v2891 = vunpack.c.l.b16 %v2854
        %v2892 = vunpack.c.l.b16 %v2855
        %v2893 = vpack.c.b16 %v2878, %v2877
        %v2894 = vpack.c.b16 %v2880, %v2879
        %v2895 = vpack.c.b16 %v2882, %v2881
        %v2896 = vpack.c.b16 %v2884, %v2883
        %v2897 = vpack.c.b16 %v2886, %v2885
        %v2898 = vpack.c.b16 %v2888, %v2887
        %v2899 = vpack.c.b16 %v2890, %v2889
        %v2900 = vpack.c.b16 %v2892, %v2891
        %2909 = vmatpush.bf16.msra.mxu0 %v2900
        %2910 = vmatpush.bf16.msra.mxu0 %v2899
        %2911 = vmatpush.bf16.msra.mxu0 %v2898
        %2912 = vmatpush.bf16.msra.mxu0 %v2897
        %2913 = vmatpush.bf16.msra.mxu0 %v2896
        %2914 = vmatpush.bf16.msra.mxu0 %v2895
        %2915 = vmatpush.bf16.msra.mxu0 %v2894
        %2916 = vmatpush.bf16.msra.mxu0 %v2893
        %2917 = vmatmul.bf16.gmra.mxu0 %v439
        %v2918 = vpop.f32.mrf.mxu0
        %v2919 = vadd.f32 %v2859, %v2918
        %v2920 = vpop.f32.mrf.mxu0
        %v2921 = vadd.f32 %v2859, %v2920
        %2922 = vdwg.mxu0
        %s2923 = scalar_lea.vmem %s3, 448
        %v2924 = vld [vmem:[%s2923] sm:$0xf]
        %v2925 = vld [vmem:[%s2923 + $0x4] sm:$0xf]
        %v2926 = vld [vmem:[%s2923 + $0x8] sm:$0xf]
        %v2927 = vld [vmem:[%s2923 + $0xc] sm:$0xf]
        %v2928 = vld [vmem:[%s2923 + $0x10] sm:$0xf]
        %v2929 = vld [vmem:[%s2923 + $0x14] sm:$0xf]
        %v2930 = vld [vmem:[%s2923 + $0x18] sm:$0xf]
        %v2931 = vld [vmem:[%s2923 + $0x1c] sm:$0xf]
        %v2932 = vld [vmem:[%s2923 + $0x20] sm:$0xf]
        %v2933 = vld [vmem:[%s2923 + $0x24] sm:$0xf]
        %v2934 = vld [vmem:[%s2923 + $0x28] sm:$0xf]
        %v2935 = vld [vmem:[%s2923 + $0x2c] sm:$0xf]
        %v2936 = vld [vmem:[%s2923 + $0x30] sm:$0xf]
        %v2937 = vld [vmem:[%s2923 + $0x34] sm:$0xf]
        %v2938 = vld [vmem:[%s2923 + $0x38] sm:$0xf]
        %v2939 = vld [vmem:[%s2923 + $0x3c] sm:$0xf]
        %s2940 = scalar_lea.vmem %s7, 7
        %v2941 = vld [vmem:[%s2940] sm:$0x1]
        %v2943 = vperm.slane %v2941, 0
        %v2961 = vunpack.c.l.b16 %v2924
        %v2962 = vunpack.c.l.b16 %v2925
        %v2963 = vunpack.c.l.b16 %v2926
        %v2964 = vunpack.c.l.b16 %v2927
        %v2965 = vunpack.c.l.b16 %v2928
        %v2966 = vunpack.c.l.b16 %v2929
        %v2967 = vunpack.c.l.b16 %v2930
        %v2968 = vunpack.c.l.b16 %v2931
        %v2969 = vunpack.c.l.b16 %v2932
        %v2970 = vunpack.c.l.b16 %v2933
        %v2971 = vunpack.c.l.b16 %v2934
        %v2972 = vunpack.c.l.b16 %v2935
        %v2973 = vunpack.c.l.b16 %v2936
        %v2974 = vunpack.c.l.b16 %v2937
        %v2975 = vunpack.c.l.b16 %v2938
        %v2976 = vunpack.c.l.b16 %v2939
        %v2977 = vpack.c.b16 %v2962, %v2961
        %v2978 = vpack.c.b16 %v2964, %v2963
        %v2979 = vpack.c.b16 %v2966, %v2965
        %v2980 = vpack.c.b16 %v2968, %v2967
        %v2981 = vpack.c.b16 %v2970, %v2969
        %v2982 = vpack.c.b16 %v2972, %v2971
        %v2983 = vpack.c.b16 %v2974, %v2973
        %v2984 = vpack.c.b16 %v2976, %v2975
        %2993 = vmatpush.bf16.msra.mxu0 %v2984
        %2994 = vmatpush.bf16.msra.mxu0 %v2983
        %2995 = vmatpush.bf16.msra.mxu0 %v2982
        %2996 = vmatpush.bf16.msra.mxu0 %v2981
        %2997 = vmatpush.bf16.msra.mxu0 %v2980
        %2998 = vmatpush.bf16.msra.mxu0 %v2979
        %2999 = vmatpush.bf16.msra.mxu0 %v2978
        %3000 = vmatpush.bf16.msra.mxu0 %v2977
        %3001 = vmatmul.bf16.gmra.mxu0 %v439
        %v3002 = vpop.f32.mrf.mxu0
        %v3003 = vadd.f32 %v2943, %v3002
        %v3004 = vpop.f32.mrf.mxu0
        %v3005 = vadd.f32 %v2943, %v3004
        %3006 = vdwg.mxu0
        %s3007 = scalar_lea.vmem %s4, 448
        %v3008 = vld [vmem:[%s3007] sm:$0xf]
        %v3009 = vld [vmem:[%s3007 + $0x4] sm:$0xf]
        %v3010 = vld [vmem:[%s3007 + $0x8] sm:$0xf]
        %v3011 = vld [vmem:[%s3007 + $0xc] sm:$0xf]
        %v3012 = vld [vmem:[%s3007 + $0x10] sm:$0xf]
        %v3013 = vld [vmem:[%s3007 + $0x14] sm:$0xf]
        %v3014 = vld [vmem:[%s3007 + $0x18] sm:$0xf]
        %v3015 = vld [vmem:[%s3007 + $0x1c] sm:$0xf]
        %v3016 = vld [vmem:[%s3007 + $0x20] sm:$0xf]
        %v3017 = vld [vmem:[%s3007 + $0x24] sm:$0xf]
        %v3018 = vld [vmem:[%s3007 + $0x28] sm:$0xf]
        %v3019 = vld [vmem:[%s3007 + $0x2c] sm:$0xf]
        %v3020 = vld [vmem:[%s3007 + $0x30] sm:$0xf]
        %v3021 = vld [vmem:[%s3007 + $0x34] sm:$0xf]
        %v3022 = vld [vmem:[%s3007 + $0x38] sm:$0xf]
        %v3023 = vld [vmem:[%s3007 + $0x3c] sm:$0xf]
        %s3024 = scalar_lea.vmem %s8, 7
        %v3025 = vld [vmem:[%s3024] sm:$0x1]
        %v3027 = vperm.slane %v3025, 0
        %v3045 = vunpack.c.l.b16 %v3008
        %v3046 = vunpack.c.l.b16 %v3009
        %v3047 = vunpack.c.l.b16 %v3010
        %v3048 = vunpack.c.l.b16 %v3011
        %v3049 = vunpack.c.l.b16 %v3012
        %v3050 = vunpack.c.l.b16 %v3013
        %v3051 = vunpack.c.l.b16 %v3014
        %v3052 = vunpack.c.l.b16 %v3015
        %v3053 = vunpack.c.l.b16 %v3016
        %v3054 = vunpack.c.l.b16 %v3017
        %v3055 = vunpack.c.l.b16 %v3018
        %v3056 = vunpack.c.l.b16 %v3019
        %v3057 = vunpack.c.l.b16 %v3020
        %v3058 = vunpack.c.l.b16 %v3021
        %v3059 = vunpack.c.l.b16 %v3022
        %v3060 = vunpack.c.l.b16 %v3023
        %v3061 = vpack.c.b16 %v3046, %v3045
        %v3062 = vpack.c.b16 %v3048, %v3047
        %v3063 = vpack.c.b16 %v3050, %v3049
        %v3064 = vpack.c.b16 %v3052, %v3051
        %v3065 = vpack.c.b16 %v3054, %v3053
        %v3066 = vpack.c.b16 %v3056, %v3055
        %v3067 = vpack.c.b16 %v3058, %v3057
        %v3068 = vpack.c.b16 %v3060, %v3059
        %3077 = vmatpush.bf16.msra.mxu0 %v3068
        %3078 = vmatpush.bf16.msra.mxu0 %v3067
        %3079 = vmatpush.bf16.msra.mxu0 %v3066
        %3080 = vmatpush.bf16.msra.mxu0 %v3065
        %3081 = vmatpush.bf16.msra.mxu0 %v3064
        %3082 = vmatpush.bf16.msra.mxu0 %v3063
        %3083 = vmatpush.bf16.msra.mxu0 %v3062
        %3084 = vmatpush.bf16.msra.mxu0 %v3061
        %3085 = vmatmul.bf16.gmra.mxu0 %v440
        %v3086 = vpop.f32.mrf.mxu0
        %v3087 = vadd.f32 %v3027, %v3086
        %v3088 = vpop.f32.mrf.mxu0
        %v3089 = vadd.f32 %v3027, %v3088
        %3090 = vdwg.mxu0
        %v3091 = vpack.c.bf16 %v2921, %v2919
        %v3092 = vpack.c.bf16 %v3005, %v3003
        %v3094 = vsel %vm689, %v3091, 0
        %v3097 = vsel %vm689, %v3092, 0
        %3099 = vmatpush.bf16.xpose.msra.mxu0 0
        %3100 = vmatpush.bf16.xpose.msra.mxu0 0
        %3101 = vmatpush.bf16.xpose.msra.mxu0 0
        %3102 = vmatpush.bf16.xpose.msra.mxu0 0
        %3103 = vmatpush.bf16.xpose.msra.mxu0 0
        %3104 = vmatpush.bf16.xpose.msra.mxu0 0
        %3105 = vmatpush.bf16.xpose.msra.mxu0 0
        %3106 = vmatpush.bf16.xpose.msra.mxu0 %v3097
        %3107 = vmatmul.bf16.gmra.mxu0 %v3094
        %v3108 = vpop.f32.mrf.mxu0
        %v3109 = vadd.f32 0.0, %v3108
        %v3110 = vpop.f32.mrf.mxu0
        %v3111 = vadd.f32 0.0, %v3110
        %3112 = vdwg.mxu0
        %v3113 = vsel %vm689, %v3109, -inf
        %3114 = vmax.xlane.f32.xlu0 %v3113
        %v3115 = vpop.xlane.xlu0 %3114
        %v3116 = vsel %vm689, %v3111, -inf
        %3117 = vmax.xlane.f32.xlu0 %v3116
        %v3118 = vpop.xlane.xlu0 %3117
        %v3119 = vsub.f32 %v3109, %v3115
        %v3120 = vsub.f32 %v3111, %v3118
        %v3121 = vmul.f32 %v3119, 1.442695
        %v3122 = vpow.pop %v3121
        %v3123 = vmul.f32 %v3120, 1.442695
        %v3124 = vpow.pop %v3123
        %v3125 = vsel %vm689, %v3122, 0.0
        %3126 = vadd.xlane.f32.xlu0 %v3125
        %v3127 = vpop.xlane.xlu0 %3126
        %v3128 = vsel %vm689, %v3124, 0.0
        %3129 = vadd.xlane.f32.xlu0 %v3128
        %v3130 = vpop.xlane.xlu0 %3129
        %v3131 = vrcp.pop %v3127
        %v3132 = vrcp.pop %v3130
        %v3133 = vmul.f32 %v3122, %v3131
        %v3134 = vmul.f32 %v3124, %v3132
        %v3135 = vpack.c.bf16 %v3134, %v3133
        %v3136 = vpack.c.bf16 %v3089, %v3087
        %v3138 = vsel %vm689, %v3135, 0
        %3140 = vmatpush.bf16.msra.mxu0 0
        %3141 = vmatpush.bf16.msra.mxu0 0
        %3142 = vmatpush.bf16.msra.mxu0 0
        %3143 = vmatpush.bf16.msra.mxu0 0
        %3144 = vmatpush.bf16.msra.mxu0 0
        %3145 = vmatpush.bf16.msra.mxu0 0
        %3146 = vmatpush.bf16.msra.mxu0 0
        %3147 = vmatpush.bf16.msra.mxu0 %v3136
        %3148 = vmatmul.bf16.gmra.mxu0 %v3138
        %v3149 = vpop.f32.mrf.mxu0
        %v3150 = vadd.f32 0.0, %v3149
        %v3151 = vpop.f32.mrf.mxu0
        %v3152 = vadd.f32 0.0, %v3151
        %3153 = vdwg.mxu0
        %v3154 = vpack.c.bf16 %v3152, %v3150
        %s3155 = scalar_lea.vmem %s5, 56
        %v3156 = vld [vmem:[%s3155] sm:$0xf]
        %v3157 = vld [vmem:[%s3155 + $0x4] sm:$0xf]
        %v3160 = vunpack.c.l.b16 %v3156
        %v3161 = vunpack.c.l.b16 %v3157
        %v3162 = vpack.c.b16 %v3161, %v3160
        %v3165 = vsel %vm689, %v3154, 0
        %3167 = vmatpush.bf16.msra.mxu0 0
        %3168 = vmatpush.bf16.msra.mxu0 0
        %3169 = vmatpush.bf16.msra.mxu0 0
        %3170 = vmatpush.bf16.msra.mxu0 0
        %3171 = vmatpush.bf16.msra.mxu0 0
        %3172 = vmatpush.bf16.msra.mxu0 0
        %3173 = vmatpush.bf16.msra.mxu0 0
        %3174 = vmatpush.bf16.msra.mxu0 %v3162
        %3175 = vmatmul.bf16.gmra.mxu0 %v3165
        %v3176 = vpop.f32.mrf.mxu0
        %v3177 = vadd.f32 0.0, %v3176
        %v3178 = vpop.f32.mrf.mxu0
        %v3179 = vadd.f32 0.0, %v3178
        %3180 = vdwg.mxu0
        %v3181 = vadd.f32 %v2837, %v3177
        %v3182 = vadd.f32 %v2838, %v3179
        %v3183 = vld [vmem:[%s9] sm:$0x1]
        %v3185 = vperm.slane %v3183, 0
        %v3187 = vadd.f32 %v3181, %v3185
        %v3188 = vadd.f32 %v3182, %v3185
        %v3189 = vadd.f32 %v433, %v3187
        %v3190 = vadd.f32 %v434, %v3188
        %3191 = vadd.xlane.f32.xlu0 %v3189
        %v3192 = vpop.xlane.xlu0 %3191
        %3193 = vadd.xlane.f32.xlu0 %v3190
        %v3194 = vpop.xlane.xlu0 %3193
        %v3195 = vrcp.pop 128.0
        %v3196 = vmul.f32 128.0, %v3195
        %v3197 = vsub.f32 1.0, %v3196
        %v3198 = vmul.f32 %v3195, %v3197
        %v3199 = vadd.f32 %v3195, %v3198
        %vm3200 = vweird.f32 %v3195
        %v3201 = vsel %vm3200, %v3195, %v3199
        %v3202 = vmul.f32 %v3192, %v3201
        %v3203 = vmul.f32 %v3194, %v3201
        %v3204 = vsub.f32 %v3189, %v3202
        %v3205 = vsub.f32 %v3190, %v3203
        %v3206 = vmul.f32 %v3204, %v3204
        %v3207 = vmul.f32 %v3205, %v3205
        %3208 = vadd.xlane.f32.xlu0 %v3206
        %v3209 = vpop.xlane.xlu0 %3208
        %3210 = vadd.xlane.f32.xlu0 %v3207
        %v3211 = vpop.xlane.xlu0 %3210
        %v3212 = vmul.f32 %v3209, %v3201
        %v3213 = vmul.f32 %v3211, %v3201
        %v3214 = vadd.f32 %v3212, 1e-05
        %v3215 = vadd.f32 %v3213, 1e-05
        %v3216 = vrsqrt.pop %v3214
        %v3217 = vmul.f32 %v3216, %v3214
        %v3218 = vmul.f32 %v3217, %v3216
        %v3219 = vmul.f32 0.5, %v3218
        %v3220 = vsub.f32 1.5, %v3219
        %v3221 = vmul.f32 %v3216, %v3220
        %vm3222 = vweird.f32 %v3214
        %vm3223 = vweird.f32 %v3216
        %vm3224 = vmor %vm3222, %vm3223
        %v3225 = vsel %vm3224, %v3216, %v3221
        %v3226 = vrsqrt.pop %v3215
        %v3227 = vmul.f32 %v3226, %v3215
        %v3228 = vmul.f32 %v3227, %v3226
        %v3229 = vmul.f32 0.5, %v3228
        %v3230 = vsub.f32 1.5, %v3229
        %v3231 = vmul.f32 %v3226, %v3230
        %vm3232 = vweird.f32 %v3215
        %vm3233 = vweird.f32 %v3226
        %vm3234 = vmor %vm3232, %vm3233
        %v3235 = vsel %vm3234, %v3226, %v3231
        %v3236 = vmul.f32 %v3204, %v3225
        %v3237 = vmul.f32 %v3205, %v3235
        %v3238 = vld [vmem:[%s10] sm:$0x1]
        %v3240 = vperm.slane %v3238, 0
        %v3242 = vmul.f32 %v3236, %v3240
        %v3243 = vmul.f32 %v3237, %v3240
        %v3244 = vld [vmem:[%s11] sm:$0x1]
        %v3246 = vperm.slane %v3244, 0
        %v3248 = vadd.f32 %v3242, %v3246
        %v3249 = vadd.f32 %v3243, %v3246
        %3250 = vst [vmem:[%s421] sm:$0xff] %v3248
        %3251 = vst [vmem:[%s421 + $0x8] sm:$0xff] %v3249
        %s3252 = sand.u32 %s296, 1
        %s3253 = scalar_lea.sflag [#allocation3], %s3252
        %s3254 = sand.u32 %s296, 1
        %s3255 = smul.addr %s3254, 16
        %s3256 = scalar_lea.vmem [#allocation2], %s3255
        // Predicated region
        $region69: #{tpu_custom_call.1} parent=67 // pred_check
          %p3257 = pneg %p306
        $region70: #{tpu_custom_call.1} parent=67 // pred_check_branch
          %3259 = sbr.rel (%p3257) target = $region72
        $region71: #{tpu_custom_call.1} parent=67 // pred_region
          %3261 = vsyncadd %s3253, 0
          %s3262 = smul.addr %s26, 2
          %s3263 = smul.addr %s3262, 8
          %s3264 = scalar_lea.hbm %s12, %s3263
          %s3265 = sshll.u32 %s3256, 4
          %s3266 = int_to_ptr.vmem [resolvable:$true] %s3265
          %s3267 = sshll.u32 %s3264, 4
          %s3268 = int_to_ptr.hbm [resolvable:$true] %s3267
          %3273 = dma.vmem_to_hbm [thread:$0]  %s3266, 256, %s3268, %s3253, 128, 128, 8
        $region72: #{tpu_custom_call.1} parent=67 // pred_fallthru
          _
      $region68: #{tpu_custom_call.1} parent=5 // pred_fallthru
        _
      %p3274 = scmp.le.s32.totalorder 2, %s21
      // Predicated region
      $region73: #{tpu_custom_call.1} parent=5 // pred_check
        %p3275 = pneg %p3274
      $region74: #{tpu_custom_call.1} parent=5 // pred_check_branch
        %3277 = sbr.rel (%p3275) target = $region76
      $region75: #{tpu_custom_call.1} parent=5 // pred_region
        %s3278 = ssub.s32 %s21, 2
        // Predicated region
        $region77: #{tpu_custom_call.1} parent=75 // pred_check
          %p3279 = pneg %p312
        $region78: #{tpu_custom_call.1} parent=75 // pred_check_branch
          %3281 = sbr.rel (%p3279) target = $region80
        $region79: #{tpu_custom_call.1} parent=75 // pred_region
          %s3282 = sand.u32 %s297, 1
          %s3283 = scalar_lea.sflag [#allocation3], %s3282
          %s3284 = sand.u32 %s297, 1
          %s3285 = smul.addr %s3284, 16
          %s3286 = scalar_lea.vmem [#allocation2], %s3285
          %3288 = dma.done %s3283, 256
        $region80: #{tpu_custom_call.1} parent=75 // pred_fallthru
          _
      $region76: #{tpu_custom_call.1} parent=5 // pred_fallthru
        _
    $region6: #{tpu_custom_call.1} parent=1 // loop_footer
      %s25 = sadd.s32 1, %s21
    $region7: #{tpu_custom_call.1} parent=1 // loop_footer_branch
      %20 = sbr.rel target = $region3
    $region8: #{tpu_custom_call.1} parent=1 // loop_exit
      _
    %3289 = vsyncpa [#allocation3], 1
    %s3290 = scalar_lea.sflag [#allocation3], 1
    %3291 = vsyncpa %s3290, 1

</llo_original>
